<compile_context>
chip_gen: v7x
topology: tpu7x:2x2x1
jax: 0.10.0
libtpu: 0.0.40
codegen_flags: <defaults>
</compile_context>

<pallas_src>
import jax
import jax.numpy as jnp
import numpy as np
from jax.experimental import pallas as pl
from jax.experimental.pallas import tpu as pltpu


def _round_up(n, m):
    return ((n + m - 1) // m) * m


def _build_lstm_kernel(output_size):
    O = output_size  # true (unpadded) output size, static

    def lstm_kernel(x_ref, wih0_ref, whh0_ref, b0_ref, b1_ref,
                    w1_hbm, wfcT_hbm, bfc_hbm,
                    out_ref,
                    w1_vmem, wfc_vmem, bfc_vmem, sems):
        T, Bp, I = x_ref.shape
        Hp = whh0_ref.shape[0]
        G = 4 * Hp

        # ---- Kick off manual DMAs for weights not needed yet ----------------
        # w1 is first used by layer-1 of step 0 (after layer-0 of step 0);
        # wfcT / bfc are only used in the epilogue -> both hide behind compute.
        w1_cp = pltpu.make_async_copy(w1_hbm, w1_vmem, sems.at[0])
        wfc_cp = pltpu.make_async_copy(wfcT_hbm, wfc_vmem, sems.at[1])
        bfc_cp = pltpu.make_async_copy(bfc_hbm, bfc_vmem, sems.at[2])
        w1_cp.start()
        wfc_cp.start()
        bfc_cp.start()

        # ---- Loop-invariant loads / broadcasts (hoisted) ---------------------
        wih0 = wih0_ref[...]                                  # (I, 4Hp)
        whh0 = whh0_ref[...]                                  # (Hp, 4Hp)
        b0b = jnp.broadcast_to(b0_ref[...], (Bp, G))
        b1b = jnp.broadcast_to(b1_ref[...], (Bp, G))

        def xgate(t):
            # Layer-0 input projection + bias for timestep t, computed inline.
            x_t = x_ref[t]                                    # (Bp, I)
            if I == 1:
                # Outer product via VPU broadcast multiply -> no K=1 MXU pass;
                # pure filler under the MXU/EUP critical path.
                return x_t * wih0 + b0b                       # (Bp, 4Hp)
            return jnp.dot(x_t, wih0,
                           preferred_element_type=jnp.float32) + b0b

        def gates_to_state(g, c_prev):
            # PyTorch gate order (i, f, g, o); every slice is 128-lane aligned.
            i = jax.nn.sigmoid(g[:, 0 * Hp:1 * Hp])
            f = jax.nn.sigmoid(g[:, 1 * Hp:2 * Hp])
            gg = jnp.tanh(g[:, 2 * Hp:3 * Hp])
            o = jax.nn.sigmoid(g[:, 3 * Hp:4 * Hp])
            c_new = f * c_prev + i * gg
            h_new = o * jnp.tanh(c_new)
            return h_new, c_new

        def layer1(h1, c1, h0, w1):
            # Fused recurrent+input matmul: [h1, h0] @ [Whh1; Wih1], K = 2Hp
            # (fills the 256-deep MXU on v6e/v7x).
            inp1 = jnp.concatenate([h1, h0], axis=-1)         # (Bp, 2Hp)
            g1 = jnp.dot(inp1, w1, preferred_element_type=jnp.float32) + b1b
            return gates_to_state(g1, c1)

        # ---- Prologue: layer-0 of step 0 (zero initial state => no matmul) --
        zc = jnp.zeros((Bp, Hp), jnp.float32)
        h0, c0 = gates_to_state(xgate(0), zc)

        # Layer-1 weights become necessary from here on; the DMA started above
        # has been overlapping the prologue compute.
        w1_cp.wait()
        w1 = w1_vmem[...]                                     # (2Hp, 4Hp)

        # ---- Skewed recurrence: layer-1(t) and layer-0(t+1) both depend only
        #      on h0(t), so they are independent within one iteration and can
        #      overlap on the MXU/EUP.
        def step(t, carry):
            h0, c0, h1, c1 = carry
            h1n, c1n = layer1(h1, c1, h0, w1)                 # layer 1, step t
            g0 = xgate(t + 1) + jnp.dot(h0, whh0,             # layer 0, step t+1
                                        preferred_element_type=jnp.float32)
            h0n, c0n = gates_to_state(g0, c0)
            return (h0n, c0n, h1n, c1n)

        # Full unroll for small T (LLO scheduling visibility across steps);
        # capped for long sequences to avoid imem / compile-time blowup.
        unroll = True if T <= 32 else 8
        h0, c0, h1, c1 = jax.lax.fori_loop(0, T - 1, step, (h0, c0, zc, zc),
                                           unroll=unroll)

        # ---- Epilogue: layer-1 of the final timestep -------------------------
        h1, _ = layer1(h1, c1, h0, w1)

        # ---- Final FC on the last top-layer hidden state ---------------------
        # FC weight/bias DMAs have been hiding behind the whole recurrence.
        wfc_cp.wait()
        bfc_cp.wait()
        if O == 1:
            # VPU multiply + lane reduce instead of an N=1 MXU pass.
            w_row = wfc_vmem[0:1, :]                          # (1, Hp)
            y = (jnp.sum(h1 * w_row, axis=-1, keepdims=True)
                 + bfc_vmem[0:1, 0:1])                        # (Bp, 1)
            out_ref[...] = jnp.broadcast_to(y, out_ref.shape)  # lane-dense store
        else:
            out_ref[...] = (jax.lax.dot_general(
                h1, wfc_vmem[...], (((1,), (1,)), ((), ())),
                preferred_element_type=jnp.float32) + bfc_vmem[...])

    return lstm_kernel


def lstm_model_forward(x, params):
    """x: (B, T, I) float32 (batch_first, like PyTorch). Returns (B, output_size)."""
    B, T, I = x.shape
    H = params["whh0"].shape[0]
    O = params["wfc"].shape[1]

    Bp = _round_up(max(B, 8), 8)     # full sublane group
    Hp = _round_up(H, 128)           # lane-aligned gate blocks
    Op = _round_up(O, 128)           # lane-dense output store
    G = 4 * Hp
    FR = 8 if O == 1 else Op         # fc-weight rows shipped to the kernel

    def pad_gate_cols(w):
        # (K, 4H) -> (K, 4Hp): each gate block re-based at a 128-lane boundary.
        out = jnp.zeros((w.shape[0], G), jnp.float32)
        for g in range(4):
            out = out.at[:, g * Hp:g * Hp + H].set(w[:, g * H:(g + 1) * H])
        return out

    def pad_rows(w, kp):
        return jnp.zeros((kp, w.shape[1]), jnp.float32).at[:w.shape[0]].set(w)

    wih0p = pad_gate_cols(params["wih0"])                       # (I, 4Hp)
    whh0p = pad_rows(pad_gate_cols(params["whh0"]), Hp)         # (Hp, 4Hp)
    b0p = pad_gate_cols(params["b0"])                           # (1, 4Hp)
    whh1p = pad_rows(pad_gate_cols(params["whh1"]), Hp)
    wih1p = pad_rows(pad_gate_cols(params["wih1"]), Hp)
    w1p = jnp.concatenate([whh1p, wih1p], axis=0)               # (2Hp, 4Hp) fused
    b1p = pad_gate_cols(params["b1"])                           # (1, 4Hp)
    wfcTp = jnp.zeros((FR, Hp), jnp.float32).at[:O, :H].set(params["wfc"].T)
    bfcp = jnp.zeros((1, Op), jnp.float32).at[:, :O].set(params["bfc"])

    # Time-major, batch padded to a full sublane group (padded rows are zeros).
    x_tm = jnp.zeros((T, Bp, I), jnp.float32).at[:, :B, :].set(
        jnp.transpose(x, (1, 0, 2)))

    kernel = _build_lstm_kernel(O)
    full2d = lambda shape: pl.BlockSpec(shape, lambda i: (0, 0))

    out = pl.pallas_call(
        kernel,
        out_shape=jax.ShapeDtypeStruct((Bp, Op), jnp.float32),
        grid_spec=pltpu.PrefetchScalarGridSpec(
            num_scalar_prefetch=0,
            grid=(1,),  # single invocation: whole recurrence lives in-kernel
            in_specs=[
                pl.BlockSpec((T, Bp, I), lambda i: (0, 0, 0)),  # x (time-major)
                full2d((I, G)),        # W_ih layer 0 (transposed, gate-padded)
                full2d((Hp, G)),       # W_hh layer 0 (needed immediately)
                full2d((1, G)),        # b_ih0 + b_hh0
                full2d((1, G)),        # b_ih1 + b_hh1
                pl.BlockSpec(memory_space=pl.ANY),  # fused [W_hh1; W_ih1] -> manual DMA
                pl.BlockSpec(memory_space=pl.ANY),  # fc weight (transposed)  -> manual DMA
                pl.BlockSpec(memory_space=pl.ANY),  # fc bias                 -> manual DMA
            ],
            out_specs=full2d((Bp, Op)),
            scratch_shapes=[
                pltpu.VMEM((2 * Hp, G), jnp.float32),   # w1 landing buffer
                pltpu.VMEM((FR, Hp), jnp.float32),      # fc weight landing buffer
                pltpu.VMEM((1, Op), jnp.float32),       # fc bias landing buffer
                pltpu.SemaphoreType.DMA((3,)),
            ],
        ),
        compiler_params=pltpu.CompilerParams(
            dimension_semantics=("arbitrary",)),
    )(x_tm, wih0p, whh0p, b0p, b1p, w1p, wfcTp, bfcp)

    # TODO(synk): for B > 8 add a "parallel" batch grid axis (v7x dual-TC), and
    # for very long T tile the time axis into the grid instead of grid=(1,).
    return out[:B, :O]


def make_params(key, input_size=1, hidden_size=50, output_size=1):
    """Deterministic init mimicking PyTorch uniform(-1/sqrt(H), 1/sqrt(H))."""
    H, I, O = hidden_size, input_size, output_size
    bound = 1.0 / np.sqrt(H)
    keys = jax.random.split(key, 10)
    u = lambda k, shape: jax.random.uniform(k, shape, jnp.float32, -bound, bound)
    # Stored already transposed relative to PyTorch: (in_features, out_features).
    return {
        "wih0": u(keys[0], (I, 4 * H)),
        "whh0": u(keys[1], (H, 4 * H)),
        "b0":   u(keys[2], (1, 4 * H)) + u(keys[3], (1, 4 * H)),  # b_ih0 + b_hh0
        "wih1": u(keys[4], (H, 4 * H)),
        "whh1": u(keys[5], (H, 4 * H)),
        "b1":   u(keys[6], (1, 4 * H)) + u(keys[7], (1, 4 * H)),  # b_ih1 + b_hh1
        "wfc":  u(keys[8], (H, O)),
        "bfc":  u(keys[9], (1, O)),
    }


def lstm_model_reference(x, params):
    """Pure-JAX reference (lax.scan) of the same forward pass."""
    B, T, I = x.shape
    H = params["whh0"].shape[0]

    def cell(x_in, h, c, wih, whh, b):
        g = x_in @ wih + h @ whh + b
        i = jax.nn.sigmoid(g[:, 0 * H:1 * H])
        f = jax.nn.sigmoid(g[:, 1 * H:2 * H])
        gg = jnp.tanh(g[:, 2 * H:3 * H])
        o = jax.nn.sigmoid(g[:, 3 * H:4 * H])
        c_new = f * c + i * gg
        return o * jnp.tanh(c_new), c_new

    def step(carry, x_t):
        h0, c0, h1, c1 = carry
        h0, c0 = cell(x_t, h0, c0, params["wih0"], params["whh0"], params["b0"])
        h1, c1 = cell(h0, h1, c1, params["wih1"], params["whh1"], params["b1"])
        return (h0, c0, h1, c1), None

    z = jnp.zeros((B, H), jnp.float32)
    (h0, c0, h1, c1), _ = jax.lax.scan(step, (z, z, z, z),
                                       jnp.transpose(x, (1, 0, 2)))
    return h1 @ params["wfc"] + params["bfc"]


if __name__ == "__main__":
    B, T, I, H, O = 2, 8, 1, 50, 1
    key = jax.random.PRNGKey(0)
    k_x, k_p = jax.random.split(key)
    x = jax.random.normal(k_x, (B, T, I), jnp.float32)
    params = make_params(k_p, input_size=I, hidden_size=H, output_size=O)

    out = jax.block_until_ready(lstm_model_forward(x, params))
    ref = jax.block_until_ready(lstm_model_reference(x, params))

    assert out.shape == (B, O), out.shape
    np.testing.assert_allclose(np.asarray(out), np.asarray(ref),
                               rtol=1e-5, atol=1e-5)
    print("KERNEL_OK")
</pallas_src>

<mosaic_0001>
module attributes {stable_mosaic.version = 11 : i64} {
  func.func @lstm_kernel(%arg0: i32, %arg1: memref<8x8x1xf32, #tpu.memory_space<vmem>>, %arg2: memref<1x512xf32, #tpu.memory_space<vmem>>, %arg3: memref<128x512xf32, #tpu.memory_space<vmem>>, %arg4: memref<1x512xf32, #tpu.memory_space<vmem>>, %arg5: memref<1x512xf32, #tpu.memory_space<vmem>>, %arg6: memref<256x512xf32, #tpu.memory_space<any>>, %arg7: memref<8x128xf32, #tpu.memory_space<any>>, %arg8: memref<1x128xf32, #tpu.memory_space<any>>, %arg9: memref<8x128xf32, #tpu.memory_space<vmem>>, %arg10: memref<256x512xf32, #tpu.memory_space<vmem>>, %arg11: memref<8x128xf32, #tpu.memory_space<vmem>>, %arg12: memref<1x128xf32, #tpu.memory_space<vmem>>, %arg13: memref<3x!tpu.dma_semaphore, #tpu.memory_space<semaphore_mem>>) attributes {dimension_semantics = [#tpu.dimension_semantics<arbitrary>], iteration_bounds = array<i64: 1>, scalar_prefetch = 0 : i64, scratch_operands = 4 : i64, tpu.core_type = #tpu.core_type<tc>, window_params = [{pipeline_mode = #tpu.pipeline_mode<synchronous>, transform_indices = @transform_0, window_bounds = array<i64: 8, 8, 1>}, {pipeline_mode = #tpu.pipeline_mode<synchronous>, transform_indices = @transform_1, window_bounds = array<i64: 1, 512>}, {pipeline_mode = #tpu.pipeline_mode<synchronous>, transform_indices = @transform_2, window_bounds = array<i64: 128, 512>}, {pipeline_mode = #tpu.pipeline_mode<synchronous>, transform_indices = @transform_3, window_bounds = array<i64: 1, 512>}, {pipeline_mode = #tpu.pipeline_mode<synchronous>, transform_indices = @transform_4, window_bounds = array<i64: 1, 512>}, {}, {}, {}, {pipeline_mode = #tpu.pipeline_mode<synchronous>, transform_indices = @transform_8, window_bounds = array<i64: 8, 128>}]} {
    %c0_i32 = arith.constant 0 : i32
    %0 = tpu.memref_slice %arg13[%c0_i32] : memref<3x!tpu.dma_semaphore, #tpu.memory_space<semaphore_mem>> -> memref<1x!tpu.dma_semaphore, #tpu.memory_space<semaphore_mem>>
    %1 = tpu.memref_squeeze %0 : memref<1x!tpu.dma_semaphore, #tpu.memory_space<semaphore_mem>> -> memref<!tpu.dma_semaphore, #tpu.memory_space<semaphore_mem>>
    tpu.enqueue_dma source(%arg6 : memref<256x512xf32, #tpu.memory_space<any>>) target(%arg10 : memref<256x512xf32, #tpu.memory_space<vmem>>) target_semaphore(%1 : memref<!tpu.dma_semaphore, #tpu.memory_space<semaphore_mem>>)
    %c1_i32 = arith.constant 1 : i32
    %2 = tpu.memref_slice %arg13[%c1_i32] : memref<3x!tpu.dma_semaphore, #tpu.memory_space<semaphore_mem>> -> memref<1x!tpu.dma_semaphore, #tpu.memory_space<semaphore_mem>>
    %3 = tpu.memref_squeeze %2 : memref<1x!tpu.dma_semaphore, #tpu.memory_space<semaphore_mem>> -> memref<!tpu.dma_semaphore, #tpu.memory_space<semaphore_mem>>
    tpu.enqueue_dma source(%arg7 : memref<8x128xf32, #tpu.memory_space<any>>) target(%arg11 : memref<8x128xf32, #tpu.memory_space<vmem>>) target_semaphore(%3 : memref<!tpu.dma_semaphore, #tpu.memory_space<semaphore_mem>>)
    %c2_i32 = arith.constant 2 : i32
    %4 = tpu.memref_slice %arg13[%c2_i32] : memref<3x!tpu.dma_semaphore, #tpu.memory_space<semaphore_mem>> -> memref<1x!tpu.dma_semaphore, #tpu.memory_space<semaphore_mem>>
    %5 = tpu.memref_squeeze %4 : memref<1x!tpu.dma_semaphore, #tpu.memory_space<semaphore_mem>> -> memref<!tpu.dma_semaphore, #tpu.memory_space<semaphore_mem>>
    tpu.enqueue_dma source(%arg8 : memref<1x128xf32, #tpu.memory_space<any>>) target(%arg12 : memref<1x128xf32, #tpu.memory_space<vmem>>) target_semaphore(%5 : memref<!tpu.dma_semaphore, #tpu.memory_space<semaphore_mem>>)
    %c0 = arith.constant 0 : index
    %c0_0 = arith.constant 0 : index
    %6 = vector.load %arg2[%c0, %c0_0] : memref<1x512xf32, #tpu.memory_space<vmem>>, vector<1x512xf32>
    %c0_1 = arith.constant 0 : index
    %c0_2 = arith.constant 0 : index
    %7 = vector.load %arg3[%c0_1, %c0_2] : memref<128x512xf32, #tpu.memory_space<vmem>>, vector<128x512xf32>
    %c0_3 = arith.constant 0 : index
    %c0_4 = arith.constant 0 : index
    %8 = vector.load %arg4[%c0_3, %c0_4] : memref<1x512xf32, #tpu.memory_space<vmem>>, vector<1x512xf32>
    %9 = vector.shape_cast %8 : vector<1x512xf32> to vector<1x512xf32>
    %10 = vector.broadcast %9 : vector<1x512xf32> to vector<8x512xf32>
    %c0_5 = arith.constant 0 : index
    %c0_6 = arith.constant 0 : index
    %11 = vector.load %arg5[%c0_5, %c0_6] : memref<1x512xf32, #tpu.memory_space<vmem>>, vector<1x512xf32>
    %12 = vector.shape_cast %11 : vector<1x512xf32> to vector<1x512xf32>
    %13 = vector.broadcast %12 : vector<1x512xf32> to vector<8x512xf32>
    %cst = arith.constant 0.000000e+00 : f32
    %14 = vector.broadcast %cst : f32 to vector<8x128xf32>
    %c0_7 = arith.constant 0 : index
    %c0_8 = arith.constant 0 : index
    %c0_9 = arith.constant 0 : index
    %15 = vector.load %arg1[%c0_7, %c0_8, %c0_9] : memref<8x8x1xf32, #tpu.memory_space<vmem>>, vector<1x8x1xf32>
    %16 = vector.shape_cast %15 : vector<1x8x1xf32> to vector<8x1xf32>
    %17 = vector.broadcast %16 : vector<8x1xf32> to vector<8x512xf32>
    %18 = vector.broadcast %6 : vector<1x512xf32> to vector<8x512xf32>
    %19 = arith.mulf %17, %18 : vector<8x512xf32>
    %20 = arith.addf %19, %10 : vector<8x512xf32>
    %21 = vector.extract_strided_slice %20 {offsets = [0, 0], sizes = [8, 128], strides = [1, 1]} : vector<8x512xf32> to vector<8x128xf32>
    %22 = arith.negf %21 : vector<8x128xf32>
    %23 = math.exp %22 : vector<8x128xf32>
    %cst_10 = arith.constant 1.000000e+00 : f32
    %24 = vector.broadcast %cst_10 : f32 to vector<8x128xf32>
    %25 = arith.addf %24, %23 : vector<8x128xf32>
    %26 = arith.divf %24, %25 : vector<8x128xf32>
    %27 = vector.extract_strided_slice %20 {offsets = [0, 128], sizes = [8, 128], strides = [1, 1]} : vector<8x512xf32> to vector<8x128xf32>
    %28 = arith.negf %27 : vector<8x128xf32>
    %29 = math.exp %28 : vector<8x128xf32>
    %cst_11 = arith.constant 1.000000e+00 : f32
    %30 = vector.broadcast %cst_11 : f32 to vector<8x128xf32>
    %31 = arith.addf %30, %29 : vector<8x128xf32>
    %32 = arith.divf %30, %31 : vector<8x128xf32>
    %33 = vector.extract_strided_slice %20 {offsets = [0, 256], sizes = [8, 128], strides = [1, 1]} : vector<8x512xf32> to vector<8x128xf32>
    %34 = math.tanh %33 : vector<8x128xf32>
    %35 = vector.extract_strided_slice %20 {offsets = [0, 384], sizes = [8, 128], strides = [1, 1]} : vector<8x512xf32> to vector<8x128xf32>
    %36 = arith.negf %35 : vector<8x128xf32>
    %37 = math.exp %36 : vector<8x128xf32>
    %cst_12 = arith.constant 1.000000e+00 : f32
    %38 = vector.broadcast %cst_12 : f32 to vector<8x128xf32>
    %39 = arith.addf %38, %37 : vector<8x128xf32>
    %40 = arith.divf %38, %39 : vector<8x128xf32>
    %41 = arith.mulf %32, %14 : vector<8x128xf32>
    %42 = arith.mulf %26, %34 : vector<8x128xf32>
    %43 = arith.addf %41, %42 : vector<8x128xf32>
    %44 = math.tanh %43 : vector<8x128xf32>
    %45 = arith.mulf %40, %44 : vector<8x128xf32>
    %c0_i32_13 = arith.constant 0 : i32
    %46 = tpu.memref_slice %arg13[%c0_i32_13] : memref<3x!tpu.dma_semaphore, #tpu.memory_space<semaphore_mem>> -> memref<1x!tpu.dma_semaphore, #tpu.memory_space<semaphore_mem>>
    %47 = tpu.memref_squeeze %46 : memref<1x!tpu.dma_semaphore, #tpu.memory_space<semaphore_mem>> -> memref<!tpu.dma_semaphore, #tpu.memory_space<semaphore_mem>>
    tpu.wait_dma2 semaphore(%47 : memref<!tpu.dma_semaphore, #tpu.memory_space<semaphore_mem>>) src(%arg6 : memref<256x512xf32, #tpu.memory_space<any>>) dst(%arg10 : memref<256x512xf32, #tpu.memory_space<vmem>>)
    %c0_14 = arith.constant 0 : index
    %c0_15 = arith.constant 0 : index
    %48 = vector.load %arg10[%c0_14, %c0_15] : memref<256x512xf32, #tpu.memory_space<vmem>>, vector<256x512xf32>
    %c0_i32_16 = arith.constant 0 : i32
    %49 = tpu.concatenate %14, %45 in 1 : vector<8x128xf32>, vector<8x128xf32> -> vector<8x256xf32>
    %cst_17 = arith.constant dense<0.000000e+00> : vector<8x512xf32>
    %50 = tpu.matmul %49, %48, %cst_17 {dimension_numbers = #tpu.dot_dimension_numbers<[1], [0], [0], [1], [0, 0, 1, 1], [], []>} : vector<8x256xf32>, vector<256x512xf32>, vector<8x512xf32> -> vector<8x512xf32>
    %51 = arith.addf %50, %13 : vector<8x512xf32>
    %52 = vector.extract_strided_slice %51 {offsets = [0, 0], sizes = [8, 128], strides = [1, 1]} : vector<8x512xf32> to vector<8x128xf32>
    %53 = arith.negf %52 : vector<8x128xf32>
    %54 = math.exp %53 : vector<8x128xf32>
    %cst_18 = arith.constant 1.000000e+00 : f32
    %55 = vector.broadcast %cst_18 : f32 to vector<8x128xf32>
    %56 = arith.addf %55, %54 : vector<8x128xf32>
    %57 = arith.divf %55, %56 : vector<8x128xf32>
    %58 = vector.extract_strided_slice %51 {offsets = [0, 128], sizes = [8, 128], strides = [1, 1]} : vector<8x512xf32> to vector<8x128xf32>
    %59 = arith.negf %58 : vector<8x128xf32>
    %60 = math.exp %59 : vector<8x128xf32>
    %cst_19 = arith.constant 1.000000e+00 : f32
    %61 = vector.broadcast %cst_19 : f32 to vector<8x128xf32>
    %62 = arith.addf %61, %60 : vector<8x128xf32>
    %63 = arith.divf %61, %62 : vector<8x128xf32>
    %64 = vector.extract_strided_slice %51 {offsets = [0, 256], sizes = [8, 128], strides = [1, 1]} : vector<8x512xf32> to vector<8x128xf32>
    %65 = math.tanh %64 : vector<8x128xf32>
    %66 = vector.extract_strided_slice %51 {offsets = [0, 384], sizes = [8, 128], strides = [1, 1]} : vector<8x512xf32> to vector<8x128xf32>
    %67 = arith.negf %66 : vector<8x128xf32>
    %68 = math.exp %67 : vector<8x128xf32>
    %cst_20 = arith.constant 1.000000e+00 : f32
    %69 = vector.broadcast %cst_20 : f32 to vector<8x128xf32>
    %70 = arith.addf %69, %68 : vector<8x128xf32>
    %71 = arith.divf %69, %70 : vector<8x128xf32>
    %72 = arith.mulf %63, %14 : vector<8x128xf32>
    %73 = arith.mulf %57, %65 : vector<8x128xf32>
    %74 = arith.addf %72, %73 : vector<8x128xf32>
    %75 = math.tanh %74 : vector<8x128xf32>
    %76 = arith.mulf %71, %75 : vector<8x128xf32>
    %c1_i32_21 = arith.constant 1 : i32
    %77 = arith.addi %c0_i32_16, %c1_i32_21 : i32
    %78 = arith.index_cast %77 : i32 to index
    %c0_22 = arith.constant 0 : index
    %c0_23 = arith.constant 0 : index
    %79 = vector.load %arg1[%78, %c0_22, %c0_23] : memref<8x8x1xf32, #tpu.memory_space<vmem>>, vector<1x8x1xf32>
    %80 = vector.shape_cast %79 : vector<1x8x1xf32> to vector<8x1xf32>
    %81 = vector.broadcast %80 : vector<8x1xf32> to vector<8x512xf32>
    %82 = vector.broadcast %6 : vector<1x512xf32> to vector<8x512xf32>
    %83 = arith.mulf %81, %82 : vector<8x512xf32>
    %84 = arith.addf %83, %10 : vector<8x512xf32>
    %cst_24 = arith.constant dense<0.000000e+00> : vector<8x512xf32>
    %85 = tpu.matmul %45, %7, %cst_24 {dimension_numbers = #tpu.dot_dimension_numbers<[1], [0], [0], [1], [0, 0, 1, 1], [], []>} : vector<8x128xf32>, vector<128x512xf32>, vector<8x512xf32> -> vector<8x512xf32>
    %86 = arith.addf %84, %85 : vector<8x512xf32>
    %87 = vector.extract_strided_slice %86 {offsets = [0, 0], sizes = [8, 128], strides = [1, 1]} : vector<8x512xf32> to vector<8x128xf32>
    %88 = arith.negf %87 : vector<8x128xf32>
    %89 = math.exp %88 : vector<8x128xf32>
    %cst_25 = arith.constant 1.000000e+00 : f32
    %90 = vector.broadcast %cst_25 : f32 to vector<8x128xf32>
    %91 = arith.addf %90, %89 : vector<8x128xf32>
    %92 = arith.divf %90, %91 : vector<8x128xf32>
    %93 = vector.extract_strided_slice %86 {offsets = [0, 128], sizes = [8, 128], strides = [1, 1]} : vector<8x512xf32> to vector<8x128xf32>
    %94 = arith.negf %93 : vector<8x128xf32>
    %95 = math.exp %94 : vector<8x128xf32>
    %cst_26 = arith.constant 1.000000e+00 : f32
    %96 = vector.broadcast %cst_26 : f32 to vector<8x128xf32>
    %97 = arith.addf %96, %95 : vector<8x128xf32>
    %98 = arith.divf %96, %97 : vector<8x128xf32>
    %99 = vector.extract_strided_slice %86 {offsets = [0, 256], sizes = [8, 128], strides = [1, 1]} : vector<8x512xf32> to vector<8x128xf32>
    %100 = math.tanh %99 : vector<8x128xf32>
    %101 = vector.extract_strided_slice %86 {offsets = [0, 384], sizes = [8, 128], strides = [1, 1]} : vector<8x512xf32> to vector<8x128xf32>
    %102 = arith.negf %101 : vector<8x128xf32>
    %103 = math.exp %102 : vector<8x128xf32>
    %cst_27 = arith.constant 1.000000e+00 : f32
    %104 = vector.broadcast %cst_27 : f32 to vector<8x128xf32>
    %105 = arith.addf %104, %103 : vector<8x128xf32>
    %106 = arith.divf %104, %105 : vector<8x128xf32>
    %107 = arith.mulf %98, %43 : vector<8x128xf32>
    %108 = arith.mulf %92, %100 : vector<8x128xf32>
    %109 = arith.addf %107, %108 : vector<8x128xf32>
    %110 = math.tanh %109 : vector<8x128xf32>
    %111 = arith.mulf %106, %110 : vector<8x128xf32>
    %c1_i32_28 = arith.constant 1 : i32
    %112 = tpu.concatenate %76, %111 in 1 : vector<8x128xf32>, vector<8x128xf32> -> vector<8x256xf32>
    %cst_29 = arith.constant dense<0.000000e+00> : vector<8x512xf32>
    %113 = tpu.matmul %112, %48, %cst_29 {dimension_numbers = #tpu.dot_dimension_numbers<[1], [0], [0], [1], [0, 0, 1, 1], [], []>} : vector<8x256xf32>, vector<256x512xf32>, vector<8x512xf32> -> vector<8x512xf32>
    %114 = arith.addf %113, %13 : vector<8x512xf32>
    %115 = vector.extract_strided_slice %114 {offsets = [0, 0], sizes = [8, 128], strides = [1, 1]} : vector<8x512xf32> to vector<8x128xf32>
    %116 = arith.negf %115 : vector<8x128xf32>
    %117 = math.exp %116 : vector<8x128xf32>
    %cst_30 = arith.constant 1.000000e+00 : f32
    %118 = vector.broadcast %cst_30 : f32 to vector<8x128xf32>
    %119 = arith.addf %118, %117 : vector<8x128xf32>
    %120 = arith.divf %118, %119 : vector<8x128xf32>
    %121 = vector.extract_strided_slice %114 {offsets = [0, 128], sizes = [8, 128], strides = [1, 1]} : vector<8x512xf32> to vector<8x128xf32>
    %122 = arith.negf %121 : vector<8x128xf32>
    %123 = math.exp %122 : vector<8x128xf32>
    %cst_31 = arith.constant 1.000000e+00 : f32
    %124 = vector.broadcast %cst_31 : f32 to vector<8x128xf32>
    %125 = arith.addf %124, %123 : vector<8x128xf32>
    %126 = arith.divf %124, %125 : vector<8x128xf32>
    %127 = vector.extract_strided_slice %114 {offsets = [0, 256], sizes = [8, 128], strides = [1, 1]} : vector<8x512xf32> to vector<8x128xf32>
    %128 = math.tanh %127 : vector<8x128xf32>
    %129 = vector.extract_strided_slice %114 {offsets = [0, 384], sizes = [8, 128], strides = [1, 1]} : vector<8x512xf32> to vector<8x128xf32>
    %130 = arith.negf %129 : vector<8x128xf32>
    %131 = math.exp %130 : vector<8x128xf32>
    %cst_32 = arith.constant 1.000000e+00 : f32
    %132 = vector.broadcast %cst_32 : f32 to vector<8x128xf32>
    %133 = arith.addf %132, %131 : vector<8x128xf32>
    %134 = arith.divf %132, %133 : vector<8x128xf32>
    %135 = arith.mulf %126, %74 : vector<8x128xf32>
    %136 = arith.mulf %120, %128 : vector<8x128xf32>
    %137 = arith.addf %135, %136 : vector<8x128xf32>
    %138 = math.tanh %137 : vector<8x128xf32>
    %139 = arith.mulf %134, %138 : vector<8x128xf32>
    %c1_i32_33 = arith.constant 1 : i32
    %140 = arith.addi %c1_i32_28, %c1_i32_33 : i32
    %141 = arith.index_cast %140 : i32 to index
    %c0_34 = arith.constant 0 : index
    %c0_35 = arith.constant 0 : index
    %142 = vector.load %arg1[%141, %c0_34, %c0_35] : memref<8x8x1xf32, #tpu.memory_space<vmem>>, vector<1x8x1xf32>
    %143 = vector.shape_cast %142 : vector<1x8x1xf32> to vector<8x1xf32>
    %144 = vector.broadcast %143 : vector<8x1xf32> to vector<8x512xf32>
    %145 = vector.broadcast %6 : vector<1x512xf32> to vector<8x512xf32>
    %146 = arith.mulf %144, %145 : vector<8x512xf32>
    %147 = arith.addf %146, %10 : vector<8x512xf32>
    %cst_36 = arith.constant dense<0.000000e+00> : vector<8x512xf32>
    %148 = tpu.matmul %111, %7, %cst_36 {dimension_numbers = #tpu.dot_dimension_numbers<[1], [0], [0], [1], [0, 0, 1, 1], [], []>} : vector<8x128xf32>, vector<128x512xf32>, vector<8x512xf32> -> vector<8x512xf32>
    %149 = arith.addf %147, %148 : vector<8x512xf32>
    %150 = vector.extract_strided_slice %149 {offsets = [0, 0], sizes = [8, 128], strides = [1, 1]} : vector<8x512xf32> to vector<8x128xf32>
    %151 = arith.negf %150 : vector<8x128xf32>
    %152 = math.exp %151 : vector<8x128xf32>
    %cst_37 = arith.constant 1.000000e+00 : f32
    %153 = vector.broadcast %cst_37 : f32 to vector<8x128xf32>
    %154 = arith.addf %153, %152 : vector<8x128xf32>
    %155 = arith.divf %153, %154 : vector<8x128xf32>
    %156 = vector.extract_strided_slice %149 {offsets = [0, 128], sizes = [8, 128], strides = [1, 1]} : vector<8x512xf32> to vector<8x128xf32>
    %157 = arith.negf %156 : vector<8x128xf32>
    %158 = math.exp %157 : vector<8x128xf32>
    %cst_38 = arith.constant 1.000000e+00 : f32
    %159 = vector.broadcast %cst_38 : f32 to vector<8x128xf32>
    %160 = arith.addf %159, %158 : vector<8x128xf32>
    %161 = arith.divf %159, %160 : vector<8x128xf32>
    %162 = vector.extract_strided_slice %149 {offsets = [0, 256], sizes = [8, 128], strides = [1, 1]} : vector<8x512xf32> to vector<8x128xf32>
    %163 = math.tanh %162 : vector<8x128xf32>
    %164 = vector.extract_strided_slice %149 {offsets = [0, 384], sizes = [8, 128], strides = [1, 1]} : vector<8x512xf32> to vector<8x128xf32>
    %165 = arith.negf %164 : vector<8x128xf32>
    %166 = math.exp %165 : vector<8x128xf32>
    %cst_39 = arith.constant 1.000000e+00 : f32
    %167 = vector.broadcast %cst_39 : f32 to vector<8x128xf32>
    %168 = arith.addf %167, %166 : vector<8x128xf32>
    %169 = arith.divf %167, %168 : vector<8x128xf32>
    %170 = arith.mulf %161, %109 : vector<8x128xf32>
    %171 = arith.mulf %155, %163 : vector<8x128xf32>
    %172 = arith.addf %170, %171 : vector<8x128xf32>
    %173 = math.tanh %172 : vector<8x128xf32>
    %174 = arith.mulf %169, %173 : vector<8x128xf32>
    %c2_i32_40 = arith.constant 2 : i32
    %175 = tpu.concatenate %139, %174 in 1 : vector<8x128xf32>, vector<8x128xf32> -> vector<8x256xf32>
    %cst_41 = arith.constant dense<0.000000e+00> : vector<8x512xf32>
    %176 = tpu.matmul %175, %48, %cst_41 {dimension_numbers = #tpu.dot_dimension_numbers<[1], [0], [0], [1], [0, 0, 1, 1], [], []>} : vector<8x256xf32>, vector<256x512xf32>, vector<8x512xf32> -> vector<8x512xf32>
    %177 = arith.addf %176, %13 : vector<8x512xf32>
    %178 = vector.extract_strided_slice %177 {offsets = [0, 0], sizes = [8, 128], strides = [1, 1]} : vector<8x512xf32> to vector<8x128xf32>
    %179 = arith.negf %178 : vector<8x128xf32>
    %180 = math.exp %179 : vector<8x128xf32>
    %cst_42 = arith.constant 1.000000e+00 : f32
    %181 = vector.broadcast %cst_42 : f32 to vector<8x128xf32>
    %182 = arith.addf %181, %180 : vector<8x128xf32>
    %183 = arith.divf %181, %182 : vector<8x128xf32>
    %184 = vector.extract_strided_slice %177 {offsets = [0, 128], sizes = [8, 128], strides = [1, 1]} : vector<8x512xf32> to vector<8x128xf32>
    %185 = arith.negf %184 : vector<8x128xf32>
    %186 = math.exp %185 : vector<8x128xf32>
    %cst_43 = arith.constant 1.000000e+00 : f32
    %187 = vector.broadcast %cst_43 : f32 to vector<8x128xf32>
    %188 = arith.addf %187, %186 : vector<8x128xf32>
    %189 = arith.divf %187, %188 : vector<8x128xf32>
    %190 = vector.extract_strided_slice %177 {offsets = [0, 256], sizes = [8, 128], strides = [1, 1]} : vector<8x512xf32> to vector<8x128xf32>
    %191 = math.tanh %190 : vector<8x128xf32>
    %192 = vector.extract_strided_slice %177 {offsets = [0, 384], sizes = [8, 128], strides = [1, 1]} : vector<8x512xf32> to vector<8x128xf32>
    %193 = arith.negf %192 : vector<8x128xf32>
    %194 = math.exp %193 : vector<8x128xf32>
    %cst_44 = arith.constant 1.000000e+00 : f32
    %195 = vector.broadcast %cst_44 : f32 to vector<8x128xf32>
    %196 = arith.addf %195, %194 : vector<8x128xf32>
    %197 = arith.divf %195, %196 : vector<8x128xf32>
    %198 = arith.mulf %189, %137 : vector<8x128xf32>
    %199 = arith.mulf %183, %191 : vector<8x128xf32>
    %200 = arith.addf %198, %199 : vector<8x128xf32>
    %201 = math.tanh %200 : vector<8x128xf32>
    %202 = arith.mulf %197, %201 : vector<8x128xf32>
    %c1_i32_45 = arith.constant 1 : i32
    %203 = arith.addi %c2_i32_40, %c1_i32_45 : i32
    %204 = arith.index_cast %203 : i32 to index
    %c0_46 = arith.constant 0 : index
    %c0_47 = arith.constant 0 : index
    %205 = vector.load %arg1[%204, %c0_46, %c0_47] : memref<8x8x1xf32, #tpu.memory_space<vmem>>, vector<1x8x1xf32>
    %206 = vector.shape_cast %205 : vector<1x8x1xf32> to vector<8x1xf32>
    %207 = vector.broadcast %206 : vector<8x1xf32> to vector<8x512xf32>
    %208 = vector.broadcast %6 : vector<1x512xf32> to vector<8x512xf32>
    %209 = arith.mulf %207, %208 : vector<8x512xf32>
    %210 = arith.addf %209, %10 : vector<8x512xf32>
    %cst_48 = arith.constant dense<0.000000e+00> : vector<8x512xf32>
    %211 = tpu.matmul %174, %7, %cst_48 {dimension_numbers = #tpu.dot_dimension_numbers<[1], [0], [0], [1], [0, 0, 1, 1], [], []>} : vector<8x128xf32>, vector<128x512xf32>, vector<8x512xf32> -> vector<8x512xf32>
    %212 = arith.addf %210, %211 : vector<8x512xf32>
    %213 = vector.extract_strided_slice %212 {offsets = [0, 0], sizes = [8, 128], strides = [1, 1]} : vector<8x512xf32> to vector<8x128xf32>
    %214 = arith.negf %213 : vector<8x128xf32>
    %215 = math.exp %214 : vector<8x128xf32>
    %cst_49 = arith.constant 1.000000e+00 : f32
    %216 = vector.broadcast %cst_49 : f32 to vector<8x128xf32>
    %217 = arith.addf %216, %215 : vector<8x128xf32>
    %218 = arith.divf %216, %217 : vector<8x128xf32>
    %219 = vector.extract_strided_slice %212 {offsets = [0, 128], sizes = [8, 128], strides = [1, 1]} : vector<8x512xf32> to vector<8x128xf32>
    %220 = arith.negf %219 : vector<8x128xf32>
    %221 = math.exp %220 : vector<8x128xf32>
    %cst_50 = arith.constant 1.000000e+00 : f32
    %222 = vector.broadcast %cst_50 : f32 to vector<8x128xf32>
    %223 = arith.addf %222, %221 : vector<8x128xf32>
    %224 = arith.divf %222, %223 : vector<8x128xf32>
    %225 = vector.extract_strided_slice %212 {offsets = [0, 256], sizes = [8, 128], strides = [1, 1]} : vector<8x512xf32> to vector<8x128xf32>
    %226 = math.tanh %225 : vector<8x128xf32>
    %227 = vector.extract_strided_slice %212 {offsets = [0, 384], sizes = [8, 128], strides = [1, 1]} : vector<8x512xf32> to vector<8x128xf32>
    %228 = arith.negf %227 : vector<8x128xf32>
    %229 = math.exp %228 : vector<8x128xf32>
    %cst_51 = arith.constant 1.000000e+00 : f32
    %230 = vector.broadcast %cst_51 : f32 to vector<8x128xf32>
    %231 = arith.addf %230, %229 : vector<8x128xf32>
    %232 = arith.divf %230, %231 : vector<8x128xf32>
    %233 = arith.mulf %224, %172 : vector<8x128xf32>
    %234 = arith.mulf %218, %226 : vector<8x128xf32>
    %235 = arith.addf %233, %234 : vector<8x128xf32>
    %236 = math.tanh %235 : vector<8x128xf32>
    %237 = arith.mulf %232, %236 : vector<8x128xf32>
    %c3_i32 = arith.constant 3 : i32
    %238 = tpu.concatenate %202, %237 in 1 : vector<8x128xf32>, vector<8x128xf32> -> vector<8x256xf32>
    %cst_52 = arith.constant dense<0.000000e+00> : vector<8x512xf32>
    %239 = tpu.matmul %238, %48, %cst_52 {dimension_numbers = #tpu.dot_dimension_numbers<[1], [0], [0], [1], [0, 0, 1, 1], [], []>} : vector<8x256xf32>, vector<256x512xf32>, vector<8x512xf32> -> vector<8x512xf32>
    %240 = arith.addf %239, %13 : vector<8x512xf32>
    %241 = vector.extract_strided_slice %240 {offsets = [0, 0], sizes = [8, 128], strides = [1, 1]} : vector<8x512xf32> to vector<8x128xf32>
    %242 = arith.negf %241 : vector<8x128xf32>
    %243 = math.exp %242 : vector<8x128xf32>
    %cst_53 = arith.constant 1.000000e+00 : f32
    %244 = vector.broadcast %cst_53 : f32 to vector<8x128xf32>
    %245 = arith.addf %244, %243 : vector<8x128xf32>
    %246 = arith.divf %244, %245 : vector<8x128xf32>
    %247 = vector.extract_strided_slice %240 {offsets = [0, 128], sizes = [8, 128], strides = [1, 1]} : vector<8x512xf32> to vector<8x128xf32>
    %248 = arith.negf %247 : vector<8x128xf32>
    %249 = math.exp %248 : vector<8x128xf32>
    %cst_54 = arith.constant 1.000000e+00 : f32
    %250 = vector.broadcast %cst_54 : f32 to vector<8x128xf32>
    %251 = arith.addf %250, %249 : vector<8x128xf32>
    %252 = arith.divf %250, %251 : vector<8x128xf32>
    %253 = vector.extract_strided_slice %240 {offsets = [0, 256], sizes = [8, 128], strides = [1, 1]} : vector<8x512xf32> to vector<8x128xf32>
    %254 = math.tanh %253 : vector<8x128xf32>
    %255 = vector.extract_strided_slice %240 {offsets = [0, 384], sizes = [8, 128], strides = [1, 1]} : vector<8x512xf32> to vector<8x128xf32>
    %256 = arith.negf %255 : vector<8x128xf32>
    %257 = math.exp %256 : vector<8x128xf32>
    %cst_55 = arith.constant 1.000000e+00 : f32
    %258 = vector.broadcast %cst_55 : f32 to vector<8x128xf32>
    %259 = arith.addf %258, %257 : vector<8x128xf32>
    %260 = arith.divf %258, %259 : vector<8x128xf32>
    %261 = arith.mulf %252, %200 : vector<8x128xf32>
    %262 = arith.mulf %246, %254 : vector<8x128xf32>
    %263 = arith.addf %261, %262 : vector<8x128xf32>
    %264 = math.tanh %263 : vector<8x128xf32>
    %265 = arith.mulf %260, %264 : vector<8x128xf32>
    %c1_i32_56 = arith.constant 1 : i32
    %266 = arith.addi %c3_i32, %c1_i32_56 : i32
    %267 = arith.index_cast %266 : i32 to index
    %c0_57 = arith.constant 0 : index
    %c0_58 = arith.constant 0 : index
    %268 = vector.load %arg1[%267, %c0_57, %c0_58] : memref<8x8x1xf32, #tpu.memory_space<vmem>>, vector<1x8x1xf32>
    %269 = vector.shape_cast %268 : vector<1x8x1xf32> to vector<8x1xf32>
    %270 = vector.broadcast %269 : vector<8x1xf32> to vector<8x512xf32>
    %271 = vector.broadcast %6 : vector<1x512xf32> to vector<8x512xf32>
    %272 = arith.mulf %270, %271 : vector<8x512xf32>
    %273 = arith.addf %272, %10 : vector<8x512xf32>
    %cst_59 = arith.constant dense<0.000000e+00> : vector<8x512xf32>
    %274 = tpu.matmul %237, %7, %cst_59 {dimension_numbers = #tpu.dot_dimension_numbers<[1], [0], [0], [1], [0, 0, 1, 1], [], []>} : vector<8x128xf32>, vector<128x512xf32>, vector<8x512xf32> -> vector<8x512xf32>
    %275 = arith.addf %273, %274 : vector<8x512xf32>
    %276 = vector.extract_strided_slice %275 {offsets = [0, 0], sizes = [8, 128], strides = [1, 1]} : vector<8x512xf32> to vector<8x128xf32>
    %277 = arith.negf %276 : vector<8x128xf32>
    %278 = math.exp %277 : vector<8x128xf32>
    %cst_60 = arith.constant 1.000000e+00 : f32
    %279 = vector.broadcast %cst_60 : f32 to vector<8x128xf32>
    %280 = arith.addf %279, %278 : vector<8x128xf32>
    %281 = arith.divf %279, %280 : vector<8x128xf32>
    %282 = vector.extract_strided_slice %275 {offsets = [0, 128], sizes = [8, 128], strides = [1, 1]} : vector<8x512xf32> to vector<8x128xf32>
    %283 = arith.negf %282 : vector<8x128xf32>
    %284 = math.exp %283 : vector<8x128xf32>
    %cst_61 = arith.constant 1.000000e+00 : f32
    %285 = vector.broadcast %cst_61 : f32 to vector<8x128xf32>
    %286 = arith.addf %285, %284 : vector<8x128xf32>
    %287 = arith.divf %285, %286 : vector<8x128xf32>
    %288 = vector.extract_strided_slice %275 {offsets = [0, 256], sizes = [8, 128], strides = [1, 1]} : vector<8x512xf32> to vector<8x128xf32>
    %289 = math.tanh %288 : vector<8x128xf32>
    %290 = vector.extract_strided_slice %275 {offsets = [0, 384], sizes = [8, 128], strides = [1, 1]} : vector<8x512xf32> to vector<8x128xf32>
    %291 = arith.negf %290 : vector<8x128xf32>
    %292 = math.exp %291 : vector<8x128xf32>
    %cst_62 = arith.constant 1.000000e+00 : f32
    %293 = vector.broadcast %cst_62 : f32 to vector<8x128xf32>
    %294 = arith.addf %293, %292 : vector<8x128xf32>
    %295 = arith.divf %293, %294 : vector<8x128xf32>
    %296 = arith.mulf %287, %235 : vector<8x128xf32>
    %297 = arith.mulf %281, %289 : vector<8x128xf32>
    %298 = arith.addf %296, %297 : vector<8x128xf32>
    %299 = math.tanh %298 : vector<8x128xf32>
    %300 = arith.mulf %295, %299 : vector<8x128xf32>
    %c4_i32 = arith.constant 4 : i32
    %301 = tpu.concatenate %265, %300 in 1 : vector<8x128xf32>, vector<8x128xf32> -> vector<8x256xf32>
    %cst_63 = arith.constant dense<0.000000e+00> : vector<8x512xf32>
    %302 = tpu.matmul %301, %48, %cst_63 {dimension_numbers = #tpu.dot_dimension_numbers<[1], [0], [0], [1], [0, 0, 1, 1], [], []>} : vector<8x256xf32>, vector<256x512xf32>, vector<8x512xf32> -> vector<8x512xf32>
    %303 = arith.addf %302, %13 : vector<8x512xf32>
    %304 = vector.extract_strided_slice %303 {offsets = [0, 0], sizes = [8, 128], strides = [1, 1]} : vector<8x512xf32> to vector<8x128xf32>
    %305 = arith.negf %304 : vector<8x128xf32>
    %306 = math.exp %305 : vector<8x128xf32>
    %cst_64 = arith.constant 1.000000e+00 : f32
    %307 = vector.broadcast %cst_64 : f32 to vector<8x128xf32>
    %308 = arith.addf %307, %306 : vector<8x128xf32>
    %309 = arith.divf %307, %308 : vector<8x128xf32>
    %310 = vector.extract_strided_slice %303 {offsets = [0, 128], sizes = [8, 128], strides = [1, 1]} : vector<8x512xf32> to vector<8x128xf32>
    %311 = arith.negf %310 : vector<8x128xf32>
    %312 = math.exp %311 : vector<8x128xf32>
    %cst_65 = arith.constant 1.000000e+00 : f32
    %313 = vector.broadcast %cst_65 : f32 to vector<8x128xf32>
    %314 = arith.addf %313, %312 : vector<8x128xf32>
    %315 = arith.divf %313, %314 : vector<8x128xf32>
    %316 = vector.extract_strided_slice %303 {offsets = [0, 256], sizes = [8, 128], strides = [1, 1]} : vector<8x512xf32> to vector<8x128xf32>
    %317 = math.tanh %316 : vector<8x128xf32>
    %318 = vector.extract_strided_slice %303 {offsets = [0, 384], sizes = [8, 128], strides = [1, 1]} : vector<8x512xf32> to vector<8x128xf32>
    %319 = arith.negf %318 : vector<8x128xf32>
    %320 = math.exp %319 : vector<8x128xf32>
    %cst_66 = arith.constant 1.000000e+00 : f32
    %321 = vector.broadcast %cst_66 : f32 to vector<8x128xf32>
    %322 = arith.addf %321, %320 : vector<8x128xf32>
    %323 = arith.divf %321, %322 : vector<8x128xf32>
    %324 = arith.mulf %315, %263 : vector<8x128xf32>
    %325 = arith.mulf %309, %317 : vector<8x128xf32>
    %326 = arith.addf %324, %325 : vector<8x128xf32>
    %327 = math.tanh %326 : vector<8x128xf32>
    %328 = arith.mulf %323, %327 : vector<8x128xf32>
    %c1_i32_67 = arith.constant 1 : i32
    %329 = arith.addi %c4_i32, %c1_i32_67 : i32
    %330 = arith.index_cast %329 : i32 to index
    %c0_68 = arith.constant 0 : index
    %c0_69 = arith.constant 0 : index
    %331 = vector.load %arg1[%330, %c0_68, %c0_69] : memref<8x8x1xf32, #tpu.memory_space<vmem>>, vector<1x8x1xf32>
    %332 = vector.shape_cast %331 : vector<1x8x1xf32> to vector<8x1xf32>
    %333 = vector.broadcast %332 : vector<8x1xf32> to vector<8x512xf32>
    %334 = vector.broadcast %6 : vector<1x512xf32> to vector<8x512xf32>
    %335 = arith.mulf %333, %334 : vector<8x512xf32>
    %336 = arith.addf %335, %10 : vector<8x512xf32>
    %cst_70 = arith.constant dense<0.000000e+00> : vector<8x512xf32>
    %337 = tpu.matmul %300, %7, %cst_70 {dimension_numbers = #tpu.dot_dimension_numbers<[1], [0], [0], [1], [0, 0, 1, 1], [], []>} : vector<8x128xf32>, vector<128x512xf32>, vector<8x512xf32> -> vector<8x512xf32>
    %338 = arith.addf %336, %337 : vector<8x512xf32>
    %339 = vector.extract_strided_slice %338 {offsets = [0, 0], sizes = [8, 128], strides = [1, 1]} : vector<8x512xf32> to vector<8x128xf32>
    %340 = arith.negf %339 : vector<8x128xf32>
    %341 = math.exp %340 : vector<8x128xf32>
    %cst_71 = arith.constant 1.000000e+00 : f32
    %342 = vector.broadcast %cst_71 : f32 to vector<8x128xf32>
    %343 = arith.addf %342, %341 : vector<8x128xf32>
    %344 = arith.divf %342, %343 : vector<8x128xf32>
    %345 = vector.extract_strided_slice %338 {offsets = [0, 128], sizes = [8, 128], strides = [1, 1]} : vector<8x512xf32> to vector<8x128xf32>
    %346 = arith.negf %345 : vector<8x128xf32>
    %347 = math.exp %346 : vector<8x128xf32>
    %cst_72 = arith.constant 1.000000e+00 : f32
    %348 = vector.broadcast %cst_72 : f32 to vector<8x128xf32>
    %349 = arith.addf %348, %347 : vector<8x128xf32>
    %350 = arith.divf %348, %349 : vector<8x128xf32>
    %351 = vector.extract_strided_slice %338 {offsets = [0, 256], sizes = [8, 128], strides = [1, 1]} : vector<8x512xf32> to vector<8x128xf32>
    %352 = math.tanh %351 : vector<8x128xf32>
    %353 = vector.extract_strided_slice %338 {offsets = [0, 384], sizes = [8, 128], strides = [1, 1]} : vector<8x512xf32> to vector<8x128xf32>
    %354 = arith.negf %353 : vector<8x128xf32>
    %355 = math.exp %354 : vector<8x128xf32>
    %cst_73 = arith.constant 1.000000e+00 : f32
    %356 = vector.broadcast %cst_73 : f32 to vector<8x128xf32>
    %357 = arith.addf %356, %355 : vector<8x128xf32>
    %358 = arith.divf %356, %357 : vector<8x128xf32>
    %359 = arith.mulf %350, %298 : vector<8x128xf32>
    %360 = arith.mulf %344, %352 : vector<8x128xf32>
    %361 = arith.addf %359, %360 : vector<8x128xf32>
    %362 = math.tanh %361 : vector<8x128xf32>
    %363 = arith.mulf %358, %362 : vector<8x128xf32>
    %c5_i32 = arith.constant 5 : i32
    %364 = tpu.concatenate %328, %363 in 1 : vector<8x128xf32>, vector<8x128xf32> -> vector<8x256xf32>
    %cst_74 = arith.constant dense<0.000000e+00> : vector<8x512xf32>
    %365 = tpu.matmul %364, %48, %cst_74 {dimension_numbers = #tpu.dot_dimension_numbers<[1], [0], [0], [1], [0, 0, 1, 1], [], []>} : vector<8x256xf32>, vector<256x512xf32>, vector<8x512xf32> -> vector<8x512xf32>
    %366 = arith.addf %365, %13 : vector<8x512xf32>
    %367 = vector.extract_strided_slice %366 {offsets = [0, 0], sizes = [8, 128], strides = [1, 1]} : vector<8x512xf32> to vector<8x128xf32>
    %368 = arith.negf %367 : vector<8x128xf32>
    %369 = math.exp %368 : vector<8x128xf32>
    %cst_75 = arith.constant 1.000000e+00 : f32
    %370 = vector.broadcast %cst_75 : f32 to vector<8x128xf32>
    %371 = arith.addf %370, %369 : vector<8x128xf32>
    %372 = arith.divf %370, %371 : vector<8x128xf32>
    %373 = vector.extract_strided_slice %366 {offsets = [0, 128], sizes = [8, 128], strides = [1, 1]} : vector<8x512xf32> to vector<8x128xf32>
    %374 = arith.negf %373 : vector<8x128xf32>
    %375 = math.exp %374 : vector<8x128xf32>
    %cst_76 = arith.constant 1.000000e+00 : f32
    %376 = vector.broadcast %cst_76 : f32 to vector<8x128xf32>
    %377 = arith.addf %376, %375 : vector<8x128xf32>
    %378 = arith.divf %376, %377 : vector<8x128xf32>
    %379 = vector.extract_strided_slice %366 {offsets = [0, 256], sizes = [8, 128], strides = [1, 1]} : vector<8x512xf32> to vector<8x128xf32>
    %380 = math.tanh %379 : vector<8x128xf32>
    %381 = vector.extract_strided_slice %366 {offsets = [0, 384], sizes = [8, 128], strides = [1, 1]} : vector<8x512xf32> to vector<8x128xf32>
    %382 = arith.negf %381 : vector<8x128xf32>
    %383 = math.exp %382 : vector<8x128xf32>
    %cst_77 = arith.constant 1.000000e+00 : f32
    %384 = vector.broadcast %cst_77 : f32 to vector<8x128xf32>
    %385 = arith.addf %384, %383 : vector<8x128xf32>
    %386 = arith.divf %384, %385 : vector<8x128xf32>
    %387 = arith.mulf %378, %326 : vector<8x128xf32>
    %388 = arith.mulf %372, %380 : vector<8x128xf32>
    %389 = arith.addf %387, %388 : vector<8x128xf32>
    %390 = math.tanh %389 : vector<8x128xf32>
    %391 = arith.mulf %386, %390 : vector<8x128xf32>
    %c1_i32_78 = arith.constant 1 : i32
    %392 = arith.addi %c5_i32, %c1_i32_78 : i32
    %393 = arith.index_cast %392 : i32 to index
    %c0_79 = arith.constant 0 : index
    %c0_80 = arith.constant 0 : index
    %394 = vector.load %arg1[%393, %c0_79, %c0_80] : memref<8x8x1xf32, #tpu.memory_space<vmem>>, vector<1x8x1xf32>
    %395 = vector.shape_cast %394 : vector<1x8x1xf32> to vector<8x1xf32>
    %396 = vector.broadcast %395 : vector<8x1xf32> to vector<8x512xf32>
    %397 = vector.broadcast %6 : vector<1x512xf32> to vector<8x512xf32>
    %398 = arith.mulf %396, %397 : vector<8x512xf32>
    %399 = arith.addf %398, %10 : vector<8x512xf32>
    %cst_81 = arith.constant dense<0.000000e+00> : vector<8x512xf32>
    %400 = tpu.matmul %363, %7, %cst_81 {dimension_numbers = #tpu.dot_dimension_numbers<[1], [0], [0], [1], [0, 0, 1, 1], [], []>} : vector<8x128xf32>, vector<128x512xf32>, vector<8x512xf32> -> vector<8x512xf32>
    %401 = arith.addf %399, %400 : vector<8x512xf32>
    %402 = vector.extract_strided_slice %401 {offsets = [0, 0], sizes = [8, 128], strides = [1, 1]} : vector<8x512xf32> to vector<8x128xf32>
    %403 = arith.negf %402 : vector<8x128xf32>
    %404 = math.exp %403 : vector<8x128xf32>
    %cst_82 = arith.constant 1.000000e+00 : f32
    %405 = vector.broadcast %cst_82 : f32 to vector<8x128xf32>
    %406 = arith.addf %405, %404 : vector<8x128xf32>
    %407 = arith.divf %405, %406 : vector<8x128xf32>
    %408 = vector.extract_strided_slice %401 {offsets = [0, 128], sizes = [8, 128], strides = [1, 1]} : vector<8x512xf32> to vector<8x128xf32>
    %409 = arith.negf %408 : vector<8x128xf32>
    %410 = math.exp %409 : vector<8x128xf32>
    %cst_83 = arith.constant 1.000000e+00 : f32
    %411 = vector.broadcast %cst_83 : f32 to vector<8x128xf32>
    %412 = arith.addf %411, %410 : vector<8x128xf32>
    %413 = arith.divf %411, %412 : vector<8x128xf32>
    %414 = vector.extract_strided_slice %401 {offsets = [0, 256], sizes = [8, 128], strides = [1, 1]} : vector<8x512xf32> to vector<8x128xf32>
    %415 = math.tanh %414 : vector<8x128xf32>
    %416 = vector.extract_strided_slice %401 {offsets = [0, 384], sizes = [8, 128], strides = [1, 1]} : vector<8x512xf32> to vector<8x128xf32>
    %417 = arith.negf %416 : vector<8x128xf32>
    %418 = math.exp %417 : vector<8x128xf32>
    %cst_84 = arith.constant 1.000000e+00 : f32
    %419 = vector.broadcast %cst_84 : f32 to vector<8x128xf32>
    %420 = arith.addf %419, %418 : vector<8x128xf32>
    %421 = arith.divf %419, %420 : vector<8x128xf32>
    %422 = arith.mulf %413, %361 : vector<8x128xf32>
    %423 = arith.mulf %407, %415 : vector<8x128xf32>
    %424 = arith.addf %422, %423 : vector<8x128xf32>
    %425 = math.tanh %424 : vector<8x128xf32>
    %426 = arith.mulf %421, %425 : vector<8x128xf32>
    %c6_i32 = arith.constant 6 : i32
    %427 = tpu.concatenate %391, %426 in 1 : vector<8x128xf32>, vector<8x128xf32> -> vector<8x256xf32>
    %cst_85 = arith.constant dense<0.000000e+00> : vector<8x512xf32>
    %428 = tpu.matmul %427, %48, %cst_85 {dimension_numbers = #tpu.dot_dimension_numbers<[1], [0], [0], [1], [0, 0, 1, 1], [], []>} : vector<8x256xf32>, vector<256x512xf32>, vector<8x512xf32> -> vector<8x512xf32>
    %429 = arith.addf %428, %13 : vector<8x512xf32>
    %430 = vector.extract_strided_slice %429 {offsets = [0, 0], sizes = [8, 128], strides = [1, 1]} : vector<8x512xf32> to vector<8x128xf32>
    %431 = arith.negf %430 : vector<8x128xf32>
    %432 = math.exp %431 : vector<8x128xf32>
    %cst_86 = arith.constant 1.000000e+00 : f32
    %433 = vector.broadcast %cst_86 : f32 to vector<8x128xf32>
    %434 = arith.addf %433, %432 : vector<8x128xf32>
    %435 = arith.divf %433, %434 : vector<8x128xf32>
    %436 = vector.extract_strided_slice %429 {offsets = [0, 128], sizes = [8, 128], strides = [1, 1]} : vector<8x512xf32> to vector<8x128xf32>
    %437 = arith.negf %436 : vector<8x128xf32>
    %438 = math.exp %437 : vector<8x128xf32>
    %cst_87 = arith.constant 1.000000e+00 : f32
    %439 = vector.broadcast %cst_87 : f32 to vector<8x128xf32>
    %440 = arith.addf %439, %438 : vector<8x128xf32>
    %441 = arith.divf %439, %440 : vector<8x128xf32>
    %442 = vector.extract_strided_slice %429 {offsets = [0, 256], sizes = [8, 128], strides = [1, 1]} : vector<8x512xf32> to vector<8x128xf32>
    %443 = math.tanh %442 : vector<8x128xf32>
    %444 = vector.extract_strided_slice %429 {offsets = [0, 384], sizes = [8, 128], strides = [1, 1]} : vector<8x512xf32> to vector<8x128xf32>
    %445 = arith.negf %444 : vector<8x128xf32>
    %446 = math.exp %445 : vector<8x128xf32>
    %cst_88 = arith.constant 1.000000e+00 : f32
    %447 = vector.broadcast %cst_88 : f32 to vector<8x128xf32>
    %448 = arith.addf %447, %446 : vector<8x128xf32>
    %449 = arith.divf %447, %448 : vector<8x128xf32>
    %450 = arith.mulf %441, %389 : vector<8x128xf32>
    %451 = arith.mulf %435, %443 : vector<8x128xf32>
    %452 = arith.addf %450, %451 : vector<8x128xf32>
    %453 = math.tanh %452 : vector<8x128xf32>
    %454 = arith.mulf %449, %453 : vector<8x128xf32>
    %c1_i32_89 = arith.constant 1 : i32
    %455 = arith.addi %c6_i32, %c1_i32_89 : i32
    %456 = arith.index_cast %455 : i32 to index
    %c0_90 = arith.constant 0 : index
    %c0_91 = arith.constant 0 : index
    %457 = vector.load %arg1[%456, %c0_90, %c0_91] : memref<8x8x1xf32, #tpu.memory_space<vmem>>, vector<1x8x1xf32>
    %458 = vector.shape_cast %457 : vector<1x8x1xf32> to vector<8x1xf32>
    %459 = vector.broadcast %458 : vector<8x1xf32> to vector<8x512xf32>
    %460 = vector.broadcast %6 : vector<1x512xf32> to vector<8x512xf32>
    %461 = arith.mulf %459, %460 : vector<8x512xf32>
    %462 = arith.addf %461, %10 : vector<8x512xf32>
    %cst_92 = arith.constant dense<0.000000e+00> : vector<8x512xf32>
    %463 = tpu.matmul %426, %7, %cst_92 {dimension_numbers = #tpu.dot_dimension_numbers<[1], [0], [0], [1], [0, 0, 1, 1], [], []>} : vector<8x128xf32>, vector<128x512xf32>, vector<8x512xf32> -> vector<8x512xf32>
    %464 = arith.addf %462, %463 : vector<8x512xf32>
    %465 = vector.extract_strided_slice %464 {offsets = [0, 0], sizes = [8, 128], strides = [1, 1]} : vector<8x512xf32> to vector<8x128xf32>
    %466 = arith.negf %465 : vector<8x128xf32>
    %467 = math.exp %466 : vector<8x128xf32>
    %cst_93 = arith.constant 1.000000e+00 : f32
    %468 = vector.broadcast %cst_93 : f32 to vector<8x128xf32>
    %469 = arith.addf %468, %467 : vector<8x128xf32>
    %470 = arith.divf %468, %469 : vector<8x128xf32>
    %471 = vector.extract_strided_slice %464 {offsets = [0, 128], sizes = [8, 128], strides = [1, 1]} : vector<8x512xf32> to vector<8x128xf32>
    %472 = arith.negf %471 : vector<8x128xf32>
    %473 = math.exp %472 : vector<8x128xf32>
    %cst_94 = arith.constant 1.000000e+00 : f32
    %474 = vector.broadcast %cst_94 : f32 to vector<8x128xf32>
    %475 = arith.addf %474, %473 : vector<8x128xf32>
    %476 = arith.divf %474, %475 : vector<8x128xf32>
    %477 = vector.extract_strided_slice %464 {offsets = [0, 256], sizes = [8, 128], strides = [1, 1]} : vector<8x512xf32> to vector<8x128xf32>
    %478 = math.tanh %477 : vector<8x128xf32>
    %479 = vector.extract_strided_slice %464 {offsets = [0, 384], sizes = [8, 128], strides = [1, 1]} : vector<8x512xf32> to vector<8x128xf32>
    %480 = arith.negf %479 : vector<8x128xf32>
    %481 = math.exp %480 : vector<8x128xf32>
    %cst_95 = arith.constant 1.000000e+00 : f32
    %482 = vector.broadcast %cst_95 : f32 to vector<8x128xf32>
    %483 = arith.addf %482, %481 : vector<8x128xf32>
    %484 = arith.divf %482, %483 : vector<8x128xf32>
    %485 = arith.mulf %476, %424 : vector<8x128xf32>
    %486 = arith.mulf %470, %478 : vector<8x128xf32>
    %487 = arith.addf %485, %486 : vector<8x128xf32>
    %488 = math.tanh %487 : vector<8x128xf32>
    %489 = arith.mulf %484, %488 : vector<8x128xf32>
    %c7_i32 = arith.constant 7 : i32
    %490 = tpu.concatenate %454, %489 in 1 : vector<8x128xf32>, vector<8x128xf32> -> vector<8x256xf32>
    %cst_96 = arith.constant dense<0.000000e+00> : vector<8x512xf32>
    %491 = tpu.matmul %490, %48, %cst_96 {dimension_numbers = #tpu.dot_dimension_numbers<[1], [0], [0], [1], [0, 0, 1, 1], [], []>} : vector<8x256xf32>, vector<256x512xf32>, vector<8x512xf32> -> vector<8x512xf32>
    %492 = arith.addf %491, %13 : vector<8x512xf32>
    %493 = vector.extract_strided_slice %492 {offsets = [0, 0], sizes = [8, 128], strides = [1, 1]} : vector<8x512xf32> to vector<8x128xf32>
    %494 = arith.negf %493 : vector<8x128xf32>
    %495 = math.exp %494 : vector<8x128xf32>
    %cst_97 = arith.constant 1.000000e+00 : f32
    %496 = vector.broadcast %cst_97 : f32 to vector<8x128xf32>
    %497 = arith.addf %496, %495 : vector<8x128xf32>
    %498 = arith.divf %496, %497 : vector<8x128xf32>
    %499 = vector.extract_strided_slice %492 {offsets = [0, 128], sizes = [8, 128], strides = [1, 1]} : vector<8x512xf32> to vector<8x128xf32>
    %500 = arith.negf %499 : vector<8x128xf32>
    %501 = math.exp %500 : vector<8x128xf32>
    %cst_98 = arith.constant 1.000000e+00 : f32
    %502 = vector.broadcast %cst_98 : f32 to vector<8x128xf32>
    %503 = arith.addf %502, %501 : vector<8x128xf32>
    %504 = arith.divf %502, %503 : vector<8x128xf32>
    %505 = vector.extract_strided_slice %492 {offsets = [0, 256], sizes = [8, 128], strides = [1, 1]} : vector<8x512xf32> to vector<8x128xf32>
    %506 = math.tanh %505 : vector<8x128xf32>
    %507 = vector.extract_strided_slice %492 {offsets = [0, 384], sizes = [8, 128], strides = [1, 1]} : vector<8x512xf32> to vector<8x128xf32>
    %508 = arith.negf %507 : vector<8x128xf32>
    %509 = math.exp %508 : vector<8x128xf32>
    %cst_99 = arith.constant 1.000000e+00 : f32
    %510 = vector.broadcast %cst_99 : f32 to vector<8x128xf32>
    %511 = arith.addf %510, %509 : vector<8x128xf32>
    %512 = arith.divf %510, %511 : vector<8x128xf32>
    %513 = arith.mulf %504, %452 : vector<8x128xf32>
    %514 = arith.mulf %498, %506 : vector<8x128xf32>
    %515 = arith.addf %513, %514 : vector<8x128xf32>
    %516 = math.tanh %515 : vector<8x128xf32>
    %517 = arith.mulf %512, %516 : vector<8x128xf32>
    %c1_i32_100 = arith.constant 1 : i32
    %518 = tpu.memref_slice %arg13[%c1_i32_100] : memref<3x!tpu.dma_semaphore, #tpu.memory_space<semaphore_mem>> -> memref<1x!tpu.dma_semaphore, #tpu.memory_space<semaphore_mem>>
    %519 = tpu.memref_squeeze %518 : memref<1x!tpu.dma_semaphore, #tpu.memory_space<semaphore_mem>> -> memref<!tpu.dma_semaphore, #tpu.memory_space<semaphore_mem>>
    tpu.wait_dma2 semaphore(%519 : memref<!tpu.dma_semaphore, #tpu.memory_space<semaphore_mem>>) src(%arg7 : memref<8x128xf32, #tpu.memory_space<any>>) dst(%arg11 : memref<8x128xf32, #tpu.memory_space<vmem>>)
    %c2_i32_101 = arith.constant 2 : i32
    %520 = tpu.memref_slice %arg13[%c2_i32_101] : memref<3x!tpu.dma_semaphore, #tpu.memory_space<semaphore_mem>> -> memref<1x!tpu.dma_semaphore, #tpu.memory_space<semaphore_mem>>
    %521 = tpu.memref_squeeze %520 : memref<1x!tpu.dma_semaphore, #tpu.memory_space<semaphore_mem>> -> memref<!tpu.dma_semaphore, #tpu.memory_space<semaphore_mem>>
    tpu.wait_dma2 semaphore(%521 : memref<!tpu.dma_semaphore, #tpu.memory_space<semaphore_mem>>) src(%arg8 : memref<1x128xf32, #tpu.memory_space<any>>) dst(%arg12 : memref<1x128xf32, #tpu.memory_space<vmem>>)
    %c0_102 = arith.constant 0 : index
    %c0_103 = arith.constant 0 : index
    %522 = vector.load %arg11[%c0_102, %c0_103] : memref<8x128xf32, #tpu.memory_space<vmem>>, vector<1x128xf32>
    %523 = vector.broadcast %522 : vector<1x128xf32> to vector<8x128xf32>
    %524 = arith.mulf %517, %523 : vector<8x128xf32>
    %cst_104 = arith.constant dense<0.000000e+00> : vector<8xf32>
    %525 = vector.multi_reduction <add>, %524, %cst_104 [1] : vector<8x128xf32> to vector<8xf32>
    %526 = vector.shape_cast %525 : vector<8xf32> to vector<8x1xf32>
    %c0_105 = arith.constant 0 : index
    %c0_106 = arith.constant 0 : index
    %527 = vector.load %arg12[%c0_105, %c0_106] : memref<1x128xf32, #tpu.memory_space<vmem>>, vector<1x1xf32>
    %528 = vector.broadcast %527 : vector<1x1xf32> to vector<8x1xf32>
    %529 = arith.addf %526, %528 : vector<8x1xf32>
    %530 = vector.shape_cast %529 : vector<8x1xf32> to vector<8x1xf32>
    %531 = vector.broadcast %530 : vector<8x1xf32> to vector<8x128xf32>
    %c0_107 = arith.constant 0 : index
    %c0_108 = arith.constant 0 : index
    %532 = vector.load %arg9[%c0_107, %c0_108] : memref<8x128xf32, #tpu.memory_space<vmem>>, vector<8x128xf32>
    tpu.vector_store %arg9[%c0_107, %c0_108], %531 {strides = array<i32>} : memref<8x128xf32, #tpu.memory_space<vmem>>, vector<8x128xf32>,
    return
  }
  func.func @transform_0(%arg0: i32) -> (i32, i32, i32) {
    %c0_i32 = arith.constant 0 : i32
    %c0_i32_0 = arith.constant 0 : i32
    %c0_i32_1 = arith.constant 0 : i32
    %c0_i32_2 = arith.constant 0 : i32
    return %c0_i32, %c0_i32_0, %c0_i32_1 : i32, i32, i32
  }
  func.func @transform_1(%arg0: i32) -> (i32, i32) {
    %c0_i32 = arith.constant 0 : i32
    %c0_i32_0 = arith.constant 0 : i32
    %c0_i32_1 = arith.constant 0 : i32
    return %c0_i32, %c0_i32_0 : i32, i32
  }
  func.func @transform_2(%arg0: i32) -> (i32, i32) {
    %c0_i32 = arith.constant 0 : i32
    %c0_i32_0 = arith.constant 0 : i32
    %c0_i32_1 = arith.constant 0 : i32
    return %c0_i32, %c0_i32_0 : i32, i32
  }
  func.func @transform_3(%arg0: i32) -> (i32, i32) {
    %c0_i32 = arith.constant 0 : i32
    %c0_i32_0 = arith.constant 0 : i32
    %c0_i32_1 = arith.constant 0 : i32
    return %c0_i32, %c0_i32_0 : i32, i32
  }
  func.func @transform_4(%arg0: i32) -> (i32, i32) {
    %c0_i32 = arith.constant 0 : i32
    %c0_i32_0 = arith.constant 0 : i32
    %c0_i32_1 = arith.constant 0 : i32
    return %c0_i32, %c0_i32_0 : i32, i32
  }
  func.func @transform_8(%arg0: i32) -> (i32, i32) {
    %c0_i32 = arith.constant 0 : i32
    %c0_i32_0 = arith.constant 0 : i32
    %c0_i32_1 = arith.constant 0 : i32
    return %c0_i32, %c0_i32_0 : i32, i32
  }
}

</mosaic_0001>

<llo_original>
// kernel: tpu_custom_call.1
$region0: #{tpu_custom_call.1}
  #allocation0 [shape = 'u32[]', space=smem, size = 0x4, offset = 0x4, fixed_abs, tag = 'smem constant byte address 0x4 - core index']
  #allocation1 [shape = 'u32[144,128]{1,0:T(1,128)}', space=vmem, size = 0x12000, scoped, tag = 'internal scratch']
  #allocation2 [shape = 'f32[256,512]{1,0:T(8,128)}', space=vmem, size = 0x80000, scoped, tag = 'scratch operand']
  #allocation3 [shape = 'f32[8,128]{1,0:T(8,128)}', space=vmem, size = 0x1000, scoped, tag = 'scratch operand']
  #allocation4 [shape = 'f32[1,128]{1,0:T(1,128)}', space=vmem, size = 0x200, scoped, tag = 'scratch operand']
  #allocation5 [shape = 's32[3]{0}', space=sflag, size = 0xc, scoped, tag = 'scratch operand']
  #allocation10 [shape = 's32[]', space=sflag, size = 0x4, offset = 0, fixed_abs, tag = 'sflag constant byte address 0x0 - dummy sync flag']
  #allocation11 [shape = 's32[]', space=sflag, size = 0x4, offset = 0, fixed_abs, tag = 'sflag constant byte address 0x0 - dummy sync flag']
  #allocation12 [shape = 'u32[]', space=smem, size = 0x4, offset = 0x44, fixed_abs, tag = 'smem constant byte address 0x44 - assertion arg 0']
  #allocation13 [shape = 'u32[]', space=smem, size = 0x4, offset = 0x48, fixed_abs, tag = 'smem constant byte address 0x48 - assertion arg 1']
  #allocation14 [shape = 's32[]', space=sflag, size = 0x4, offset = 0, fixed_abs, tag = 'sflag constant byte address 0x0 - dummy sync flag']
  #allocation15 [shape = 's32[]', space=sflag, size = 0x4, offset = 0, fixed_abs, tag = 'sflag constant byte address 0x0 - dummy sync flag']
  %s0 = inlined_call_operand.vmem [shape: f32[8,8,1], index: 0, kind: input, shape index: {}]
  %s1 = inlined_call_operand.vmem [shape: f32[1,512], index: 1, kind: input, shape index: {}]
  %s2 = inlined_call_operand.hbm [shape: f32[128,512], index: 2, kind: input, shape index: {}]
  %s3 = inlined_call_operand.vmem [shape: f32[1,512], index: 3, kind: input, shape index: {}]
  %s4 = inlined_call_operand.vmem [shape: f32[1,512], index: 4, kind: input, shape index: {}]
  %s5 = inlined_call_operand.hbm [shape: f32[256,512], index: 5, kind: input, shape index: {}]
  %s6 = inlined_call_operand.vmem [shape: f32[8,128], index: 6, kind: input, shape index: {}]
  %s7 = inlined_call_operand.vmem [shape: f32[1,128], index: 7, kind: input, shape index: {}]
  %s8 = inlined_call_operand.hbm [shape: f32[8,128], index: 8, kind: output, shape index: {}]
  %s9 = sld [smem:[#allocation0]]
  $region102: #{tpu_custom_call.1} parent=0
    _
  %s11 = ssub.s32 1, %s9
  %s12 = scalar_select 0, %s11, %s9
  $region1: #{tpu_custom_call.1} parent=0
    #allocation6 [shape = 'u8[262144]{0}', space=vmem, size = 0x40000, scoped, tag = 'input window, operand 2, single buffered']
    #allocation7 [shape = 's32[1]{0}', space=sflag, size = 0x4, scoped, tag = 'scoped memory for tpu_custom_call.1']
    #allocation8 [shape = 's32[1]{0}', space=sflag, size = 0x4, scoped, tag = 'scoped memory for tpu_custom_call.1']
    #allocation9 [shape = 'u8[4096]{0}', space=vmem, size = 0x1000, scoped, tag = 'output window, operand 0, single buffered']
    %13 = vsyncpa [#allocation7], 0
    %14 = vsyncpa [#allocation8], 0
    // Predicated region
    $region2: #{tpu_custom_call.1} parent=1 // pred_check
      _
    $region3: #{tpu_custom_call.1} parent=1 // pred_check_branch
      %16 = sbr.rel (0) target = $region5
    $region4: #{tpu_custom_call.1} parent=1 // pred_region
      _
    $region5: #{tpu_custom_call.1} parent=1 // pred_fallthru
      _
    // Predicated region
    $region6: #{tpu_custom_call.1} parent=1 // pred_check
      _
    $region7: #{tpu_custom_call.1} parent=1 // pred_check_branch
      %18 = sbr.rel (0) target = $region9
    $region8: #{tpu_custom_call.1} parent=1 // pred_region
      _
    $region9: #{tpu_custom_call.1} parent=1 // pred_fallthru
      _
    // Predicated region
    $region10: #{tpu_custom_call.1} parent=1 // pred_check
      _
    $region11: #{tpu_custom_call.1} parent=1 // pred_check_branch
      %20 = sbr.rel (0) target = $region13
    $region12: #{tpu_custom_call.1} parent=1 // pred_region
      %s22 = ssub.s32 8192, 8192
      %23 = vsyncadd [#allocation7], %s22
      %s24 = sshll.u32 [#allocation6], 4
      %s25 = int_to_ptr.vmem [resolvable:$true] %s24
      %30 = dma.hbm_to_vmem [thread:$0]  %s2, 8192, %s25, [#allocation7], 512, 512, 32
    $region13: #{tpu_custom_call.1} parent=1 // pred_fallthru
      _
    // Predicated region
    $region14: #{tpu_custom_call.1} parent=1 // pred_check
      _
    $region15: #{tpu_custom_call.1} parent=1 // pred_check_branch
      %32 = sbr.rel (0) target = $region17
    $region16: #{tpu_custom_call.1} parent=1 // pred_region
      _
    $region17: #{tpu_custom_call.1} parent=1 // pred_fallthru
      _
    // Predicated region
    $region18: #{tpu_custom_call.1} parent=1 // pred_check
      _
    $region19: #{tpu_custom_call.1} parent=1 // pred_check_branch
      %34 = sbr.rel (0) target = $region21
    $region20: #{tpu_custom_call.1} parent=1 // pred_region
      _
    $region21: #{tpu_custom_call.1} parent=1 // pred_fallthru
      _
    // Predicated region
    $region22: #{tpu_custom_call.1} parent=1 // pred_check
      _
    $region23: #{tpu_custom_call.1} parent=1 // pred_check_branch
      %36 = sbr.rel (0) target = $region25
    $region24: #{tpu_custom_call.1} parent=1 // pred_region
      %37 = dma.done [#allocation7], 8192
    $region25: #{tpu_custom_call.1} parent=1 // pred_fallthru
      _
    // Predicated region
    $region26: #{tpu_custom_call.1} parent=1 // pred_check
      _
    $region27: #{tpu_custom_call.1} parent=1 // pred_check_branch
      %39 = sbr.rel target = $region29
    $region28: #{tpu_custom_call.1} parent=1 // pred_region
      %40 = sst [smem:[#allocation12]] [#allocation11]
      %41 = sst [smem:[#allocation13]] [#allocation10]
    $region29: #{tpu_custom_call.1} parent=1 // pred_fallthru
      _
    %43 = shalt.err (0)
    %s45 = sshll.u32 [#allocation2], 4
    %s46 = int_to_ptr.vmem [resolvable:$true] %s45
    %48 = dma.hbm_to_vmem [thread:$0]  %s5, 16384, %s46, [#allocation5]
    %s49 = scalar_lea.sflag [#allocation5], 1
    %p51 = scmp.lt.u32.totalorder 8, 8
    %p52 = pneg %p51
    // Predicated region
    $region30: #{tpu_custom_call.1} parent=1 // pred_check
      _
    $region31: #{tpu_custom_call.1} parent=1 // pred_check_branch
      %54 = sbr.rel (%p51) target = $region33
    $region32: #{tpu_custom_call.1} parent=1 // pred_region
      %s69 = sand.u32 8, 7
      %p70 = scmp.eq.s32.totalorder %s69, 0
      // Predicated region
      $region45: #{tpu_custom_call.1} parent=32 // pred_check
        %p71 = pneg %p70
      $region46: #{tpu_custom_call.1} parent=32 // pred_check_branch
        %73 = sbr.rel (%p71) target = $region48
      $region47: #{tpu_custom_call.1} parent=32 // pred_region
        loop: start=0, step=1, limit=1
        $region49: #{tpu_custom_call.1} parent=47 // loop_pre_header
          _
        $region50: #{tpu_custom_call.1} parent=47 // loop_header
          %s75 = sphi 0, %s79
          %p76 = scmp.ge.s32.totalorder %s75, 1
          %s80 = sphi %s6, %s6
          %s81 = sphi [#allocation3], [#allocation3]
        $region51: #{tpu_custom_call.1} parent=47 // loop_header_branch
          %78 = sbr.rel (%p76) target = $region55
        $region52: #{tpu_custom_call.1} parent=47 // loop_body
          %v82 = vld [vmem:[%s80] sm:$0xff]
          %83 = vst [vmem:[%s81] sm:$0xff] %v82
        $region53: #{tpu_custom_call.1} parent=47 // loop_footer
          %s79 = sadd.s32 1, %s75
        $region54: #{tpu_custom_call.1} parent=47 // loop_footer_branch
          %74 = sbr.rel target = $region50
        $region55: #{tpu_custom_call.1} parent=47 // loop_exit
          _
      $region48: #{tpu_custom_call.1} parent=32 // pred_fallthru
        _
      %p84 = pneg %p70
      // Predicated region
      $region56: #{tpu_custom_call.1} parent=32 // pred_check
        _
      $region57: #{tpu_custom_call.1} parent=32 // pred_check_branch
        %86 = sbr.rel (%p70) target = $region59
      $region58: #{tpu_custom_call.1} parent=32 // pred_region
        %s87 = sand.u32 8, 7
      $region59: #{tpu_custom_call.1} parent=32 // pred_fallthru
        _
    $region33: #{tpu_custom_call.1} parent=1 // pred_fallthru
      _
    // Predicated region
    $region34: #{tpu_custom_call.1} parent=1 // pred_check
      %p55 = pneg %p51
    $region35: #{tpu_custom_call.1} parent=1 // pred_check_branch
      %57 = sbr.rel (%p55) target = $region37
    $region36: #{tpu_custom_call.1} parent=1 // pred_region
      %s58 = sshllo.u32 0, 8
      loop: start=0, step=1, limit=1
      $region38: #{tpu_custom_call.1} parent=36 // loop_pre_header
        _
      $region39: #{tpu_custom_call.1} parent=36 // loop_header
        %s60 = sphi 0, %s64
        %p61 = scmp.ge.s32.totalorder %s60, 1
        %s65 = sphi %s6, %s6
        %s66 = sphi [#allocation3], [#allocation3]
      $region40: #{tpu_custom_call.1} parent=36 // loop_header_branch
        %63 = sbr.rel (%p61) target = $region44
      $region41: #{tpu_custom_call.1} parent=36 // loop_body
        %v67 = vld [vmem:[%s65] sm:%s58]
        %68 = vst [vmem:[%s66] sm:%s58] %v67
      $region42: #{tpu_custom_call.1} parent=36 // loop_footer
        %s64 = sadd.s32 1, %s60
      $region43: #{tpu_custom_call.1} parent=36 // loop_footer_branch
        %59 = sbr.rel target = $region39
      $region44: #{tpu_custom_call.1} parent=36 // loop_exit
        _
    $region37: #{tpu_custom_call.1} parent=1 // pred_fallthru
      _
    // Predicated region
    $region60: #{tpu_custom_call.1} parent=1 // pred_check
      _
    $region61: #{tpu_custom_call.1} parent=1 // pred_check_branch
      %90 = sbr.rel (0) target = $region63
    $region62: #{tpu_custom_call.1} parent=1 // pred_region
      %91 = vsyncadd %s49, 128
    $region63: #{tpu_custom_call.1} parent=1 // pred_fallthru
      _
    %s92 = scalar_lea.sflag [#allocation5], 2
    %p94 = scmp.lt.u32.totalorder 1, 8
    %p95 = pneg %p94
    // Predicated region
    $region64: #{tpu_custom_call.1} parent=1 // pred_check
      _
    $region65: #{tpu_custom_call.1} parent=1 // pred_check_branch
      %97 = sbr.rel (%p94) target = $region67
    $region66: #{tpu_custom_call.1} parent=1 // pred_region
      %s112 = sand.u32 1, 7
      %p113 = scmp.eq.s32.totalorder %s112, 0
      %p114 = pneg %p113
      // Predicated region
      $region79: #{tpu_custom_call.1} parent=66 // pred_check
        _
      $region80: #{tpu_custom_call.1} parent=66 // pred_check_branch
        %116 = sbr.rel (%p113) target = $region82
      $region81: #{tpu_custom_call.1} parent=66 // pred_region
        %s117 = sand.u32 1, 7
        %s118 = ssub.s32 1, %s117
        %s119 = scalar_lea.vmem %s7, %s118
        %s120 = ssub.s32 1, %s117
        %s121 = scalar_lea.vmem [#allocation4], %s120
        %s122 = sshllo.u32 0, %s117
        loop: start=0, step=1, limit=1
        $region83: #{tpu_custom_call.1} parent=81 // loop_pre_header
          _
        $region84: #{tpu_custom_call.1} parent=81 // loop_header
          %s124 = sphi 0, %s128
          %p125 = scmp.ge.s32.totalorder %s124, 1
          %s129 = sphi %s119, %s119
          %s130 = sphi %s121, %s121
        $region85: #{tpu_custom_call.1} parent=81 // loop_header_branch
          %127 = sbr.rel (%p125) target = $region89
        $region86: #{tpu_custom_call.1} parent=81 // loop_body
          %v131 = vld [vmem:[%s129] sm:%s122]
          %132 = vst [vmem:[%s130] sm:%s122] %v131
        $region87: #{tpu_custom_call.1} parent=81 // loop_footer
          %s128 = sadd.s32 1, %s124
        $region88: #{tpu_custom_call.1} parent=81 // loop_footer_branch
          %123 = sbr.rel target = $region84
        $region89: #{tpu_custom_call.1} parent=81 // loop_exit
          _
      $region82: #{tpu_custom_call.1} parent=66 // pred_fallthru
        _
    $region67: #{tpu_custom_call.1} parent=1 // pred_fallthru
      _
    // Predicated region
    $region68: #{tpu_custom_call.1} parent=1 // pred_check
      %p98 = pneg %p94
    $region69: #{tpu_custom_call.1} parent=1 // pred_check_branch
      %100 = sbr.rel (%p98) target = $region71
    $region70: #{tpu_custom_call.1} parent=1 // pred_region
      %s101 = sshllo.u32 0, 1
      loop: start=0, step=1, limit=1
      $region72: #{tpu_custom_call.1} parent=70 // loop_pre_header
        _
      $region73: #{tpu_custom_call.1} parent=70 // loop_header
        %s103 = sphi 0, %s107
        %p104 = scmp.ge.s32.totalorder %s103, 1
        %s108 = sphi %s7, %s7
        %s109 = sphi [#allocation4], [#allocation4]
      $region74: #{tpu_custom_call.1} parent=70 // loop_header_branch
        %106 = sbr.rel (%p104) target = $region78
      $region75: #{tpu_custom_call.1} parent=70 // loop_body
        %v110 = vld [vmem:[%s108] sm:%s101]
        %111 = vst [vmem:[%s109] sm:%s101] %v110
      $region76: #{tpu_custom_call.1} parent=70 // loop_footer
        %s107 = sadd.s32 1, %s103
      $region77: #{tpu_custom_call.1} parent=70 // loop_footer_branch
        %102 = sbr.rel target = $region73
      $region78: #{tpu_custom_call.1} parent=70 // loop_exit
        _
    $region71: #{tpu_custom_call.1} parent=1 // pred_fallthru
      _
    // Predicated region
    $region90: #{tpu_custom_call.1} parent=1 // pred_check
      _
    $region91: #{tpu_custom_call.1} parent=1 // pred_check_branch
      %135 = sbr.rel (0) target = $region93
    $region92: #{tpu_custom_call.1} parent=1 // pred_region
      %136 = vsyncadd %s92, 16
    $region93: #{tpu_custom_call.1} parent=1 // pred_fallthru
      _
    %v137 = vld [vmem:[%s1] sm:$0xf]
    %v138 = vld [vmem:[#allocation6] sm:$0xff]
    %v139 = vld [vmem:[#allocation6 + $0x8] sm:$0xff]
    %v140 = vld [vmem:[#allocation6 + $0x10] sm:$0xff]
    %v141 = vld [vmem:[#allocation6 + $0x18] sm:$0xff]
    %v142 = vld [vmem:[#allocation6 + $0x20] sm:$0xff]
    %v143 = vld [vmem:[#allocation6 + $0x28] sm:$0xff]
    %v144 = vld [vmem:[#allocation6 + $0x30] sm:$0xff]
    %v145 = vld [vmem:[#allocation6 + $0x38] sm:$0xff]
    %v146 = vld [vmem:[#allocation6 + $0x40] sm:$0xff]
    %v147 = vld [vmem:[#allocation6 + $0x48] sm:$0xff]
    %v148 = vld [vmem:[#allocation6 + $0x50] sm:$0xff]
    %v149 = vld [vmem:[#allocation6 + $0x58] sm:$0xff]
    %v150 = vld [vmem:[#allocation6 + $0x60] sm:$0xff]
    %v151 = vld [vmem:[#allocation6 + $0x68] sm:$0xff]
    %v152 = vld [vmem:[#allocation6 + $0x70] sm:$0xff]
    %v153 = vld [vmem:[#allocation6 + $0x78] sm:$0xff]
    %v154 = vld [vmem:[#allocation6 + $0x80] sm:$0xff]
    %v155 = vld [vmem:[#allocation6 + $0x88] sm:$0xff]
    %v156 = vld [vmem:[#allocation6 + $0x90] sm:$0xff]
    %v157 = vld [vmem:[#allocation6 + $0x98] sm:$0xff]
    %v158 = vld [vmem:[#allocation6 + $0xa0] sm:$0xff]
    %v159 = vld [vmem:[#allocation6 + $0xa8] sm:$0xff]
    %v160 = vld [vmem:[#allocation6 + $0xb0] sm:$0xff]
    %v161 = vld [vmem:[#allocation6 + $0xb8] sm:$0xff]
    %v162 = vld [vmem:[#allocation6 + $0xc0] sm:$0xff]
    %v163 = vld [vmem:[#allocation6 + $0xc8] sm:$0xff]
    %v164 = vld [vmem:[#allocation6 + $0xd0] sm:$0xff]
    %v165 = vld [vmem:[#allocation6 + $0xd8] sm:$0xff]
    %v166 = vld [vmem:[#allocation6 + $0xe0] sm:$0xff]
    %v167 = vld [vmem:[#allocation6 + $0xe8] sm:$0xff]
    %v168 = vld [vmem:[#allocation6 + $0xf0] sm:$0xff]
    %v169 = vld [vmem:[#allocation6 + $0xf8] sm:$0xff]
    %v170 = vld [vmem:[#allocation6 + $0x100] sm:$0xff]
    %v171 = vld [vmem:[#allocation6 + $0x108] sm:$0xff]
    %v172 = vld [vmem:[#allocation6 + $0x110] sm:$0xff]
    %v173 = vld [vmem:[#allocation6 + $0x118] sm:$0xff]
    %v174 = vld [vmem:[#allocation6 + $0x120] sm:$0xff]
    %v175 = vld [vmem:[#allocation6 + $0x128] sm:$0xff]
    %v176 = vld [vmem:[#allocation6 + $0x130] sm:$0xff]
    %v177 = vld [vmem:[#allocation6 + $0x138] sm:$0xff]
    %v178 = vld [vmem:[#allocation6 + $0x140] sm:$0xff]
    %v179 = vld [vmem:[#allocation6 + $0x148] sm:$0xff]
    %v180 = vld [vmem:[#allocation6 + $0x150] sm:$0xff]
    %v181 = vld [vmem:[#allocation6 + $0x158] sm:$0xff]
    %v182 = vld [vmem:[#allocation6 + $0x160] sm:$0xff]
    %v183 = vld [vmem:[#allocation6 + $0x168] sm:$0xff]
    %v184 = vld [vmem:[#allocation6 + $0x170] sm:$0xff]
    %v185 = vld [vmem:[#allocation6 + $0x178] sm:$0xff]
    %v186 = vld [vmem:[#allocation6 + $0x180] sm:$0xff]
    %v187 = vld [vmem:[#allocation6 + $0x188] sm:$0xff]
    %v188 = vld [vmem:[#allocation6 + $0x190] sm:$0xff]
    %v189 = vld [vmem:[#allocation6 + $0x198] sm:$0xff]
    %v190 = vld [vmem:[#allocation6 + $0x1a0] sm:$0xff]
    %v191 = vld [vmem:[#allocation6 + $0x1a8] sm:$0xff]
    %v192 = vld [vmem:[#allocation6 + $0x1b0] sm:$0xff]
    %v193 = vld [vmem:[#allocation6 + $0x1b8] sm:$0xff]
    %v194 = vld [vmem:[#allocation6 + $0x1c0] sm:$0xff]
    %v195 = vld [vmem:[#allocation6 + $0x1c8] sm:$0xff]
    %v196 = vld [vmem:[#allocation6 + $0x1d0] sm:$0xff]
    %v197 = vld [vmem:[#allocation6 + $0x1d8] sm:$0xff]
    %v198 = vld [vmem:[#allocation6 + $0x1e0] sm:$0xff]
    %v199 = vld [vmem:[#allocation6 + $0x1e8] sm:$0xff]
    %v200 = vld [vmem:[#allocation6 + $0x1f0] sm:$0xff]
    %v201 = vld [vmem:[#allocation6 + $0x1f8] sm:$0xff]
    %v202 = vld [vmem:[%s3] sm:$0xf]
    %v204 = vlaneseq
    %v205 = vshrl.u32 %v204, 7
    %v206 = vsub.s32 0, %v205
    %v207 = vrot.slane %v202, %v206
    %v208 = vlaneseq
    %v209 = vshrl.u32 %v208, 7
    %v210 = vsub.s32 1, %v209
    %v211 = vrot.slane %v202, %v210
    %v212 = vlaneseq
    %v213 = vshrl.u32 %v212, 7
    %v214 = vsub.s32 2, %v213
    %v215 = vrot.slane %v202, %v214
    %v216 = vlaneseq
    %v217 = vshrl.u32 %v216, 7
    %v218 = vsub.s32 3, %v217
    %v219 = vrot.slane %v202, %v218
    %v224 = vld [vmem:[%s4] sm:$0xf]
    %v226 = vlaneseq
    %v227 = vshrl.u32 %v226, 7
    %v228 = vsub.s32 0, %v227
    %v229 = vrot.slane %v224, %v228
    %v230 = vlaneseq
    %v231 = vshrl.u32 %v230, 7
    %v232 = vsub.s32 1, %v231
    %v233 = vrot.slane %v224, %v232
    %v234 = vlaneseq
    %v235 = vshrl.u32 %v234, 7
    %v236 = vsub.s32 2, %v235
    %v237 = vrot.slane %v224, %v236
    %v238 = vlaneseq
    %v239 = vshrl.u32 %v238, 7
    %v240 = vsub.s32 3, %v239
    %v241 = vrot.slane %v224, %v240
    %v246 = vld [vmem:[%s0] sm:$0xff]
    %248 = vset.pattern.permute.xlu0 0
    %249 = vperm.xlu0 %248, %v246
    %v250 = vpop.permute.xlu0 %249
    %v253 = vlaneseq
    %v254 = vshrl.u32 %v253, 7
    %v255 = vsub.s32 0, %v254
    %v256 = vrot.slane %v137, %v255
    %v257 = vlaneseq
    %v258 = vshrl.u32 %v257, 7
    %v259 = vsub.s32 1, %v258
    %v260 = vrot.slane %v137, %v259
    %v261 = vlaneseq
    %v262 = vshrl.u32 %v261, 7
    %v263 = vsub.s32 2, %v262
    %v264 = vrot.slane %v137, %v263
    %v265 = vlaneseq
    %v266 = vshrl.u32 %v265, 7
    %v267 = vsub.s32 3, %v266
    %v268 = vrot.slane %v137, %v267
    %v273 = vmul.f32 %v250, %v256
    %v274 = vmul.f32 %v250, %v260
    %v275 = vmul.f32 %v250, %v264
    %v276 = vmul.f32 %v250, %v268
    %v277 = vadd.f32 %v273, %v207
    %v278 = vadd.f32 %v274, %v211
    %v279 = vadd.f32 %v275, %v215
    %v280 = vadd.f32 %v276, %v219
    %v281 = vxor.u32 %v277, 2147483648
    %v282 = vmul.f32 %v281, 1.442695
    %v283 = vpow.pop %v282
    %v284 = vadd.f32 %v283, 1.0
    %v285 = vrcp.pop %v284
    %v286 = vmul.f32 1.0, %v285
    %v287 = vxor.u32 %v278, 2147483648
    %v288 = vmul.f32 %v287, 1.442695
    %v289 = vpow.pop %v288
    %v290 = vadd.f32 %v289, 1.0
    %v291 = vrcp.pop %v290
    %v292 = vmul.f32 1.0, %v291
    %v293 = vtanh.pop %v279
    %v294 = vxor.u32 %v280, 2147483648
    %v295 = vmul.f32 %v294, 1.442695
    %v296 = vpow.pop %v295
    %v297 = vadd.f32 %v296, 1.0
    %v298 = vrcp.pop %v297
    %v299 = vmul.f32 1.0, %v298
    %v300 = vmul.f32 %v292, 0.0
    %v301 = vmul.f32 %v286, %v293
    %v302 = vadd.f32 %v300, %v301
    %v303 = vtanh.pop %v302
    %v304 = vmul.f32 %v299, %v303
    %s305 = smul.u32 8, 32
    %s306 = smul.u32 %s305, 4
    %s307 = sshll.u32 %s306, 4
    %308 = dma.done [#allocation5], %s307
    %v309 = vld [vmem:[#allocation2] sm:$0xff]
    %v310 = vld [vmem:[#allocation2 + $0x8] sm:$0xff]
    %v311 = vld [vmem:[#allocation2 + $0x10] sm:$0xff]
    %v312 = vld [vmem:[#allocation2 + $0x18] sm:$0xff]
    %v313 = vld [vmem:[#allocation2 + $0x20] sm:$0xff]
    %v314 = vld [vmem:[#allocation2 + $0x28] sm:$0xff]
    %v315 = vld [vmem:[#allocation2 + $0x30] sm:$0xff]
    %v316 = vld [vmem:[#allocation2 + $0x38] sm:$0xff]
    %v317 = vld [vmem:[#allocation2 + $0x40] sm:$0xff]
    %v318 = vld [vmem:[#allocation2 + $0x48] sm:$0xff]
    %v319 = vld [vmem:[#allocation2 + $0x50] sm:$0xff]
    %v320 = vld [vmem:[#allocation2 + $0x58] sm:$0xff]
    %v321 = vld [vmem:[#allocation2 + $0x60] sm:$0xff]
    %v322 = vld [vmem:[#allocation2 + $0x68] sm:$0xff]
    %v323 = vld [vmem:[#allocation2 + $0x70] sm:$0xff]
    %v324 = vld [vmem:[#allocation2 + $0x78] sm:$0xff]
    %v325 = vld [vmem:[#allocation2 + $0x80] sm:$0xff]
    %v326 = vld [vmem:[#allocation2 + $0x88] sm:$0xff]
    %v327 = vld [vmem:[#allocation2 + $0x90] sm:$0xff]
    %v328 = vld [vmem:[#allocation2 + $0x98] sm:$0xff]
    %v329 = vld [vmem:[#allocation2 + $0xa0] sm:$0xff]
    %v330 = vld [vmem:[#allocation2 + $0xa8] sm:$0xff]
    %v331 = vld [vmem:[#allocation2 + $0xb0] sm:$0xff]
    %v332 = vld [vmem:[#allocation2 + $0xb8] sm:$0xff]
    %v333 = vld [vmem:[#allocation2 + $0xc0] sm:$0xff]
    %v334 = vld [vmem:[#allocation2 + $0xc8] sm:$0xff]
    %v335 = vld [vmem:[#allocation2 + $0xd0] sm:$0xff]
    %v336 = vld [vmem:[#allocation2 + $0xd8] sm:$0xff]
    %v337 = vld [vmem:[#allocation2 + $0xe0] sm:$0xff]
    %v338 = vld [vmem:[#allocation2 + $0xe8] sm:$0xff]
    %v339 = vld [vmem:[#allocation2 + $0xf0] sm:$0xff]
    %v340 = vld [vmem:[#allocation2 + $0xf8] sm:$0xff]
    %v341 = vld [vmem:[#allocation2 + $0x100] sm:$0xff]
    %v342 = vld [vmem:[#allocation2 + $0x108] sm:$0xff]
    %v343 = vld [vmem:[#allocation2 + $0x110] sm:$0xff]
    %v344 = vld [vmem:[#allocation2 + $0x118] sm:$0xff]
    %v345 = vld [vmem:[#allocation2 + $0x120] sm:$0xff]
    %v346 = vld [vmem:[#allocation2 + $0x128] sm:$0xff]
    %v347 = vld [vmem:[#allocation2 + $0x130] sm:$0xff]
    %v348 = vld [vmem:[#allocation2 + $0x138] sm:$0xff]
    %v349 = vld [vmem:[#allocation2 + $0x140] sm:$0xff]
    %v350 = vld [vmem:[#allocation2 + $0x148] sm:$0xff]
    %v351 = vld [vmem:[#allocation2 + $0x150] sm:$0xff]
    %v352 = vld [vmem:[#allocation2 + $0x158] sm:$0xff]
    %v353 = vld [vmem:[#allocation2 + $0x160] sm:$0xff]
    %v354 = vld [vmem:[#allocation2 + $0x168] sm:$0xff]
    %v355 = vld [vmem:[#allocation2 + $0x170] sm:$0xff]
    %v356 = vld [vmem:[#allocation2 + $0x178] sm:$0xff]
    %v357 = vld [vmem:[#allocation2 + $0x180] sm:$0xff]
    %v358 = vld [vmem:[#allocation2 + $0x188] sm:$0xff]
    %v359 = vld [vmem:[#allocation2 + $0x190] sm:$0xff]
    %v360 = vld [vmem:[#allocation2 + $0x198] sm:$0xff]
    %v361 = vld [vmem:[#allocation2 + $0x1a0] sm:$0xff]
    %v362 = vld [vmem:[#allocation2 + $0x1a8] sm:$0xff]
    %v363 = vld [vmem:[#allocation2 + $0x1b0] sm:$0xff]
    %v364 = vld [vmem:[#allocation2 + $0x1b8] sm:$0xff]
    %v365 = vld [vmem:[#allocation2 + $0x1c0] sm:$0xff]
    %v366 = vld [vmem:[#allocation2 + $0x1c8] sm:$0xff]
    %v367 = vld [vmem:[#allocation2 + $0x1d0] sm:$0xff]
    %v368 = vld [vmem:[#allocation2 + $0x1d8] sm:$0xff]
    %v369 = vld [vmem:[#allocation2 + $0x1e0] sm:$0xff]
    %v370 = vld [vmem:[#allocation2 + $0x1e8] sm:$0xff]
    %v371 = vld [vmem:[#allocation2 + $0x1f0] sm:$0xff]
    %v372 = vld [vmem:[#allocation2 + $0x1f8] sm:$0xff]
    %v373 = vld [vmem:[#allocation2 + $0x200] sm:$0xff]
    %v374 = vld [vmem:[#allocation2 + $0x208] sm:$0xff]
    %v375 = vld [vmem:[#allocation2 + $0x210] sm:$0xff]
    %v376 = vld [vmem:[#allocation2 + $0x218] sm:$0xff]
    %v377 = vld [vmem:[#allocation2 + $0x220] sm:$0xff]
    %v378 = vld [vmem:[#allocation2 + $0x228] sm:$0xff]
    %v379 = vld [vmem:[#allocation2 + $0x230] sm:$0xff]
    %v380 = vld [vmem:[#allocation2 + $0x238] sm:$0xff]
    %v381 = vld [vmem:[#allocation2 + $0x240] sm:$0xff]
    %v382 = vld [vmem:[#allocation2 + $0x248] sm:$0xff]
    %v383 = vld [vmem:[#allocation2 + $0x250] sm:$0xff]
    %v384 = vld [vmem:[#allocation2 + $0x258] sm:$0xff]
    %v385 = vld [vmem:[#allocation2 + $0x260] sm:$0xff]
    %v386 = vld [vmem:[#allocation2 + $0x268] sm:$0xff]
    %v387 = vld [vmem:[#allocation2 + $0x270] sm:$0xff]
    %v388 = vld [vmem:[#allocation2 + $0x278] sm:$0xff]
    %v389 = vld [vmem:[#allocation2 + $0x280] sm:$0xff]
    %v390 = vld [vmem:[#allocation2 + $0x288] sm:$0xff]
    %v391 = vld [vmem:[#allocation2 + $0x290] sm:$0xff]
    %v392 = vld [vmem:[#allocation2 + $0x298] sm:$0xff]
    %v393 = vld [vmem:[#allocation2 + $0x2a0] sm:$0xff]
    %v394 = vld [vmem:[#allocation2 + $0x2a8] sm:$0xff]
    %v395 = vld [vmem:[#allocation2 + $0x2b0] sm:$0xff]
    %v396 = vld [vmem:[#allocation2 + $0x2b8] sm:$0xff]
    %v397 = vld [vmem:[#allocation2 + $0x2c0] sm:$0xff]
    %v398 = vld [vmem:[#allocation2 + $0x2c8] sm:$0xff]
    %v399 = vld [vmem:[#allocation2 + $0x2d0] sm:$0xff]
    %v400 = vld [vmem:[#allocation2 + $0x2d8] sm:$0xff]
    %v401 = vld [vmem:[#allocation2 + $0x2e0] sm:$0xff]
    %v402 = vld [vmem:[#allocation2 + $0x2e8] sm:$0xff]
    %v403 = vld [vmem:[#allocation2 + $0x2f0] sm:$0xff]
    %v404 = vld [vmem:[#allocation2 + $0x2f8] sm:$0xff]
    %v405 = vld [vmem:[#allocation2 + $0x300] sm:$0xff]
    %v406 = vld [vmem:[#allocation2 + $0x308] sm:$0xff]
    %v407 = vld [vmem:[#allocation2 + $0x310] sm:$0xff]
    %v408 = vld [vmem:[#allocation2 + $0x318] sm:$0xff]
    %v409 = vld [vmem:[#allocation2 + $0x320] sm:$0xff]
    %v410 = vld [vmem:[#allocation2 + $0x328] sm:$0xff]
    %v411 = vld [vmem:[#allocation2 + $0x330] sm:$0xff]
    %v412 = vld [vmem:[#allocation2 + $0x338] sm:$0xff]
    %v413 = vld [vmem:[#allocation2 + $0x340] sm:$0xff]
    %v414 = vld [vmem:[#allocation2 + $0x348] sm:$0xff]
    %v415 = vld [vmem:[#allocation2 + $0x350] sm:$0xff]
    %v416 = vld [vmem:[#allocation2 + $0x358] sm:$0xff]
    %v417 = vld [vmem:[#allocation2 + $0x360] sm:$0xff]
    %v418 = vld [vmem:[#allocation2 + $0x368] sm:$0xff]
    %v419 = vld [vmem:[#allocation2 + $0x370] sm:$0xff]
    %v420 = vld [vmem:[#allocation2 + $0x378] sm:$0xff]
    %v421 = vld [vmem:[#allocation2 + $0x380] sm:$0xff]
    %v422 = vld [vmem:[#allocation2 + $0x388] sm:$0xff]
    %v423 = vld [vmem:[#allocation2 + $0x390] sm:$0xff]
    %v424 = vld [vmem:[#allocation2 + $0x398] sm:$0xff]
    %v425 = vld [vmem:[#allocation2 + $0x3a0] sm:$0xff]
    %v426 = vld [vmem:[#allocation2 + $0x3a8] sm:$0xff]
    %v427 = vld [vmem:[#allocation2 + $0x3b0] sm:$0xff]
    %v428 = vld [vmem:[#allocation2 + $0x3b8] sm:$0xff]
    %v429 = vld [vmem:[#allocation2 + $0x3c0] sm:$0xff]
    %v430 = vld [vmem:[#allocation2 + $0x3c8] sm:$0xff]
    %v431 = vld [vmem:[#allocation2 + $0x3d0] sm:$0xff]
    %v432 = vld [vmem:[#allocation2 + $0x3d8] sm:$0xff]
    %v433 = vld [vmem:[#allocation2 + $0x3e0] sm:$0xff]
    %v434 = vld [vmem:[#allocation2 + $0x3e8] sm:$0xff]
    %v435 = vld [vmem:[#allocation2 + $0x3f0] sm:$0xff]
    %v436 = vld [vmem:[#allocation2 + $0x3f8] sm:$0xff]
    %437 = vmatprep.subr.mxu0 %v310
    %438 = vmatpush1.msra.mxu0 %v309
    %439 = vmatprep.subr.mxu0 %v314
    %440 = vmatpush1.msra.mxu0 %v313
    %441 = vmatprep.subr.mxu0 %v318
    %442 = vmatpush1.msra.mxu0 %v317
    %443 = vmatprep.subr.mxu0 %v322
    %444 = vmatpush1.msra.mxu0 %v321
    %445 = vmatprep.subr.mxu0 %v326
    %446 = vmatpush1.msra.mxu0 %v325
    %447 = vmatprep.subr.mxu0 %v330
    %448 = vmatpush1.msra.mxu0 %v329
    %449 = vmatprep.subr.mxu0 %v334
    %450 = vmatpush1.msra.mxu0 %v333
    %451 = vmatprep.subr.mxu0 %v338
    %452 = vmatpush1.msra.mxu0 %v337
    %453 = vmatprep.subr.mxu0 %v342
    %454 = vmatpush1.msra.mxu0 %v341
    %455 = vmatprep.subr.mxu0 %v346
    %456 = vmatpush1.msra.mxu0 %v345
    %457 = vmatprep.subr.mxu0 %v350
    %458 = vmatpush1.msra.mxu0 %v349
    %459 = vmatprep.subr.mxu0 %v354
    %460 = vmatpush1.msra.mxu0 %v353
    %461 = vmatprep.subr.mxu0 %v358
    %462 = vmatpush1.msra.mxu0 %v357
    %463 = vmatprep.subr.mxu0 %v362
    %464 = vmatpush1.msra.mxu0 %v361
    %465 = vmatprep.subr.mxu0 %v366
    %466 = vmatpush1.msra.mxu0 %v365
    %467 = vmatprep.subr.mxu0 %v370
    %468 = vmatpush1.msra.mxu0 %v369
    %469 = vmatprep.subr.mxu0 %v374
    %470 = vmatpush1.msra.mxu0 %v373
    %471 = vmatprep.subr.mxu0 %v378
    %472 = vmatpush1.msra.mxu0 %v377
    %473 = vmatprep.subr.mxu0 %v382
    %474 = vmatpush1.msra.mxu0 %v381
    %475 = vmatprep.subr.mxu0 %v386
    %476 = vmatpush1.msra.mxu0 %v385
    %477 = vmatprep.subr.mxu0 %v390
    %478 = vmatpush1.msra.mxu0 %v389
    %479 = vmatprep.subr.mxu0 %v394
    %480 = vmatpush1.msra.mxu0 %v393
    %481 = vmatprep.subr.mxu0 %v398
    %482 = vmatpush1.msra.mxu0 %v397
    %483 = vmatprep.subr.mxu0 %v402
    %484 = vmatpush1.msra.mxu0 %v401
    %485 = vmatprep.subr.mxu0 %v406
    %486 = vmatpush1.msra.mxu0 %v405
    %487 = vmatprep.subr.mxu0 %v410
    %488 = vmatpush1.msra.mxu0 %v409
    %489 = vmatprep.subr.mxu0 %v414
    %490 = vmatpush1.msra.mxu0 %v413
    %491 = vmatprep.subr.mxu0 %v418
    %492 = vmatpush1.msra.mxu0 %v417
    %493 = vmatprep.subr.mxu0 %v422
    %494 = vmatpush1.msra.mxu0 %v421
    %495 = vmatprep.subr.mxu0 %v426
    %496 = vmatpush1.msra.mxu0 %v425
    %497 = vmatprep.subr.mxu0 %v430
    %498 = vmatpush1.msra.mxu0 %v429
    %499 = vmatprep.subr.mxu0 %v434
    %500 = vmatpush1.msra.mxu0 %v433
    %501 = vmatprep.mubr.f32.mxu0 %v304
    %502 = vmatmul.mubr.f32.gmra.mrb[0].mxu0 0.0
    %v503 = vpop.f32.mrb[0].mxu0
    %v504 = vadd.f32 %v229, %v503
    %v505 = vpop.f32.mrb[0].mxu0
    %v506 = vadd.f32 %v233, %v505
    %507 = vdwg.mxu0
    %508 = vmatprep.subr.mxu0 %v312
    %509 = vmatpush1.msra.mxu0 %v311
    %510 = vmatprep.subr.mxu0 %v316
    %511 = vmatpush1.msra.mxu0 %v315
    %512 = vmatprep.subr.mxu0 %v320
    %513 = vmatpush1.msra.mxu0 %v319
    %514 = vmatprep.subr.mxu0 %v324
    %515 = vmatpush1.msra.mxu0 %v323
    %516 = vmatprep.subr.mxu0 %v328
    %517 = vmatpush1.msra.mxu0 %v327
    %518 = vmatprep.subr.mxu0 %v332
    %519 = vmatpush1.msra.mxu0 %v331
    %520 = vmatprep.subr.mxu0 %v336
    %521 = vmatpush1.msra.mxu0 %v335
    %522 = vmatprep.subr.mxu0 %v340
    %523 = vmatpush1.msra.mxu0 %v339
    %524 = vmatprep.subr.mxu0 %v344
    %525 = vmatpush1.msra.mxu0 %v343
    %526 = vmatprep.subr.mxu0 %v348
    %527 = vmatpush1.msra.mxu0 %v347
    %528 = vmatprep.subr.mxu0 %v352
    %529 = vmatpush1.msra.mxu0 %v351
    %530 = vmatprep.subr.mxu0 %v356
    %531 = vmatpush1.msra.mxu0 %v355
    %532 = vmatprep.subr.mxu0 %v360
    %533 = vmatpush1.msra.mxu0 %v359
    %534 = vmatprep.subr.mxu0 %v364
    %535 = vmatpush1.msra.mxu0 %v363
    %536 = vmatprep.subr.mxu0 %v368
    %537 = vmatpush1.msra.mxu0 %v367
    %538 = vmatprep.subr.mxu0 %v372
    %539 = vmatpush1.msra.mxu0 %v371
    %540 = vmatprep.subr.mxu0 %v376
    %541 = vmatpush1.msra.mxu0 %v375
    %542 = vmatprep.subr.mxu0 %v380
    %543 = vmatpush1.msra.mxu0 %v379
    %544 = vmatprep.subr.mxu0 %v384
    %545 = vmatpush1.msra.mxu0 %v383
    %546 = vmatprep.subr.mxu0 %v388
    %547 = vmatpush1.msra.mxu0 %v387
    %548 = vmatprep.subr.mxu0 %v392
    %549 = vmatpush1.msra.mxu0 %v391
    %550 = vmatprep.subr.mxu0 %v396
    %551 = vmatpush1.msra.mxu0 %v395
    %552 = vmatprep.subr.mxu0 %v400
    %553 = vmatpush1.msra.mxu0 %v399
    %554 = vmatprep.subr.mxu0 %v404
    %555 = vmatpush1.msra.mxu0 %v403
    %556 = vmatprep.subr.mxu0 %v408
    %557 = vmatpush1.msra.mxu0 %v407
    %558 = vmatprep.subr.mxu0 %v412
    %559 = vmatpush1.msra.mxu0 %v411
    %560 = vmatprep.subr.mxu0 %v416
    %561 = vmatpush1.msra.mxu0 %v415
    %562 = vmatprep.subr.mxu0 %v420
    %563 = vmatpush1.msra.mxu0 %v419
    %564 = vmatprep.subr.mxu0 %v424
    %565 = vmatpush1.msra.mxu0 %v423
    %566 = vmatprep.subr.mxu0 %v428
    %567 = vmatpush1.msra.mxu0 %v427
    %568 = vmatprep.subr.mxu0 %v432
    %569 = vmatpush1.msra.mxu0 %v431
    %570 = vmatprep.subr.mxu0 %v436
    %571 = vmatpush1.msra.mxu0 %v435
    %572 = vmatprep.mubr.f32.mxu0 %v304
    %573 = vmatmul.mubr.f32.gmra.mrb[0].mxu0 0.0
    %v574 = vpop.f32.mrb[0].mxu0
    %v575 = vadd.f32 %v237, %v574
    %v576 = vpop.f32.mrb[0].mxu0
    %v577 = vadd.f32 %v241, %v576
    %578 = vdwg.mxu0
    %v579 = vxor.u32 %v504, 2147483648
    %v580 = vmul.f32 %v579, 1.442695
    %v581 = vpow.pop %v580
    %v582 = vadd.f32 %v581, 1.0
    %v583 = vrcp.pop %v582
    %v584 = vmul.f32 1.0, %v583
    %v585 = vxor.u32 %v506, 2147483648
    %v586 = vmul.f32 %v585, 1.442695
    %v587 = vpow.pop %v586
    %v588 = vadd.f32 %v587, 1.0
    %v589 = vrcp.pop %v588
    %v590 = vmul.f32 1.0, %v589
    %v591 = vtanh.pop %v575
    %v592 = vxor.u32 %v577, 2147483648
    %v593 = vmul.f32 %v592, 1.442695
    %v594 = vpow.pop %v593
    %v595 = vadd.f32 %v594, 1.0
    %v596 = vrcp.pop %v595
    %v597 = vmul.f32 1.0, %v596
    %v598 = vmul.f32 %v590, 0.0
    %v599 = vmul.f32 %v584, %v591
    %v600 = vadd.f32 %v598, %v599
    %v601 = vtanh.pop %v600
    %v602 = vmul.f32 %v597, %v601
    %s603 = scalar_lea.vmem %s0, 8
    %v604 = vld [vmem:[%s603] sm:$0xff]
    %606 = vset.pattern.permute.xlu0 0
    %607 = vperm.xlu0 %606, %v604
    %v608 = vpop.permute.xlu0 %607
    %v610 = vmul.f32 %v608, %v256
    %v611 = vmul.f32 %v608, %v260
    %v612 = vmul.f32 %v608, %v264
    %v613 = vmul.f32 %v608, %v268
    %v614 = vadd.f32 %v610, %v207
    %v615 = vadd.f32 %v611, %v211
    %v616 = vadd.f32 %v612, %v215
    %v617 = vadd.f32 %v613, %v219
    %618 = vmatprep.subr.mxu0 %v139
    %619 = vmatpush1.msra.mxu0 %v138
    %620 = vmatprep.subr.mxu0 %v143
    %621 = vmatpush1.msra.mxu0 %v142
    %622 = vmatprep.subr.mxu0 %v147
    %623 = vmatpush1.msra.mxu0 %v146
    %624 = vmatprep.subr.mxu0 %v151
    %625 = vmatpush1.msra.mxu0 %v150
    %626 = vmatprep.subr.mxu0 %v155
    %627 = vmatpush1.msra.mxu0 %v154
    %628 = vmatprep.subr.mxu0 %v159
    %629 = vmatpush1.msra.mxu0 %v158
    %630 = vmatprep.subr.mxu0 %v163
    %631 = vmatpush1.msra.mxu0 %v162
    %632 = vmatprep.subr.mxu0 %v167
    %633 = vmatpush1.msra.mxu0 %v166
    %634 = vmatprep.subr.mxu0 %v171
    %635 = vmatpush1.msra.mxu0 %v170
    %636 = vmatprep.subr.mxu0 %v175
    %637 = vmatpush1.msra.mxu0 %v174
    %638 = vmatprep.subr.mxu0 %v179
    %639 = vmatpush1.msra.mxu0 %v178
    %640 = vmatprep.subr.mxu0 %v183
    %641 = vmatpush1.msra.mxu0 %v182
    %642 = vmatprep.subr.mxu0 %v187
    %643 = vmatpush1.msra.mxu0 %v186
    %644 = vmatprep.subr.mxu0 %v191
    %645 = vmatpush1.msra.mxu0 %v190
    %646 = vmatprep.subr.mxu0 %v195
    %647 = vmatpush1.msra.mxu0 %v194
    %648 = vmatprep.subr.mxu0 %v199
    %649 = vmatpush1.msra.mxu0 %v198
    %650 = vmatprep.subr.mxu0 0.0
    %651 = vmatpush1.msra.mxu0 0.0
    %652 = vmatprep.subr.mxu0 0.0
    %653 = vmatpush1.msra.mxu0 0.0
    %654 = vmatprep.subr.mxu0 0.0
    %655 = vmatpush1.msra.mxu0 0.0
    %656 = vmatprep.subr.mxu0 0.0
    %657 = vmatpush1.msra.mxu0 0.0
    %658 = vmatprep.subr.mxu0 0.0
    %659 = vmatpush1.msra.mxu0 0.0
    %660 = vmatprep.subr.mxu0 0.0
    %661 = vmatpush1.msra.mxu0 0.0
    %662 = vmatprep.subr.mxu0 0.0
    %663 = vmatpush1.msra.mxu0 0.0
    %664 = vmatprep.subr.mxu0 0.0
    %665 = vmatpush1.msra.mxu0 0.0
    %666 = vmatprep.subr.mxu0 0.0
    %667 = vmatpush1.msra.mxu0 0.0
    %668 = vmatprep.subr.mxu0 0.0
    %669 = vmatpush1.msra.mxu0 0.0
    %670 = vmatprep.subr.mxu0 0.0
    %671 = vmatpush1.msra.mxu0 0.0
    %672 = vmatprep.subr.mxu0 0.0
    %673 = vmatpush1.msra.mxu0 0.0
    %674 = vmatprep.subr.mxu0 0.0
    %675 = vmatpush1.msra.mxu0 0.0
    %676 = vmatprep.subr.mxu0 0.0
    %677 = vmatpush1.msra.mxu0 0.0
    %678 = vmatprep.subr.mxu0 0.0
    %679 = vmatpush1.msra.mxu0 0.0
    %680 = vmatprep.subr.mxu0 0.0
    %681 = vmatpush1.msra.mxu0 0.0
    %682 = vmatprep.mubr.f32.mxu0 0.0
    %683 = vmatmul.mubr.f32.gmra.mrb[0].mxu0 %v304
    %v684 = vpop.f32.mrb[0].mxu0
    %v685 = vadd.f32 0.0, %v684
    %v686 = vpop.f32.mrb[0].mxu0
    %v687 = vadd.f32 0.0, %v686
    %688 = vdwg.mxu0
    %689 = vmatprep.subr.mxu0 %v141
    %690 = vmatpush1.msra.mxu0 %v140
    %691 = vmatprep.subr.mxu0 %v145
    %692 = vmatpush1.msra.mxu0 %v144
    %693 = vmatprep.subr.mxu0 %v149
    %694 = vmatpush1.msra.mxu0 %v148
    %695 = vmatprep.subr.mxu0 %v153
    %696 = vmatpush1.msra.mxu0 %v152
    %697 = vmatprep.subr.mxu0 %v157
    %698 = vmatpush1.msra.mxu0 %v156
    %699 = vmatprep.subr.mxu0 %v161
    %700 = vmatpush1.msra.mxu0 %v160
    %701 = vmatprep.subr.mxu0 %v165
    %702 = vmatpush1.msra.mxu0 %v164
    %703 = vmatprep.subr.mxu0 %v169
    %704 = vmatpush1.msra.mxu0 %v168
    %705 = vmatprep.subr.mxu0 %v173
    %706 = vmatpush1.msra.mxu0 %v172
    %707 = vmatprep.subr.mxu0 %v177
    %708 = vmatpush1.msra.mxu0 %v176
    %709 = vmatprep.subr.mxu0 %v181
    %710 = vmatpush1.msra.mxu0 %v180
    %711 = vmatprep.subr.mxu0 %v185
    %712 = vmatpush1.msra.mxu0 %v184
    %713 = vmatprep.subr.mxu0 %v189
    %714 = vmatpush1.msra.mxu0 %v188
    %715 = vmatprep.subr.mxu0 %v193
    %716 = vmatpush1.msra.mxu0 %v192
    %717 = vmatprep.subr.mxu0 %v197
    %718 = vmatpush1.msra.mxu0 %v196
    %719 = vmatprep.subr.mxu0 %v201
    %720 = vmatpush1.msra.mxu0 %v200
    %721 = vmatprep.subr.mxu0 0.0
    %722 = vmatpush1.msra.mxu0 0.0
    %723 = vmatprep.subr.mxu0 0.0
    %724 = vmatpush1.msra.mxu0 0.0
    %725 = vmatprep.subr.mxu0 0.0
    %726 = vmatpush1.msra.mxu0 0.0
    %727 = vmatprep.subr.mxu0 0.0
    %728 = vmatpush1.msra.mxu0 0.0
    %729 = vmatprep.subr.mxu0 0.0
    %730 = vmatpush1.msra.mxu0 0.0
    %731 = vmatprep.subr.mxu0 0.0
    %732 = vmatpush1.msra.mxu0 0.0
    %733 = vmatprep.subr.mxu0 0.0
    %734 = vmatpush1.msra.mxu0 0.0
    %735 = vmatprep.subr.mxu0 0.0
    %736 = vmatpush1.msra.mxu0 0.0
    %737 = vmatprep.subr.mxu0 0.0
    %738 = vmatpush1.msra.mxu0 0.0
    %739 = vmatprep.subr.mxu0 0.0
    %740 = vmatpush1.msra.mxu0 0.0
    %741 = vmatprep.subr.mxu0 0.0
    %742 = vmatpush1.msra.mxu0 0.0
    %743 = vmatprep.subr.mxu0 0.0
    %744 = vmatpush1.msra.mxu0 0.0
    %745 = vmatprep.subr.mxu0 0.0
    %746 = vmatpush1.msra.mxu0 0.0
    %747 = vmatprep.subr.mxu0 0.0
    %748 = vmatpush1.msra.mxu0 0.0
    %749 = vmatprep.subr.mxu0 0.0
    %750 = vmatpush1.msra.mxu0 0.0
    %751 = vmatprep.subr.mxu0 0.0
    %752 = vmatpush1.msra.mxu0 0.0
    %753 = vmatprep.mubr.f32.mxu0 0.0
    %754 = vmatmul.mubr.f32.gmra.mrb[0].mxu0 %v304
    %v755 = vpop.f32.mrb[0].mxu0
    %v756 = vadd.f32 0.0, %v755
    %v757 = vpop.f32.mrb[0].mxu0
    %v758 = vadd.f32 0.0, %v757
    %759 = vdwg.mxu0
    %v760 = vadd.f32 %v614, %v685
    %v761 = vadd.f32 %v615, %v687
    %v762 = vadd.f32 %v616, %v756
    %v763 = vadd.f32 %v617, %v758
    %v764 = vxor.u32 %v760, 2147483648
    %v765 = vmul.f32 %v764, 1.442695
    %v766 = vpow.pop %v765
    %v767 = vadd.f32 %v766, 1.0
    %v768 = vrcp.pop %v767
    %v769 = vmul.f32 1.0, %v768
    %v770 = vxor.u32 %v761, 2147483648
    %v771 = vmul.f32 %v770, 1.442695
    %v772 = vpow.pop %v771
    %v773 = vadd.f32 %v772, 1.0
    %v774 = vrcp.pop %v773
    %v775 = vmul.f32 1.0, %v774
    %v776 = vtanh.pop %v762
    %v777 = vxor.u32 %v763, 2147483648
    %v778 = vmul.f32 %v777, 1.442695
    %v779 = vpow.pop %v778
    %v780 = vadd.f32 %v779, 1.0
    %v781 = vrcp.pop %v780
    %v782 = vmul.f32 1.0, %v781
    %v783 = vmul.f32 %v775, %v302
    %v784 = vmul.f32 %v769, %v776
    %v785 = vadd.f32 %v783, %v784
    %v786 = vtanh.pop %v785
    %v787 = vmul.f32 %v782, %v786
    %788 = vmatprep.subr.mxu0 %v310
    %789 = vmatpush1.msra.mxu0 %v309
    %790 = vmatprep.subr.mxu0 %v314
    %791 = vmatpush1.msra.mxu0 %v313
    %792 = vmatprep.subr.mxu0 %v318
    %793 = vmatpush1.msra.mxu0 %v317
    %794 = vmatprep.subr.mxu0 %v322
    %795 = vmatpush1.msra.mxu0 %v321
    %796 = vmatprep.subr.mxu0 %v326
    %797 = vmatpush1.msra.mxu0 %v325
    %798 = vmatprep.subr.mxu0 %v330
    %799 = vmatpush1.msra.mxu0 %v329
    %800 = vmatprep.subr.mxu0 %v334
    %801 = vmatpush1.msra.mxu0 %v333
    %802 = vmatprep.subr.mxu0 %v338
    %803 = vmatpush1.msra.mxu0 %v337
    %804 = vmatprep.subr.mxu0 %v342
    %805 = vmatpush1.msra.mxu0 %v341
    %806 = vmatprep.subr.mxu0 %v346
    %807 = vmatpush1.msra.mxu0 %v345
    %808 = vmatprep.subr.mxu0 %v350
    %809 = vmatpush1.msra.mxu0 %v349
    %810 = vmatprep.subr.mxu0 %v354
    %811 = vmatpush1.msra.mxu0 %v353
    %812 = vmatprep.subr.mxu0 %v358
    %813 = vmatpush1.msra.mxu0 %v357
    %814 = vmatprep.subr.mxu0 %v362
    %815 = vmatpush1.msra.mxu0 %v361
    %816 = vmatprep.subr.mxu0 %v366
    %817 = vmatpush1.msra.mxu0 %v365
    %818 = vmatprep.subr.mxu0 %v370
    %819 = vmatpush1.msra.mxu0 %v369
    %820 = vmatprep.subr.mxu0 %v374
    %821 = vmatpush1.msra.mxu0 %v373
    %822 = vmatprep.subr.mxu0 %v378
    %823 = vmatpush1.msra.mxu0 %v377
    %824 = vmatprep.subr.mxu0 %v382
    %825 = vmatpush1.msra.mxu0 %v381
    %826 = vmatprep.subr.mxu0 %v386
    %827 = vmatpush1.msra.mxu0 %v385
    %828 = vmatprep.subr.mxu0 %v390
    %829 = vmatpush1.msra.mxu0 %v389
    %830 = vmatprep.subr.mxu0 %v394
    %831 = vmatpush1.msra.mxu0 %v393
    %832 = vmatprep.subr.mxu0 %v398
    %833 = vmatpush1.msra.mxu0 %v397
    %834 = vmatprep.subr.mxu0 %v402
    %835 = vmatpush1.msra.mxu0 %v401
    %836 = vmatprep.subr.mxu0 %v406
    %837 = vmatpush1.msra.mxu0 %v405
    %838 = vmatprep.subr.mxu0 %v410
    %839 = vmatpush1.msra.mxu0 %v409
    %840 = vmatprep.subr.mxu0 %v414
    %841 = vmatpush1.msra.mxu0 %v413
    %842 = vmatprep.subr.mxu0 %v418
    %843 = vmatpush1.msra.mxu0 %v417
    %844 = vmatprep.subr.mxu0 %v422
    %845 = vmatpush1.msra.mxu0 %v421
    %846 = vmatprep.subr.mxu0 %v426
    %847 = vmatpush1.msra.mxu0 %v425
    %848 = vmatprep.subr.mxu0 %v430
    %849 = vmatpush1.msra.mxu0 %v429
    %850 = vmatprep.subr.mxu0 %v434
    %851 = vmatpush1.msra.mxu0 %v433
    %852 = vmatprep.mubr.f32.mxu0 %v787
    %853 = vmatmul.mubr.f32.gmra.mrb[0].mxu0 %v602
    %v854 = vpop.f32.mrb[0].mxu0
    %v855 = vadd.f32 %v229, %v854
    %v856 = vpop.f32.mrb[0].mxu0
    %v857 = vadd.f32 %v233, %v856
    %858 = vdwg.mxu0
    %859 = vmatprep.subr.mxu0 %v312
    %860 = vmatpush1.msra.mxu0 %v311
    %861 = vmatprep.subr.mxu0 %v316
    %862 = vmatpush1.msra.mxu0 %v315
    %863 = vmatprep.subr.mxu0 %v320
    %864 = vmatpush1.msra.mxu0 %v319
    %865 = vmatprep.subr.mxu0 %v324
    %866 = vmatpush1.msra.mxu0 %v323
    %867 = vmatprep.subr.mxu0 %v328
    %868 = vmatpush1.msra.mxu0 %v327
    %869 = vmatprep.subr.mxu0 %v332
    %870 = vmatpush1.msra.mxu0 %v331
    %871 = vmatprep.subr.mxu0 %v336
    %872 = vmatpush1.msra.mxu0 %v335
    %873 = vmatprep.subr.mxu0 %v340
    %874 = vmatpush1.msra.mxu0 %v339
    %875 = vmatprep.subr.mxu0 %v344
    %876 = vmatpush1.msra.mxu0 %v343
    %877 = vmatprep.subr.mxu0 %v348
    %878 = vmatpush1.msra.mxu0 %v347
    %879 = vmatprep.subr.mxu0 %v352
    %880 = vmatpush1.msra.mxu0 %v351
    %881 = vmatprep.subr.mxu0 %v356
    %882 = vmatpush1.msra.mxu0 %v355
    %883 = vmatprep.subr.mxu0 %v360
    %884 = vmatpush1.msra.mxu0 %v359
    %885 = vmatprep.subr.mxu0 %v364
    %886 = vmatpush1.msra.mxu0 %v363
    %887 = vmatprep.subr.mxu0 %v368
    %888 = vmatpush1.msra.mxu0 %v367
    %889 = vmatprep.subr.mxu0 %v372
    %890 = vmatpush1.msra.mxu0 %v371
    %891 = vmatprep.subr.mxu0 %v376
    %892 = vmatpush1.msra.mxu0 %v375
    %893 = vmatprep.subr.mxu0 %v380
    %894 = vmatpush1.msra.mxu0 %v379
    %895 = vmatprep.subr.mxu0 %v384
    %896 = vmatpush1.msra.mxu0 %v383
    %897 = vmatprep.subr.mxu0 %v388
    %898 = vmatpush1.msra.mxu0 %v387
    %899 = vmatprep.subr.mxu0 %v392
    %900 = vmatpush1.msra.mxu0 %v391
    %901 = vmatprep.subr.mxu0 %v396
    %902 = vmatpush1.msra.mxu0 %v395
    %903 = vmatprep.subr.mxu0 %v400
    %904 = vmatpush1.msra.mxu0 %v399
    %905 = vmatprep.subr.mxu0 %v404
    %906 = vmatpush1.msra.mxu0 %v403
    %907 = vmatprep.subr.mxu0 %v408
    %908 = vmatpush1.msra.mxu0 %v407
    %909 = vmatprep.subr.mxu0 %v412
    %910 = vmatpush1.msra.mxu0 %v411
    %911 = vmatprep.subr.mxu0 %v416
    %912 = vmatpush1.msra.mxu0 %v415
    %913 = vmatprep.subr.mxu0 %v420
    %914 = vmatpush1.msra.mxu0 %v419
    %915 = vmatprep.subr.mxu0 %v424
    %916 = vmatpush1.msra.mxu0 %v423
    %917 = vmatprep.subr.mxu0 %v428
    %918 = vmatpush1.msra.mxu0 %v427
    %919 = vmatprep.subr.mxu0 %v432
    %920 = vmatpush1.msra.mxu0 %v431
    %921 = vmatprep.subr.mxu0 %v436
    %922 = vmatpush1.msra.mxu0 %v435
    %923 = vmatprep.mubr.f32.mxu0 %v787
    %924 = vmatmul.mubr.f32.gmra.mrb[0].mxu0 %v602
    %v925 = vpop.f32.mrb[0].mxu0
    %v926 = vadd.f32 %v237, %v925
    %v927 = vpop.f32.mrb[0].mxu0
    %v928 = vadd.f32 %v241, %v927
    %929 = vdwg.mxu0
    %v930 = vxor.u32 %v855, 2147483648
    %v931 = vmul.f32 %v930, 1.442695
    %v932 = vpow.pop %v931
    %v933 = vadd.f32 %v932, 1.0
    %v934 = vrcp.pop %v933
    %v935 = vmul.f32 1.0, %v934
    %v936 = vxor.u32 %v857, 2147483648
    %v937 = vmul.f32 %v936, 1.442695
    %v938 = vpow.pop %v937
    %v939 = vadd.f32 %v938, 1.0
    %v940 = vrcp.pop %v939
    %v941 = vmul.f32 1.0, %v940
    %v942 = vtanh.pop %v926
    %v943 = vxor.u32 %v928, 2147483648
    %v944 = vmul.f32 %v943, 1.442695
    %v945 = vpow.pop %v944
    %v946 = vadd.f32 %v945, 1.0
    %v947 = vrcp.pop %v946
    %v948 = vmul.f32 1.0, %v947
    %v949 = vmul.f32 %v941, %v600
    %v950 = vmul.f32 %v935, %v942
    %v951 = vadd.f32 %v949, %v950
    %v952 = vtanh.pop %v951
    %v953 = vmul.f32 %v948, %v952
    %s954 = scalar_lea.vmem %s0, 16
    %v955 = vld [vmem:[%s954] sm:$0xff]
    %957 = vset.pattern.permute.xlu0 0
    %958 = vperm.xlu0 %957, %v955
    %v959 = vpop.permute.xlu0 %958
    %v961 = vmul.f32 %v959, %v256
    %v962 = vmul.f32 %v959, %v260
    %v963 = vmul.f32 %v959, %v264
    %v964 = vmul.f32 %v959, %v268
    %v965 = vadd.f32 %v961, %v207
    %v966 = vadd.f32 %v962, %v211
    %v967 = vadd.f32 %v963, %v215
    %v968 = vadd.f32 %v964, %v219
    %969 = vmatprep.subr.mxu0 %v139
    %970 = vmatpush1.msra.mxu0 %v138
    %971 = vmatprep.subr.mxu0 %v143
    %972 = vmatpush1.msra.mxu0 %v142
    %973 = vmatprep.subr.mxu0 %v147
    %974 = vmatpush1.msra.mxu0 %v146
    %975 = vmatprep.subr.mxu0 %v151
    %976 = vmatpush1.msra.mxu0 %v150
    %977 = vmatprep.subr.mxu0 %v155
    %978 = vmatpush1.msra.mxu0 %v154
    %979 = vmatprep.subr.mxu0 %v159
    %980 = vmatpush1.msra.mxu0 %v158
    %981 = vmatprep.subr.mxu0 %v163
    %982 = vmatpush1.msra.mxu0 %v162
    %983 = vmatprep.subr.mxu0 %v167
    %984 = vmatpush1.msra.mxu0 %v166
    %985 = vmatprep.subr.mxu0 %v171
    %986 = vmatpush1.msra.mxu0 %v170
    %987 = vmatprep.subr.mxu0 %v175
    %988 = vmatpush1.msra.mxu0 %v174
    %989 = vmatprep.subr.mxu0 %v179
    %990 = vmatpush1.msra.mxu0 %v178
    %991 = vmatprep.subr.mxu0 %v183
    %992 = vmatpush1.msra.mxu0 %v182
    %993 = vmatprep.subr.mxu0 %v187
    %994 = vmatpush1.msra.mxu0 %v186
    %995 = vmatprep.subr.mxu0 %v191
    %996 = vmatpush1.msra.mxu0 %v190
    %997 = vmatprep.subr.mxu0 %v195
    %998 = vmatpush1.msra.mxu0 %v194
    %999 = vmatprep.subr.mxu0 %v199
    %1000 = vmatpush1.msra.mxu0 %v198
    %1001 = vmatprep.subr.mxu0 0.0
    %1002 = vmatpush1.msra.mxu0 0.0
    %1003 = vmatprep.subr.mxu0 0.0
    %1004 = vmatpush1.msra.mxu0 0.0
    %1005 = vmatprep.subr.mxu0 0.0
    %1006 = vmatpush1.msra.mxu0 0.0
    %1007 = vmatprep.subr.mxu0 0.0
    %1008 = vmatpush1.msra.mxu0 0.0
    %1009 = vmatprep.subr.mxu0 0.0
    %1010 = vmatpush1.msra.mxu0 0.0
    %1011 = vmatprep.subr.mxu0 0.0
    %1012 = vmatpush1.msra.mxu0 0.0
    %1013 = vmatprep.subr.mxu0 0.0
    %1014 = vmatpush1.msra.mxu0 0.0
    %1015 = vmatprep.subr.mxu0 0.0
    %1016 = vmatpush1.msra.mxu0 0.0
    %1017 = vmatprep.subr.mxu0 0.0
    %1018 = vmatpush1.msra.mxu0 0.0
    %1019 = vmatprep.subr.mxu0 0.0
    %1020 = vmatpush1.msra.mxu0 0.0
    %1021 = vmatprep.subr.mxu0 0.0
    %1022 = vmatpush1.msra.mxu0 0.0
    %1023 = vmatprep.subr.mxu0 0.0
    %1024 = vmatpush1.msra.mxu0 0.0
    %1025 = vmatprep.subr.mxu0 0.0
    %1026 = vmatpush1.msra.mxu0 0.0
    %1027 = vmatprep.subr.mxu0 0.0
    %1028 = vmatpush1.msra.mxu0 0.0
    %1029 = vmatprep.subr.mxu0 0.0
    %1030 = vmatpush1.msra.mxu0 0.0
    %1031 = vmatprep.subr.mxu0 0.0
    %1032 = vmatpush1.msra.mxu0 0.0
    %1033 = vmatprep.mubr.f32.mxu0 0.0
    %1034 = vmatmul.mubr.f32.gmra.mrb[0].mxu0 %v787
    %v1035 = vpop.f32.mrb[0].mxu0
    %v1036 = vadd.f32 0.0, %v1035
    %v1037 = vpop.f32.mrb[0].mxu0
    %v1038 = vadd.f32 0.0, %v1037
    %1039 = vdwg.mxu0
    %1040 = vmatprep.subr.mxu0 %v141
    %1041 = vmatpush1.msra.mxu0 %v140
    %1042 = vmatprep.subr.mxu0 %v145
    %1043 = vmatpush1.msra.mxu0 %v144
    %1044 = vmatprep.subr.mxu0 %v149
    %1045 = vmatpush1.msra.mxu0 %v148
    %1046 = vmatprep.subr.mxu0 %v153
    %1047 = vmatpush1.msra.mxu0 %v152
    %1048 = vmatprep.subr.mxu0 %v157
    %1049 = vmatpush1.msra.mxu0 %v156
    %1050 = vmatprep.subr.mxu0 %v161
    %1051 = vmatpush1.msra.mxu0 %v160
    %1052 = vmatprep.subr.mxu0 %v165
    %1053 = vmatpush1.msra.mxu0 %v164
    %1054 = vmatprep.subr.mxu0 %v169
    %1055 = vmatpush1.msra.mxu0 %v168
    %1056 = vmatprep.subr.mxu0 %v173
    %1057 = vmatpush1.msra.mxu0 %v172
    %1058 = vmatprep.subr.mxu0 %v177
    %1059 = vmatpush1.msra.mxu0 %v176
    %1060 = vmatprep.subr.mxu0 %v181
    %1061 = vmatpush1.msra.mxu0 %v180
    %1062 = vmatprep.subr.mxu0 %v185
    %1063 = vmatpush1.msra.mxu0 %v184
    %1064 = vmatprep.subr.mxu0 %v189
    %1065 = vmatpush1.msra.mxu0 %v188
    %1066 = vmatprep.subr.mxu0 %v193
    %1067 = vmatpush1.msra.mxu0 %v192
    %1068 = vmatprep.subr.mxu0 %v197
    %1069 = vmatpush1.msra.mxu0 %v196
    %1070 = vmatprep.subr.mxu0 %v201
    %1071 = vmatpush1.msra.mxu0 %v200
    %1072 = vmatprep.subr.mxu0 0.0
    %1073 = vmatpush1.msra.mxu0 0.0
    %1074 = vmatprep.subr.mxu0 0.0
    %1075 = vmatpush1.msra.mxu0 0.0
    %1076 = vmatprep.subr.mxu0 0.0
    %1077 = vmatpush1.msra.mxu0 0.0
    %1078 = vmatprep.subr.mxu0 0.0
    %1079 = vmatpush1.msra.mxu0 0.0
    %1080 = vmatprep.subr.mxu0 0.0
    %1081 = vmatpush1.msra.mxu0 0.0
    %1082 = vmatprep.subr.mxu0 0.0
    %1083 = vmatpush1.msra.mxu0 0.0
    %1084 = vmatprep.subr.mxu0 0.0
    %1085 = vmatpush1.msra.mxu0 0.0
    %1086 = vmatprep.subr.mxu0 0.0
    %1087 = vmatpush1.msra.mxu0 0.0
    %1088 = vmatprep.subr.mxu0 0.0
    %1089 = vmatpush1.msra.mxu0 0.0
    %1090 = vmatprep.subr.mxu0 0.0
    %1091 = vmatpush1.msra.mxu0 0.0
    %1092 = vmatprep.subr.mxu0 0.0
    %1093 = vmatpush1.msra.mxu0 0.0
    %1094 = vmatprep.subr.mxu0 0.0
    %1095 = vmatpush1.msra.mxu0 0.0
    %1096 = vmatprep.subr.mxu0 0.0
    %1097 = vmatpush1.msra.mxu0 0.0
    %1098 = vmatprep.subr.mxu0 0.0
    %1099 = vmatpush1.msra.mxu0 0.0
    %1100 = vmatprep.subr.mxu0 0.0
    %1101 = vmatpush1.msra.mxu0 0.0
    %1102 = vmatprep.subr.mxu0 0.0
    %1103 = vmatpush1.msra.mxu0 0.0
    %1104 = vmatprep.mubr.f32.mxu0 0.0
    %1105 = vmatmul.mubr.f32.gmra.mrb[0].mxu0 %v787
    %v1106 = vpop.f32.mrb[0].mxu0
    %v1107 = vadd.f32 0.0, %v1106
    %v1108 = vpop.f32.mrb[0].mxu0
    %v1109 = vadd.f32 0.0, %v1108
    %1110 = vdwg.mxu0
    %v1111 = vadd.f32 %v965, %v1036
    %v1112 = vadd.f32 %v966, %v1038
    %v1113 = vadd.f32 %v967, %v1107
    %v1114 = vadd.f32 %v968, %v1109
    %v1115 = vxor.u32 %v1111, 2147483648
    %v1116 = vmul.f32 %v1115, 1.442695
    %v1117 = vpow.pop %v1116
    %v1118 = vadd.f32 %v1117, 1.0
    %v1119 = vrcp.pop %v1118
    %v1120 = vmul.f32 1.0, %v1119
    %v1121 = vxor.u32 %v1112, 2147483648
    %v1122 = vmul.f32 %v1121, 1.442695
    %v1123 = vpow.pop %v1122
    %v1124 = vadd.f32 %v1123, 1.0
    %v1125 = vrcp.pop %v1124
    %v1126 = vmul.f32 1.0, %v1125
    %v1127 = vtanh.pop %v1113
    %v1128 = vxor.u32 %v1114, 2147483648
    %v1129 = vmul.f32 %v1128, 1.442695
    %v1130 = vpow.pop %v1129
    %v1131 = vadd.f32 %v1130, 1.0
    %v1132 = vrcp.pop %v1131
    %v1133 = vmul.f32 1.0, %v1132
    %v1134 = vmul.f32 %v1126, %v785
    %v1135 = vmul.f32 %v1120, %v1127
    %v1136 = vadd.f32 %v1134, %v1135
    %v1137 = vtanh.pop %v1136
    %v1138 = vmul.f32 %v1133, %v1137
    %1139 = vmatprep.subr.mxu0 %v310
    %1140 = vmatpush1.msra.mxu0 %v309
    %1141 = vmatprep.subr.mxu0 %v314
    %1142 = vmatpush1.msra.mxu0 %v313
    %1143 = vmatprep.subr.mxu0 %v318
    %1144 = vmatpush1.msra.mxu0 %v317
    %1145 = vmatprep.subr.mxu0 %v322
    %1146 = vmatpush1.msra.mxu0 %v321
    %1147 = vmatprep.subr.mxu0 %v326
    %1148 = vmatpush1.msra.mxu0 %v325
    %1149 = vmatprep.subr.mxu0 %v330
    %1150 = vmatpush1.msra.mxu0 %v329
    %1151 = vmatprep.subr.mxu0 %v334
    %1152 = vmatpush1.msra.mxu0 %v333
    %1153 = vmatprep.subr.mxu0 %v338
    %1154 = vmatpush1.msra.mxu0 %v337
    %1155 = vmatprep.subr.mxu0 %v342
    %1156 = vmatpush1.msra.mxu0 %v341
    %1157 = vmatprep.subr.mxu0 %v346
    %1158 = vmatpush1.msra.mxu0 %v345
    %1159 = vmatprep.subr.mxu0 %v350
    %1160 = vmatpush1.msra.mxu0 %v349
    %1161 = vmatprep.subr.mxu0 %v354
    %1162 = vmatpush1.msra.mxu0 %v353
    %1163 = vmatprep.subr.mxu0 %v358
    %1164 = vmatpush1.msra.mxu0 %v357
    %1165 = vmatprep.subr.mxu0 %v362
    %1166 = vmatpush1.msra.mxu0 %v361
    %1167 = vmatprep.subr.mxu0 %v366
    %1168 = vmatpush1.msra.mxu0 %v365
    %1169 = vmatprep.subr.mxu0 %v370
    %1170 = vmatpush1.msra.mxu0 %v369
    %1171 = vmatprep.subr.mxu0 %v374
    %1172 = vmatpush1.msra.mxu0 %v373
    %1173 = vmatprep.subr.mxu0 %v378
    %1174 = vmatpush1.msra.mxu0 %v377
    %1175 = vmatprep.subr.mxu0 %v382
    %1176 = vmatpush1.msra.mxu0 %v381
    %1177 = vmatprep.subr.mxu0 %v386
    %1178 = vmatpush1.msra.mxu0 %v385
    %1179 = vmatprep.subr.mxu0 %v390
    %1180 = vmatpush1.msra.mxu0 %v389
    %1181 = vmatprep.subr.mxu0 %v394
    %1182 = vmatpush1.msra.mxu0 %v393
    %1183 = vmatprep.subr.mxu0 %v398
    %1184 = vmatpush1.msra.mxu0 %v397
    %1185 = vmatprep.subr.mxu0 %v402
    %1186 = vmatpush1.msra.mxu0 %v401
    %1187 = vmatprep.subr.mxu0 %v406
    %1188 = vmatpush1.msra.mxu0 %v405
    %1189 = vmatprep.subr.mxu0 %v410
    %1190 = vmatpush1.msra.mxu0 %v409
    %1191 = vmatprep.subr.mxu0 %v414
    %1192 = vmatpush1.msra.mxu0 %v413
    %1193 = vmatprep.subr.mxu0 %v418
    %1194 = vmatpush1.msra.mxu0 %v417
    %1195 = vmatprep.subr.mxu0 %v422
    %1196 = vmatpush1.msra.mxu0 %v421
    %1197 = vmatprep.subr.mxu0 %v426
    %1198 = vmatpush1.msra.mxu0 %v425
    %1199 = vmatprep.subr.mxu0 %v430
    %1200 = vmatpush1.msra.mxu0 %v429
    %1201 = vmatprep.subr.mxu0 %v434
    %1202 = vmatpush1.msra.mxu0 %v433
    %1203 = vmatprep.mubr.f32.mxu0 %v1138
    %1204 = vmatmul.mubr.f32.gmra.mrb[0].mxu0 %v953
    %v1205 = vpop.f32.mrb[0].mxu0
    %v1206 = vadd.f32 %v229, %v1205
    %v1207 = vpop.f32.mrb[0].mxu0
    %v1208 = vadd.f32 %v233, %v1207
    %1209 = vdwg.mxu0
    %1210 = vmatprep.subr.mxu0 %v312
    %1211 = vmatpush1.msra.mxu0 %v311
    %1212 = vmatprep.subr.mxu0 %v316
    %1213 = vmatpush1.msra.mxu0 %v315
    %1214 = vmatprep.subr.mxu0 %v320
    %1215 = vmatpush1.msra.mxu0 %v319
    %1216 = vmatprep.subr.mxu0 %v324
    %1217 = vmatpush1.msra.mxu0 %v323
    %1218 = vmatprep.subr.mxu0 %v328
    %1219 = vmatpush1.msra.mxu0 %v327
    %1220 = vmatprep.subr.mxu0 %v332
    %1221 = vmatpush1.msra.mxu0 %v331
    %1222 = vmatprep.subr.mxu0 %v336
    %1223 = vmatpush1.msra.mxu0 %v335
    %1224 = vmatprep.subr.mxu0 %v340
    %1225 = vmatpush1.msra.mxu0 %v339
    %1226 = vmatprep.subr.mxu0 %v344
    %1227 = vmatpush1.msra.mxu0 %v343
    %1228 = vmatprep.subr.mxu0 %v348
    %1229 = vmatpush1.msra.mxu0 %v347
    %1230 = vmatprep.subr.mxu0 %v352
    %1231 = vmatpush1.msra.mxu0 %v351
    %1232 = vmatprep.subr.mxu0 %v356
    %1233 = vmatpush1.msra.mxu0 %v355
    %1234 = vmatprep.subr.mxu0 %v360
    %1235 = vmatpush1.msra.mxu0 %v359
    %1236 = vmatprep.subr.mxu0 %v364
    %1237 = vmatpush1.msra.mxu0 %v363
    %1238 = vmatprep.subr.mxu0 %v368
    %1239 = vmatpush1.msra.mxu0 %v367
    %1240 = vmatprep.subr.mxu0 %v372
    %1241 = vmatpush1.msra.mxu0 %v371
    %1242 = vmatprep.subr.mxu0 %v376
    %1243 = vmatpush1.msra.mxu0 %v375
    %1244 = vmatprep.subr.mxu0 %v380
    %1245 = vmatpush1.msra.mxu0 %v379
    %1246 = vmatprep.subr.mxu0 %v384
    %1247 = vmatpush1.msra.mxu0 %v383
    %1248 = vmatprep.subr.mxu0 %v388
    %1249 = vmatpush1.msra.mxu0 %v387
    %1250 = vmatprep.subr.mxu0 %v392
    %1251 = vmatpush1.msra.mxu0 %v391
    %1252 = vmatprep.subr.mxu0 %v396
    %1253 = vmatpush1.msra.mxu0 %v395
    %1254 = vmatprep.subr.mxu0 %v400
    %1255 = vmatpush1.msra.mxu0 %v399
    %1256 = vmatprep.subr.mxu0 %v404
    %1257 = vmatpush1.msra.mxu0 %v403
    %1258 = vmatprep.subr.mxu0 %v408
    %1259 = vmatpush1.msra.mxu0 %v407
    %1260 = vmatprep.subr.mxu0 %v412
    %1261 = vmatpush1.msra.mxu0 %v411
    %1262 = vmatprep.subr.mxu0 %v416
    %1263 = vmatpush1.msra.mxu0 %v415
    %1264 = vmatprep.subr.mxu0 %v420
    %1265 = vmatpush1.msra.mxu0 %v419
    %1266 = vmatprep.subr.mxu0 %v424
    %1267 = vmatpush1.msra.mxu0 %v423
    %1268 = vmatprep.subr.mxu0 %v428
    %1269 = vmatpush1.msra.mxu0 %v427
    %1270 = vmatprep.subr.mxu0 %v432
    %1271 = vmatpush1.msra.mxu0 %v431
    %1272 = vmatprep.subr.mxu0 %v436
    %1273 = vmatpush1.msra.mxu0 %v435
    %1274 = vmatprep.mubr.f32.mxu0 %v1138
    %1275 = vmatmul.mubr.f32.gmra.mrb[0].mxu0 %v953
    %v1276 = vpop.f32.mrb[0].mxu0
    %v1277 = vadd.f32 %v237, %v1276
    %v1278 = vpop.f32.mrb[0].mxu0
    %v1279 = vadd.f32 %v241, %v1278
    %1280 = vdwg.mxu0
    %v1281 = vxor.u32 %v1206, 2147483648
    %v1282 = vmul.f32 %v1281, 1.442695
    %v1283 = vpow.pop %v1282
    %v1284 = vadd.f32 %v1283, 1.0
    %v1285 = vrcp.pop %v1284
    %v1286 = vmul.f32 1.0, %v1285
    %v1287 = vxor.u32 %v1208, 2147483648
    %v1288 = vmul.f32 %v1287, 1.442695
    %v1289 = vpow.pop %v1288
    %v1290 = vadd.f32 %v1289, 1.0
    %v1291 = vrcp.pop %v1290
    %v1292 = vmul.f32 1.0, %v1291
    %v1293 = vtanh.pop %v1277
    %v1294 = vxor.u32 %v1279, 2147483648
    %v1295 = vmul.f32 %v1294, 1.442695
    %v1296 = vpow.pop %v1295
    %v1297 = vadd.f32 %v1296, 1.0
    %v1298 = vrcp.pop %v1297
    %v1299 = vmul.f32 1.0, %v1298
    %v1300 = vmul.f32 %v1292, %v951
    %v1301 = vmul.f32 %v1286, %v1293
    %v1302 = vadd.f32 %v1300, %v1301
    %v1303 = vtanh.pop %v1302
    %v1304 = vmul.f32 %v1299, %v1303
    %s1305 = scalar_lea.vmem %s0, 24
    %v1306 = vld [vmem:[%s1305] sm:$0xff]
    %1308 = vset.pattern.permute.xlu0 0
    %1309 = vperm.xlu0 %1308, %v1306
    %v1310 = vpop.permute.xlu0 %1309
    %v1312 = vmul.f32 %v1310, %v256
    %v1313 = vmul.f32 %v1310, %v260
    %v1314 = vmul.f32 %v1310, %v264
    %v1315 = vmul.f32 %v1310, %v268
    %v1316 = vadd.f32 %v1312, %v207
    %v1317 = vadd.f32 %v1313, %v211
    %v1318 = vadd.f32 %v1314, %v215
    %v1319 = vadd.f32 %v1315, %v219
    %1320 = vmatprep.subr.mxu0 %v139
    %1321 = vmatpush1.msra.mxu0 %v138
    %1322 = vmatprep.subr.mxu0 %v143
    %1323 = vmatpush1.msra.mxu0 %v142
    %1324 = vmatprep.subr.mxu0 %v147
    %1325 = vmatpush1.msra.mxu0 %v146
    %1326 = vmatprep.subr.mxu0 %v151
    %1327 = vmatpush1.msra.mxu0 %v150
    %1328 = vmatprep.subr.mxu0 %v155
    %1329 = vmatpush1.msra.mxu0 %v154
    %1330 = vmatprep.subr.mxu0 %v159
    %1331 = vmatpush1.msra.mxu0 %v158
    %1332 = vmatprep.subr.mxu0 %v163
    %1333 = vmatpush1.msra.mxu0 %v162
    %1334 = vmatprep.subr.mxu0 %v167
    %1335 = vmatpush1.msra.mxu0 %v166
    %1336 = vmatprep.subr.mxu0 %v171
    %1337 = vmatpush1.msra.mxu0 %v170
    %1338 = vmatprep.subr.mxu0 %v175
    %1339 = vmatpush1.msra.mxu0 %v174
    %1340 = vmatprep.subr.mxu0 %v179
    %1341 = vmatpush1.msra.mxu0 %v178
    %1342 = vmatprep.subr.mxu0 %v183
    %1343 = vmatpush1.msra.mxu0 %v182
    %1344 = vmatprep.subr.mxu0 %v187
    %1345 = vmatpush1.msra.mxu0 %v186
    %1346 = vmatprep.subr.mxu0 %v191
    %1347 = vmatpush1.msra.mxu0 %v190
    %1348 = vmatprep.subr.mxu0 %v195
    %1349 = vmatpush1.msra.mxu0 %v194
    %1350 = vmatprep.subr.mxu0 %v199
    %1351 = vmatpush1.msra.mxu0 %v198
    %1352 = vmatprep.subr.mxu0 0.0
    %1353 = vmatpush1.msra.mxu0 0.0
    %1354 = vmatprep.subr.mxu0 0.0
    %1355 = vmatpush1.msra.mxu0 0.0
    %1356 = vmatprep.subr.mxu0 0.0
    %1357 = vmatpush1.msra.mxu0 0.0
    %1358 = vmatprep.subr.mxu0 0.0
    %1359 = vmatpush1.msra.mxu0 0.0
    %1360 = vmatprep.subr.mxu0 0.0
    %1361 = vmatpush1.msra.mxu0 0.0
    %1362 = vmatprep.subr.mxu0 0.0
    %1363 = vmatpush1.msra.mxu0 0.0
    %1364 = vmatprep.subr.mxu0 0.0
    %1365 = vmatpush1.msra.mxu0 0.0
    %1366 = vmatprep.subr.mxu0 0.0
    %1367 = vmatpush1.msra.mxu0 0.0
    %1368 = vmatprep.subr.mxu0 0.0
    %1369 = vmatpush1.msra.mxu0 0.0
    %1370 = vmatprep.subr.mxu0 0.0
    %1371 = vmatpush1.msra.mxu0 0.0
    %1372 = vmatprep.subr.mxu0 0.0
    %1373 = vmatpush1.msra.mxu0 0.0
    %1374 = vmatprep.subr.mxu0 0.0
    %1375 = vmatpush1.msra.mxu0 0.0
    %1376 = vmatprep.subr.mxu0 0.0
    %1377 = vmatpush1.msra.mxu0 0.0
    %1378 = vmatprep.subr.mxu0 0.0
    %1379 = vmatpush1.msra.mxu0 0.0
    %1380 = vmatprep.subr.mxu0 0.0
    %1381 = vmatpush1.msra.mxu0 0.0
    %1382 = vmatprep.subr.mxu0 0.0
    %1383 = vmatpush1.msra.mxu0 0.0
    %1384 = vmatprep.mubr.f32.mxu0 0.0
    %1385 = vmatmul.mubr.f32.gmra.mrb[0].mxu0 %v1138
    %v1386 = vpop.f32.mrb[0].mxu0
    %v1387 = vadd.f32 0.0, %v1386
    %v1388 = vpop.f32.mrb[0].mxu0
    %v1389 = vadd.f32 0.0, %v1388
    %1390 = vdwg.mxu0
    %1391 = vmatprep.subr.mxu0 %v141
    %1392 = vmatpush1.msra.mxu0 %v140
    %1393 = vmatprep.subr.mxu0 %v145
    %1394 = vmatpush1.msra.mxu0 %v144
    %1395 = vmatprep.subr.mxu0 %v149
    %1396 = vmatpush1.msra.mxu0 %v148
    %1397 = vmatprep.subr.mxu0 %v153
    %1398 = vmatpush1.msra.mxu0 %v152
    %1399 = vmatprep.subr.mxu0 %v157
    %1400 = vmatpush1.msra.mxu0 %v156
    %1401 = vmatprep.subr.mxu0 %v161
    %1402 = vmatpush1.msra.mxu0 %v160
    %1403 = vmatprep.subr.mxu0 %v165
    %1404 = vmatpush1.msra.mxu0 %v164
    %1405 = vmatprep.subr.mxu0 %v169
    %1406 = vmatpush1.msra.mxu0 %v168
    %1407 = vmatprep.subr.mxu0 %v173
    %1408 = vmatpush1.msra.mxu0 %v172
    %1409 = vmatprep.subr.mxu0 %v177
    %1410 = vmatpush1.msra.mxu0 %v176
    %1411 = vmatprep.subr.mxu0 %v181
    %1412 = vmatpush1.msra.mxu0 %v180
    %1413 = vmatprep.subr.mxu0 %v185
    %1414 = vmatpush1.msra.mxu0 %v184
    %1415 = vmatprep.subr.mxu0 %v189
    %1416 = vmatpush1.msra.mxu0 %v188
    %1417 = vmatprep.subr.mxu0 %v193
    %1418 = vmatpush1.msra.mxu0 %v192
    %1419 = vmatprep.subr.mxu0 %v197
    %1420 = vmatpush1.msra.mxu0 %v196
    %1421 = vmatprep.subr.mxu0 %v201
    %1422 = vmatpush1.msra.mxu0 %v200
    %1423 = vmatprep.subr.mxu0 0.0
    %1424 = vmatpush1.msra.mxu0 0.0
    %1425 = vmatprep.subr.mxu0 0.0
    %1426 = vmatpush1.msra.mxu0 0.0
    %1427 = vmatprep.subr.mxu0 0.0
    %1428 = vmatpush1.msra.mxu0 0.0
    %1429 = vmatprep.subr.mxu0 0.0
    %1430 = vmatpush1.msra.mxu0 0.0
    %1431 = vmatprep.subr.mxu0 0.0
    %1432 = vmatpush1.msra.mxu0 0.0
    %1433 = vmatprep.subr.mxu0 0.0
    %1434 = vmatpush1.msra.mxu0 0.0
    %1435 = vmatprep.subr.mxu0 0.0
    %1436 = vmatpush1.msra.mxu0 0.0
    %1437 = vmatprep.subr.mxu0 0.0
    %1438 = vmatpush1.msra.mxu0 0.0
    %1439 = vmatprep.subr.mxu0 0.0
    %1440 = vmatpush1.msra.mxu0 0.0
    %1441 = vmatprep.subr.mxu0 0.0
    %1442 = vmatpush1.msra.mxu0 0.0
    %1443 = vmatprep.subr.mxu0 0.0
    %1444 = vmatpush1.msra.mxu0 0.0
    %1445 = vmatprep.subr.mxu0 0.0
    %1446 = vmatpush1.msra.mxu0 0.0
    %1447 = vmatprep.subr.mxu0 0.0
    %1448 = vmatpush1.msra.mxu0 0.0
    %1449 = vmatprep.subr.mxu0 0.0
    %1450 = vmatpush1.msra.mxu0 0.0
    %1451 = vmatprep.subr.mxu0 0.0
    %1452 = vmatpush1.msra.mxu0 0.0
    %1453 = vmatprep.subr.mxu0 0.0
    %1454 = vmatpush1.msra.mxu0 0.0
    %1455 = vmatprep.mubr.f32.mxu0 0.0
    %1456 = vmatmul.mubr.f32.gmra.mrb[0].mxu0 %v1138
    %v1457 = vpop.f32.mrb[0].mxu0
    %v1458 = vadd.f32 0.0, %v1457
    %v1459 = vpop.f32.mrb[0].mxu0
    %v1460 = vadd.f32 0.0, %v1459
    %1461 = vdwg.mxu0
    %v1462 = vadd.f32 %v1316, %v1387
    %v1463 = vadd.f32 %v1317, %v1389
    %v1464 = vadd.f32 %v1318, %v1458
    %v1465 = vadd.f32 %v1319, %v1460
    %v1466 = vxor.u32 %v1462, 2147483648
    %v1467 = vmul.f32 %v1466, 1.442695
    %v1468 = vpow.pop %v1467
    %v1469 = vadd.f32 %v1468, 1.0
    %v1470 = vrcp.pop %v1469
    %v1471 = vmul.f32 1.0, %v1470
    %v1472 = vxor.u32 %v1463, 2147483648
    %v1473 = vmul.f32 %v1472, 1.442695
    %v1474 = vpow.pop %v1473
    %v1475 = vadd.f32 %v1474, 1.0
    %v1476 = vrcp.pop %v1475
    %v1477 = vmul.f32 1.0, %v1476
    %v1478 = vtanh.pop %v1464
    %v1479 = vxor.u32 %v1465, 2147483648
    %v1480 = vmul.f32 %v1479, 1.442695
    %v1481 = vpow.pop %v1480
    %v1482 = vadd.f32 %v1481, 1.0
    %v1483 = vrcp.pop %v1482
    %v1484 = vmul.f32 1.0, %v1483
    %v1485 = vmul.f32 %v1477, %v1136
    %v1486 = vmul.f32 %v1471, %v1478
    %v1487 = vadd.f32 %v1485, %v1486
    %v1488 = vtanh.pop %v1487
    %v1489 = vmul.f32 %v1484, %v1488
    %1490 = vmatprep.subr.mxu0 %v310
    %1491 = vmatpush1.msra.mxu0 %v309
    %1492 = vmatprep.subr.mxu0 %v314
    %1493 = vmatpush1.msra.mxu0 %v313
    %1494 = vmatprep.subr.mxu0 %v318
    %1495 = vmatpush1.msra.mxu0 %v317
    %1496 = vmatprep.subr.mxu0 %v322
    %1497 = vmatpush1.msra.mxu0 %v321
    %1498 = vmatprep.subr.mxu0 %v326
    %1499 = vmatpush1.msra.mxu0 %v325
    %1500 = vmatprep.subr.mxu0 %v330
    %1501 = vmatpush1.msra.mxu0 %v329
    %1502 = vmatprep.subr.mxu0 %v334
    %1503 = vmatpush1.msra.mxu0 %v333
    %1504 = vmatprep.subr.mxu0 %v338
    %1505 = vmatpush1.msra.mxu0 %v337
    %1506 = vmatprep.subr.mxu0 %v342
    %1507 = vmatpush1.msra.mxu0 %v341
    %1508 = vmatprep.subr.mxu0 %v346
    %1509 = vmatpush1.msra.mxu0 %v345
    %1510 = vmatprep.subr.mxu0 %v350
    %1511 = vmatpush1.msra.mxu0 %v349
    %1512 = vmatprep.subr.mxu0 %v354
    %1513 = vmatpush1.msra.mxu0 %v353
    %1514 = vmatprep.subr.mxu0 %v358
    %1515 = vmatpush1.msra.mxu0 %v357
    %1516 = vmatprep.subr.mxu0 %v362
    %1517 = vmatpush1.msra.mxu0 %v361
    %1518 = vmatprep.subr.mxu0 %v366
    %1519 = vmatpush1.msra.mxu0 %v365
    %1520 = vmatprep.subr.mxu0 %v370
    %1521 = vmatpush1.msra.mxu0 %v369
    %1522 = vmatprep.subr.mxu0 %v374
    %1523 = vmatpush1.msra.mxu0 %v373
    %1524 = vmatprep.subr.mxu0 %v378
    %1525 = vmatpush1.msra.mxu0 %v377
    %1526 = vmatprep.subr.mxu0 %v382
    %1527 = vmatpush1.msra.mxu0 %v381
    %1528 = vmatprep.subr.mxu0 %v386
    %1529 = vmatpush1.msra.mxu0 %v385
    %1530 = vmatprep.subr.mxu0 %v390
    %1531 = vmatpush1.msra.mxu0 %v389
    %1532 = vmatprep.subr.mxu0 %v394
    %1533 = vmatpush1.msra.mxu0 %v393
    %1534 = vmatprep.subr.mxu0 %v398
    %1535 = vmatpush1.msra.mxu0 %v397
    %1536 = vmatprep.subr.mxu0 %v402
    %1537 = vmatpush1.msra.mxu0 %v401
    %1538 = vmatprep.subr.mxu0 %v406
    %1539 = vmatpush1.msra.mxu0 %v405
    %1540 = vmatprep.subr.mxu0 %v410
    %1541 = vmatpush1.msra.mxu0 %v409
    %1542 = vmatprep.subr.mxu0 %v414
    %1543 = vmatpush1.msra.mxu0 %v413
    %1544 = vmatprep.subr.mxu0 %v418
    %1545 = vmatpush1.msra.mxu0 %v417
    %1546 = vmatprep.subr.mxu0 %v422
    %1547 = vmatpush1.msra.mxu0 %v421
    %1548 = vmatprep.subr.mxu0 %v426
    %1549 = vmatpush1.msra.mxu0 %v425
    %1550 = vmatprep.subr.mxu0 %v430
    %1551 = vmatpush1.msra.mxu0 %v429
    %1552 = vmatprep.subr.mxu0 %v434
    %1553 = vmatpush1.msra.mxu0 %v433
    %1554 = vmatprep.mubr.f32.mxu0 %v1489
    %1555 = vmatmul.mubr.f32.gmra.mrb[0].mxu0 %v1304
    %v1556 = vpop.f32.mrb[0].mxu0
    %v1557 = vadd.f32 %v229, %v1556
    %v1558 = vpop.f32.mrb[0].mxu0
    %v1559 = vadd.f32 %v233, %v1558
    %1560 = vdwg.mxu0
    %1561 = vmatprep.subr.mxu0 %v312
    %1562 = vmatpush1.msra.mxu0 %v311
    %1563 = vmatprep.subr.mxu0 %v316
    %1564 = vmatpush1.msra.mxu0 %v315
    %1565 = vmatprep.subr.mxu0 %v320
    %1566 = vmatpush1.msra.mxu0 %v319
    %1567 = vmatprep.subr.mxu0 %v324
    %1568 = vmatpush1.msra.mxu0 %v323
    %1569 = vmatprep.subr.mxu0 %v328
    %1570 = vmatpush1.msra.mxu0 %v327
    %1571 = vmatprep.subr.mxu0 %v332
    %1572 = vmatpush1.msra.mxu0 %v331
    %1573 = vmatprep.subr.mxu0 %v336
    %1574 = vmatpush1.msra.mxu0 %v335
    %1575 = vmatprep.subr.mxu0 %v340
    %1576 = vmatpush1.msra.mxu0 %v339
    %1577 = vmatprep.subr.mxu0 %v344
    %1578 = vmatpush1.msra.mxu0 %v343
    %1579 = vmatprep.subr.mxu0 %v348
    %1580 = vmatpush1.msra.mxu0 %v347
    %1581 = vmatprep.subr.mxu0 %v352
    %1582 = vmatpush1.msra.mxu0 %v351
    %1583 = vmatprep.subr.mxu0 %v356
    %1584 = vmatpush1.msra.mxu0 %v355
    %1585 = vmatprep.subr.mxu0 %v360
    %1586 = vmatpush1.msra.mxu0 %v359
    %1587 = vmatprep.subr.mxu0 %v364
    %1588 = vmatpush1.msra.mxu0 %v363
    %1589 = vmatprep.subr.mxu0 %v368
    %1590 = vmatpush1.msra.mxu0 %v367
    %1591 = vmatprep.subr.mxu0 %v372
    %1592 = vmatpush1.msra.mxu0 %v371
    %1593 = vmatprep.subr.mxu0 %v376
    %1594 = vmatpush1.msra.mxu0 %v375
    %1595 = vmatprep.subr.mxu0 %v380
    %1596 = vmatpush1.msra.mxu0 %v379
    %1597 = vmatprep.subr.mxu0 %v384
    %1598 = vmatpush1.msra.mxu0 %v383
    %1599 = vmatprep.subr.mxu0 %v388
    %1600 = vmatpush1.msra.mxu0 %v387
    %1601 = vmatprep.subr.mxu0 %v392
    %1602 = vmatpush1.msra.mxu0 %v391
    %1603 = vmatprep.subr.mxu0 %v396
    %1604 = vmatpush1.msra.mxu0 %v395
    %1605 = vmatprep.subr.mxu0 %v400
    %1606 = vmatpush1.msra.mxu0 %v399
    %1607 = vmatprep.subr.mxu0 %v404
    %1608 = vmatpush1.msra.mxu0 %v403
    %1609 = vmatprep.subr.mxu0 %v408
    %1610 = vmatpush1.msra.mxu0 %v407
    %1611 = vmatprep.subr.mxu0 %v412
    %1612 = vmatpush1.msra.mxu0 %v411
    %1613 = vmatprep.subr.mxu0 %v416
    %1614 = vmatpush1.msra.mxu0 %v415
    %1615 = vmatprep.subr.mxu0 %v420
    %1616 = vmatpush1.msra.mxu0 %v419
    %1617 = vmatprep.subr.mxu0 %v424
    %1618 = vmatpush1.msra.mxu0 %v423
    %1619 = vmatprep.subr.mxu0 %v428
    %1620 = vmatpush1.msra.mxu0 %v427
    %1621 = vmatprep.subr.mxu0 %v432
    %1622 = vmatpush1.msra.mxu0 %v431
    %1623 = vmatprep.subr.mxu0 %v436
    %1624 = vmatpush1.msra.mxu0 %v435
    %1625 = vmatprep.mubr.f32.mxu0 %v1489
    %1626 = vmatmul.mubr.f32.gmra.mrb[0].mxu0 %v1304
    %v1627 = vpop.f32.mrb[0].mxu0
    %v1628 = vadd.f32 %v237, %v1627
    %v1629 = vpop.f32.mrb[0].mxu0
    %v1630 = vadd.f32 %v241, %v1629
    %1631 = vdwg.mxu0
    %v1632 = vxor.u32 %v1557, 2147483648
    %v1633 = vmul.f32 %v1632, 1.442695
    %v1634 = vpow.pop %v1633
    %v1635 = vadd.f32 %v1634, 1.0
    %v1636 = vrcp.pop %v1635
    %v1637 = vmul.f32 1.0, %v1636
    %v1638 = vxor.u32 %v1559, 2147483648
    %v1639 = vmul.f32 %v1638, 1.442695
    %v1640 = vpow.pop %v1639
    %v1641 = vadd.f32 %v1640, 1.0
    %v1642 = vrcp.pop %v1641
    %v1643 = vmul.f32 1.0, %v1642
    %v1644 = vtanh.pop %v1628
    %v1645 = vxor.u32 %v1630, 2147483648
    %v1646 = vmul.f32 %v1645, 1.442695
    %v1647 = vpow.pop %v1646
    %v1648 = vadd.f32 %v1647, 1.0
    %v1649 = vrcp.pop %v1648
    %v1650 = vmul.f32 1.0, %v1649
    %v1651 = vmul.f32 %v1643, %v1302
    %v1652 = vmul.f32 %v1637, %v1644
    %v1653 = vadd.f32 %v1651, %v1652
    %v1654 = vtanh.pop %v1653
    %v1655 = vmul.f32 %v1650, %v1654
    %s1656 = scalar_lea.vmem %s0, 32
    %v1657 = vld [vmem:[%s1656] sm:$0xff]
    %1659 = vset.pattern.permute.xlu0 0
    %1660 = vperm.xlu0 %1659, %v1657
    %v1661 = vpop.permute.xlu0 %1660
    %v1663 = vmul.f32 %v1661, %v256
    %v1664 = vmul.f32 %v1661, %v260
    %v1665 = vmul.f32 %v1661, %v264
    %v1666 = vmul.f32 %v1661, %v268
    %v1667 = vadd.f32 %v1663, %v207
    %v1668 = vadd.f32 %v1664, %v211
    %v1669 = vadd.f32 %v1665, %v215
    %v1670 = vadd.f32 %v1666, %v219
    %1671 = vmatprep.subr.mxu0 %v139
    %1672 = vmatpush1.msra.mxu0 %v138
    %1673 = vmatprep.subr.mxu0 %v143
    %1674 = vmatpush1.msra.mxu0 %v142
    %1675 = vmatprep.subr.mxu0 %v147
    %1676 = vmatpush1.msra.mxu0 %v146
    %1677 = vmatprep.subr.mxu0 %v151
    %1678 = vmatpush1.msra.mxu0 %v150
    %1679 = vmatprep.subr.mxu0 %v155
    %1680 = vmatpush1.msra.mxu0 %v154
    %1681 = vmatprep.subr.mxu0 %v159
    %1682 = vmatpush1.msra.mxu0 %v158
    %1683 = vmatprep.subr.mxu0 %v163
    %1684 = vmatpush1.msra.mxu0 %v162
    %1685 = vmatprep.subr.mxu0 %v167
    %1686 = vmatpush1.msra.mxu0 %v166
    %1687 = vmatprep.subr.mxu0 %v171
    %1688 = vmatpush1.msra.mxu0 %v170
    %1689 = vmatprep.subr.mxu0 %v175
    %1690 = vmatpush1.msra.mxu0 %v174
    %1691 = vmatprep.subr.mxu0 %v179
    %1692 = vmatpush1.msra.mxu0 %v178
    %1693 = vmatprep.subr.mxu0 %v183
    %1694 = vmatpush1.msra.mxu0 %v182
    %1695 = vmatprep.subr.mxu0 %v187
    %1696 = vmatpush1.msra.mxu0 %v186
    %1697 = vmatprep.subr.mxu0 %v191
    %1698 = vmatpush1.msra.mxu0 %v190
    %1699 = vmatprep.subr.mxu0 %v195
    %1700 = vmatpush1.msra.mxu0 %v194
    %1701 = vmatprep.subr.mxu0 %v199
    %1702 = vmatpush1.msra.mxu0 %v198
    %1703 = vmatprep.subr.mxu0 0.0
    %1704 = vmatpush1.msra.mxu0 0.0
    %1705 = vmatprep.subr.mxu0 0.0
    %1706 = vmatpush1.msra.mxu0 0.0
    %1707 = vmatprep.subr.mxu0 0.0
    %1708 = vmatpush1.msra.mxu0 0.0
    %1709 = vmatprep.subr.mxu0 0.0
    %1710 = vmatpush1.msra.mxu0 0.0
    %1711 = vmatprep.subr.mxu0 0.0
    %1712 = vmatpush1.msra.mxu0 0.0
    %1713 = vmatprep.subr.mxu0 0.0
    %1714 = vmatpush1.msra.mxu0 0.0
    %1715 = vmatprep.subr.mxu0 0.0
    %1716 = vmatpush1.msra.mxu0 0.0
    %1717 = vmatprep.subr.mxu0 0.0
    %1718 = vmatpush1.msra.mxu0 0.0
    %1719 = vmatprep.subr.mxu0 0.0
    %1720 = vmatpush1.msra.mxu0 0.0
    %1721 = vmatprep.subr.mxu0 0.0
    %1722 = vmatpush1.msra.mxu0 0.0
    %1723 = vmatprep.subr.mxu0 0.0
    %1724 = vmatpush1.msra.mxu0 0.0
    %1725 = vmatprep.subr.mxu0 0.0
    %1726 = vmatpush1.msra.mxu0 0.0
    %1727 = vmatprep.subr.mxu0 0.0
    %1728 = vmatpush1.msra.mxu0 0.0
    %1729 = vmatprep.subr.mxu0 0.0
    %1730 = vmatpush1.msra.mxu0 0.0
    %1731 = vmatprep.subr.mxu0 0.0
    %1732 = vmatpush1.msra.mxu0 0.0
    %1733 = vmatprep.subr.mxu0 0.0
    %1734 = vmatpush1.msra.mxu0 0.0
    %1735 = vmatprep.mubr.f32.mxu0 0.0
    %1736 = vmatmul.mubr.f32.gmra.mrb[0].mxu0 %v1489
    %v1737 = vpop.f32.mrb[0].mxu0
    %v1738 = vadd.f32 0.0, %v1737
    %v1739 = vpop.f32.mrb[0].mxu0
    %v1740 = vadd.f32 0.0, %v1739
    %1741 = vdwg.mxu0
    %1742 = vmatprep.subr.mxu0 %v141
    %1743 = vmatpush1.msra.mxu0 %v140
    %1744 = vmatprep.subr.mxu0 %v145
    %1745 = vmatpush1.msra.mxu0 %v144
    %1746 = vmatprep.subr.mxu0 %v149
    %1747 = vmatpush1.msra.mxu0 %v148
    %1748 = vmatprep.subr.mxu0 %v153
    %1749 = vmatpush1.msra.mxu0 %v152
    %1750 = vmatprep.subr.mxu0 %v157
    %1751 = vmatpush1.msra.mxu0 %v156
    %1752 = vmatprep.subr.mxu0 %v161
    %1753 = vmatpush1.msra.mxu0 %v160
    %1754 = vmatprep.subr.mxu0 %v165
    %1755 = vmatpush1.msra.mxu0 %v164
    %1756 = vmatprep.subr.mxu0 %v169
    %1757 = vmatpush1.msra.mxu0 %v168
    %1758 = vmatprep.subr.mxu0 %v173
    %1759 = vmatpush1.msra.mxu0 %v172
    %1760 = vmatprep.subr.mxu0 %v177
    %1761 = vmatpush1.msra.mxu0 %v176
    %1762 = vmatprep.subr.mxu0 %v181
    %1763 = vmatpush1.msra.mxu0 %v180
    %1764 = vmatprep.subr.mxu0 %v185
    %1765 = vmatpush1.msra.mxu0 %v184
    %1766 = vmatprep.subr.mxu0 %v189
    %1767 = vmatpush1.msra.mxu0 %v188
    %1768 = vmatprep.subr.mxu0 %v193
    %1769 = vmatpush1.msra.mxu0 %v192
    %1770 = vmatprep.subr.mxu0 %v197
    %1771 = vmatpush1.msra.mxu0 %v196
    %1772 = vmatprep.subr.mxu0 %v201
    %1773 = vmatpush1.msra.mxu0 %v200
    %1774 = vmatprep.subr.mxu0 0.0
    %1775 = vmatpush1.msra.mxu0 0.0
    %1776 = vmatprep.subr.mxu0 0.0
    %1777 = vmatpush1.msra.mxu0 0.0
    %1778 = vmatprep.subr.mxu0 0.0
    %1779 = vmatpush1.msra.mxu0 0.0
    %1780 = vmatprep.subr.mxu0 0.0
    %1781 = vmatpush1.msra.mxu0 0.0
    %1782 = vmatprep.subr.mxu0 0.0
    %1783 = vmatpush1.msra.mxu0 0.0
    %1784 = vmatprep.subr.mxu0 0.0
    %1785 = vmatpush1.msra.mxu0 0.0
    %1786 = vmatprep.subr.mxu0 0.0
    %1787 = vmatpush1.msra.mxu0 0.0
    %1788 = vmatprep.subr.mxu0 0.0
    %1789 = vmatpush1.msra.mxu0 0.0
    %1790 = vmatprep.subr.mxu0 0.0
    %1791 = vmatpush1.msra.mxu0 0.0
    %1792 = vmatprep.subr.mxu0 0.0
    %1793 = vmatpush1.msra.mxu0 0.0
    %1794 = vmatprep.subr.mxu0 0.0
    %1795 = vmatpush1.msra.mxu0 0.0
    %1796 = vmatprep.subr.mxu0 0.0
    %1797 = vmatpush1.msra.mxu0 0.0
    %1798 = vmatprep.subr.mxu0 0.0
    %1799 = vmatpush1.msra.mxu0 0.0
    %1800 = vmatprep.subr.mxu0 0.0
    %1801 = vmatpush1.msra.mxu0 0.0
    %1802 = vmatprep.subr.mxu0 0.0
    %1803 = vmatpush1.msra.mxu0 0.0
    %1804 = vmatprep.subr.mxu0 0.0
    %1805 = vmatpush1.msra.mxu0 0.0
    %1806 = vmatprep.mubr.f32.mxu0 0.0
    %1807 = vmatmul.mubr.f32.gmra.mrb[0].mxu0 %v1489
    %v1808 = vpop.f32.mrb[0].mxu0
    %v1809 = vadd.f32 0.0, %v1808
    %v1810 = vpop.f32.mrb[0].mxu0
    %v1811 = vadd.f32 0.0, %v1810
    %1812 = vdwg.mxu0
    %v1813 = vadd.f32 %v1667, %v1738
    %v1814 = vadd.f32 %v1668, %v1740
    %v1815 = vadd.f32 %v1669, %v1809
    %v1816 = vadd.f32 %v1670, %v1811
    %v1817 = vxor.u32 %v1813, 2147483648
    %v1818 = vmul.f32 %v1817, 1.442695
    %v1819 = vpow.pop %v1818
    %v1820 = vadd.f32 %v1819, 1.0
    %v1821 = vrcp.pop %v1820
    %v1822 = vmul.f32 1.0, %v1821
    %v1823 = vxor.u32 %v1814, 2147483648
    %v1824 = vmul.f32 %v1823, 1.442695
    %v1825 = vpow.pop %v1824
    %v1826 = vadd.f32 %v1825, 1.0
    %v1827 = vrcp.pop %v1826
    %v1828 = vmul.f32 1.0, %v1827
    %v1829 = vtanh.pop %v1815
    %v1830 = vxor.u32 %v1816, 2147483648
    %v1831 = vmul.f32 %v1830, 1.442695
    %v1832 = vpow.pop %v1831
    %v1833 = vadd.f32 %v1832, 1.0
    %v1834 = vrcp.pop %v1833
    %v1835 = vmul.f32 1.0, %v1834
    %v1836 = vmul.f32 %v1828, %v1487
    %v1837 = vmul.f32 %v1822, %v1829
    %v1838 = vadd.f32 %v1836, %v1837
    %v1839 = vtanh.pop %v1838
    %v1840 = vmul.f32 %v1835, %v1839
    %1841 = vmatprep.subr.mxu0 %v310
    %1842 = vmatpush1.msra.mxu0 %v309
    %1843 = vmatprep.subr.mxu0 %v314
    %1844 = vmatpush1.msra.mxu0 %v313
    %1845 = vmatprep.subr.mxu0 %v318
    %1846 = vmatpush1.msra.mxu0 %v317
    %1847 = vmatprep.subr.mxu0 %v322
    %1848 = vmatpush1.msra.mxu0 %v321
    %1849 = vmatprep.subr.mxu0 %v326
    %1850 = vmatpush1.msra.mxu0 %v325
    %1851 = vmatprep.subr.mxu0 %v330
    %1852 = vmatpush1.msra.mxu0 %v329
    %1853 = vmatprep.subr.mxu0 %v334
    %1854 = vmatpush1.msra.mxu0 %v333
    %1855 = vmatprep.subr.mxu0 %v338
    %1856 = vmatpush1.msra.mxu0 %v337
    %1857 = vmatprep.subr.mxu0 %v342
    %1858 = vmatpush1.msra.mxu0 %v341
    %1859 = vmatprep.subr.mxu0 %v346
    %1860 = vmatpush1.msra.mxu0 %v345
    %1861 = vmatprep.subr.mxu0 %v350
    %1862 = vmatpush1.msra.mxu0 %v349
    %1863 = vmatprep.subr.mxu0 %v354
    %1864 = vmatpush1.msra.mxu0 %v353
    %1865 = vmatprep.subr.mxu0 %v358
    %1866 = vmatpush1.msra.mxu0 %v357
    %1867 = vmatprep.subr.mxu0 %v362
    %1868 = vmatpush1.msra.mxu0 %v361
    %1869 = vmatprep.subr.mxu0 %v366
    %1870 = vmatpush1.msra.mxu0 %v365
    %1871 = vmatprep.subr.mxu0 %v370
    %1872 = vmatpush1.msra.mxu0 %v369
    %1873 = vmatprep.subr.mxu0 %v374
    %1874 = vmatpush1.msra.mxu0 %v373
    %1875 = vmatprep.subr.mxu0 %v378
    %1876 = vmatpush1.msra.mxu0 %v377
    %1877 = vmatprep.subr.mxu0 %v382
    %1878 = vmatpush1.msra.mxu0 %v381
    %1879 = vmatprep.subr.mxu0 %v386
    %1880 = vmatpush1.msra.mxu0 %v385
    %1881 = vmatprep.subr.mxu0 %v390
    %1882 = vmatpush1.msra.mxu0 %v389
    %1883 = vmatprep.subr.mxu0 %v394
    %1884 = vmatpush1.msra.mxu0 %v393
    %1885 = vmatprep.subr.mxu0 %v398
    %1886 = vmatpush1.msra.mxu0 %v397
    %1887 = vmatprep.subr.mxu0 %v402
    %1888 = vmatpush1.msra.mxu0 %v401
    %1889 = vmatprep.subr.mxu0 %v406
    %1890 = vmatpush1.msra.mxu0 %v405
    %1891 = vmatprep.subr.mxu0 %v410
    %1892 = vmatpush1.msra.mxu0 %v409
    %1893 = vmatprep.subr.mxu0 %v414
    %1894 = vmatpush1.msra.mxu0 %v413
    %1895 = vmatprep.subr.mxu0 %v418
    %1896 = vmatpush1.msra.mxu0 %v417
    %1897 = vmatprep.subr.mxu0 %v422
    %1898 = vmatpush1.msra.mxu0 %v421
    %1899 = vmatprep.subr.mxu0 %v426
    %1900 = vmatpush1.msra.mxu0 %v425
    %1901 = vmatprep.subr.mxu0 %v430
    %1902 = vmatpush1.msra.mxu0 %v429
    %1903 = vmatprep.subr.mxu0 %v434
    %1904 = vmatpush1.msra.mxu0 %v433
    %1905 = vmatprep.mubr.f32.mxu0 %v1840
    %1906 = vmatmul.mubr.f32.gmra.mrb[0].mxu0 %v1655
    %v1907 = vpop.f32.mrb[0].mxu0
    %v1908 = vadd.f32 %v229, %v1907
    %v1909 = vpop.f32.mrb[0].mxu0
    %v1910 = vadd.f32 %v233, %v1909
    %1911 = vdwg.mxu0
    %1912 = vmatprep.subr.mxu0 %v312
    %1913 = vmatpush1.msra.mxu0 %v311
    %1914 = vmatprep.subr.mxu0 %v316
    %1915 = vmatpush1.msra.mxu0 %v315
    %1916 = vmatprep.subr.mxu0 %v320
    %1917 = vmatpush1.msra.mxu0 %v319
    %1918 = vmatprep.subr.mxu0 %v324
    %1919 = vmatpush1.msra.mxu0 %v323
    %1920 = vmatprep.subr.mxu0 %v328
    %1921 = vmatpush1.msra.mxu0 %v327
    %1922 = vmatprep.subr.mxu0 %v332
    %1923 = vmatpush1.msra.mxu0 %v331
    %1924 = vmatprep.subr.mxu0 %v336
    %1925 = vmatpush1.msra.mxu0 %v335
    %1926 = vmatprep.subr.mxu0 %v340
    %1927 = vmatpush1.msra.mxu0 %v339
    %1928 = vmatprep.subr.mxu0 %v344
    %1929 = vmatpush1.msra.mxu0 %v343
    %1930 = vmatprep.subr.mxu0 %v348
    %1931 = vmatpush1.msra.mxu0 %v347
    %1932 = vmatprep.subr.mxu0 %v352
    %1933 = vmatpush1.msra.mxu0 %v351
    %1934 = vmatprep.subr.mxu0 %v356
    %1935 = vmatpush1.msra.mxu0 %v355
    %1936 = vmatprep.subr.mxu0 %v360
    %1937 = vmatpush1.msra.mxu0 %v359
    %1938 = vmatprep.subr.mxu0 %v364
    %1939 = vmatpush1.msra.mxu0 %v363
    %1940 = vmatprep.subr.mxu0 %v368
    %1941 = vmatpush1.msra.mxu0 %v367
    %1942 = vmatprep.subr.mxu0 %v372
    %1943 = vmatpush1.msra.mxu0 %v371
    %1944 = vmatprep.subr.mxu0 %v376
    %1945 = vmatpush1.msra.mxu0 %v375
    %1946 = vmatprep.subr.mxu0 %v380
    %1947 = vmatpush1.msra.mxu0 %v379
    %1948 = vmatprep.subr.mxu0 %v384
    %1949 = vmatpush1.msra.mxu0 %v383
    %1950 = vmatprep.subr.mxu0 %v388
    %1951 = vmatpush1.msra.mxu0 %v387
    %1952 = vmatprep.subr.mxu0 %v392
    %1953 = vmatpush1.msra.mxu0 %v391
    %1954 = vmatprep.subr.mxu0 %v396
    %1955 = vmatpush1.msra.mxu0 %v395
    %1956 = vmatprep.subr.mxu0 %v400
    %1957 = vmatpush1.msra.mxu0 %v399
    %1958 = vmatprep.subr.mxu0 %v404
    %1959 = vmatpush1.msra.mxu0 %v403
    %1960 = vmatprep.subr.mxu0 %v408
    %1961 = vmatpush1.msra.mxu0 %v407
    %1962 = vmatprep.subr.mxu0 %v412
    %1963 = vmatpush1.msra.mxu0 %v411
    %1964 = vmatprep.subr.mxu0 %v416
    %1965 = vmatpush1.msra.mxu0 %v415
    %1966 = vmatprep.subr.mxu0 %v420
    %1967 = vmatpush1.msra.mxu0 %v419
    %1968 = vmatprep.subr.mxu0 %v424
    %1969 = vmatpush1.msra.mxu0 %v423
    %1970 = vmatprep.subr.mxu0 %v428
    %1971 = vmatpush1.msra.mxu0 %v427
    %1972 = vmatprep.subr.mxu0 %v432
    %1973 = vmatpush1.msra.mxu0 %v431
    %1974 = vmatprep.subr.mxu0 %v436
    %1975 = vmatpush1.msra.mxu0 %v435
    %1976 = vmatprep.mubr.f32.mxu0 %v1840
    %1977 = vmatmul.mubr.f32.gmra.mrb[0].mxu0 %v1655
    %v1978 = vpop.f32.mrb[0].mxu0
    %v1979 = vadd.f32 %v237, %v1978
    %v1980 = vpop.f32.mrb[0].mxu0
    %v1981 = vadd.f32 %v241, %v1980
    %1982 = vdwg.mxu0
    %v1983 = vxor.u32 %v1908, 2147483648
    %v1984 = vmul.f32 %v1983, 1.442695
    %v1985 = vpow.pop %v1984
    %v1986 = vadd.f32 %v1985, 1.0
    %v1987 = vrcp.pop %v1986
    %v1988 = vmul.f32 1.0, %v1987
    %v1989 = vxor.u32 %v1910, 2147483648
    %v1990 = vmul.f32 %v1989, 1.442695
    %v1991 = vpow.pop %v1990
    %v1992 = vadd.f32 %v1991, 1.0
    %v1993 = vrcp.pop %v1992
    %v1994 = vmul.f32 1.0, %v1993
    %v1995 = vtanh.pop %v1979
    %v1996 = vxor.u32 %v1981, 2147483648
    %v1997 = vmul.f32 %v1996, 1.442695
    %v1998 = vpow.pop %v1997
    %v1999 = vadd.f32 %v1998, 1.0
    %v2000 = vrcp.pop %v1999
    %v2001 = vmul.f32 1.0, %v2000
    %v2002 = vmul.f32 %v1994, %v1653
    %v2003 = vmul.f32 %v1988, %v1995
    %v2004 = vadd.f32 %v2002, %v2003
    %v2005 = vtanh.pop %v2004
    %v2006 = vmul.f32 %v2001, %v2005
    %s2007 = scalar_lea.vmem %s0, 40
    %v2008 = vld [vmem:[%s2007] sm:$0xff]
    %2010 = vset.pattern.permute.xlu0 0
    %2011 = vperm.xlu0 %2010, %v2008
    %v2012 = vpop.permute.xlu0 %2011
    %v2014 = vmul.f32 %v2012, %v256
    %v2015 = vmul.f32 %v2012, %v260
    %v2016 = vmul.f32 %v2012, %v264
    %v2017 = vmul.f32 %v2012, %v268
    %v2018 = vadd.f32 %v2014, %v207
    %v2019 = vadd.f32 %v2015, %v211
    %v2020 = vadd.f32 %v2016, %v215
    %v2021 = vadd.f32 %v2017, %v219
    %2022 = vmatprep.subr.mxu0 %v139
    %2023 = vmatpush1.msra.mxu0 %v138
    %2024 = vmatprep.subr.mxu0 %v143
    %2025 = vmatpush1.msra.mxu0 %v142
    %2026 = vmatprep.subr.mxu0 %v147
    %2027 = vmatpush1.msra.mxu0 %v146
    %2028 = vmatprep.subr.mxu0 %v151
    %2029 = vmatpush1.msra.mxu0 %v150
    %2030 = vmatprep.subr.mxu0 %v155
    %2031 = vmatpush1.msra.mxu0 %v154
    %2032 = vmatprep.subr.mxu0 %v159
    %2033 = vmatpush1.msra.mxu0 %v158
    %2034 = vmatprep.subr.mxu0 %v163
    %2035 = vmatpush1.msra.mxu0 %v162
    %2036 = vmatprep.subr.mxu0 %v167
    %2037 = vmatpush1.msra.mxu0 %v166
    %2038 = vmatprep.subr.mxu0 %v171
    %2039 = vmatpush1.msra.mxu0 %v170
    %2040 = vmatprep.subr.mxu0 %v175
    %2041 = vmatpush1.msra.mxu0 %v174
    %2042 = vmatprep.subr.mxu0 %v179
    %2043 = vmatpush1.msra.mxu0 %v178
    %2044 = vmatprep.subr.mxu0 %v183
    %2045 = vmatpush1.msra.mxu0 %v182
    %2046 = vmatprep.subr.mxu0 %v187
    %2047 = vmatpush1.msra.mxu0 %v186
    %2048 = vmatprep.subr.mxu0 %v191
    %2049 = vmatpush1.msra.mxu0 %v190
    %2050 = vmatprep.subr.mxu0 %v195
    %2051 = vmatpush1.msra.mxu0 %v194
    %2052 = vmatprep.subr.mxu0 %v199
    %2053 = vmatpush1.msra.mxu0 %v198
    %2054 = vmatprep.subr.mxu0 0.0
    %2055 = vmatpush1.msra.mxu0 0.0
    %2056 = vmatprep.subr.mxu0 0.0
    %2057 = vmatpush1.msra.mxu0 0.0
    %2058 = vmatprep.subr.mxu0 0.0
    %2059 = vmatpush1.msra.mxu0 0.0
    %2060 = vmatprep.subr.mxu0 0.0
    %2061 = vmatpush1.msra.mxu0 0.0
    %2062 = vmatprep.subr.mxu0 0.0
    %2063 = vmatpush1.msra.mxu0 0.0
    %2064 = vmatprep.subr.mxu0 0.0
    %2065 = vmatpush1.msra.mxu0 0.0
    %2066 = vmatprep.subr.mxu0 0.0
    %2067 = vmatpush1.msra.mxu0 0.0
    %2068 = vmatprep.subr.mxu0 0.0
    %2069 = vmatpush1.msra.mxu0 0.0
    %2070 = vmatprep.subr.mxu0 0.0
    %2071 = vmatpush1.msra.mxu0 0.0
    %2072 = vmatprep.subr.mxu0 0.0
    %2073 = vmatpush1.msra.mxu0 0.0
    %2074 = vmatprep.subr.mxu0 0.0
    %2075 = vmatpush1.msra.mxu0 0.0
    %2076 = vmatprep.subr.mxu0 0.0
    %2077 = vmatpush1.msra.mxu0 0.0
    %2078 = vmatprep.subr.mxu0 0.0
    %2079 = vmatpush1.msra.mxu0 0.0
    %2080 = vmatprep.subr.mxu0 0.0
    %2081 = vmatpush1.msra.mxu0 0.0
    %2082 = vmatprep.subr.mxu0 0.0
    %2083 = vmatpush1.msra.mxu0 0.0
    %2084 = vmatprep.subr.mxu0 0.0
    %2085 = vmatpush1.msra.mxu0 0.0
    %2086 = vmatprep.mubr.f32.mxu0 0.0
    %2087 = vmatmul.mubr.f32.gmra.mrb[0].mxu0 %v1840
    %v2088 = vpop.f32.mrb[0].mxu0
    %v2089 = vadd.f32 0.0, %v2088
    %v2090 = vpop.f32.mrb[0].mxu0
    %v2091 = vadd.f32 0.0, %v2090
    %2092 = vdwg.mxu0
    %2093 = vmatprep.subr.mxu0 %v141
    %2094 = vmatpush1.msra.mxu0 %v140
    %2095 = vmatprep.subr.mxu0 %v145
    %2096 = vmatpush1.msra.mxu0 %v144
    %2097 = vmatprep.subr.mxu0 %v149
    %2098 = vmatpush1.msra.mxu0 %v148
    %2099 = vmatprep.subr.mxu0 %v153
    %2100 = vmatpush1.msra.mxu0 %v152
    %2101 = vmatprep.subr.mxu0 %v157
    %2102 = vmatpush1.msra.mxu0 %v156
    %2103 = vmatprep.subr.mxu0 %v161
    %2104 = vmatpush1.msra.mxu0 %v160
    %2105 = vmatprep.subr.mxu0 %v165
    %2106 = vmatpush1.msra.mxu0 %v164
    %2107 = vmatprep.subr.mxu0 %v169
    %2108 = vmatpush1.msra.mxu0 %v168
    %2109 = vmatprep.subr.mxu0 %v173
    %2110 = vmatpush1.msra.mxu0 %v172
    %2111 = vmatprep.subr.mxu0 %v177
    %2112 = vmatpush1.msra.mxu0 %v176
    %2113 = vmatprep.subr.mxu0 %v181
    %2114 = vmatpush1.msra.mxu0 %v180
    %2115 = vmatprep.subr.mxu0 %v185
    %2116 = vmatpush1.msra.mxu0 %v184
    %2117 = vmatprep.subr.mxu0 %v189
    %2118 = vmatpush1.msra.mxu0 %v188
    %2119 = vmatprep.subr.mxu0 %v193
    %2120 = vmatpush1.msra.mxu0 %v192
    %2121 = vmatprep.subr.mxu0 %v197
    %2122 = vmatpush1.msra.mxu0 %v196
    %2123 = vmatprep.subr.mxu0 %v201
    %2124 = vmatpush1.msra.mxu0 %v200
    %2125 = vmatprep.subr.mxu0 0.0
    %2126 = vmatpush1.msra.mxu0 0.0
    %2127 = vmatprep.subr.mxu0 0.0
    %2128 = vmatpush1.msra.mxu0 0.0
    %2129 = vmatprep.subr.mxu0 0.0
    %2130 = vmatpush1.msra.mxu0 0.0
    %2131 = vmatprep.subr.mxu0 0.0
    %2132 = vmatpush1.msra.mxu0 0.0
    %2133 = vmatprep.subr.mxu0 0.0
    %2134 = vmatpush1.msra.mxu0 0.0
    %2135 = vmatprep.subr.mxu0 0.0
    %2136 = vmatpush1.msra.mxu0 0.0
    %2137 = vmatprep.subr.mxu0 0.0
    %2138 = vmatpush1.msra.mxu0 0.0
    %2139 = vmatprep.subr.mxu0 0.0
    %2140 = vmatpush1.msra.mxu0 0.0
    %2141 = vmatprep.subr.mxu0 0.0
    %2142 = vmatpush1.msra.mxu0 0.0
    %2143 = vmatprep.subr.mxu0 0.0
    %2144 = vmatpush1.msra.mxu0 0.0
    %2145 = vmatprep.subr.mxu0 0.0
    %2146 = vmatpush1.msra.mxu0 0.0
    %2147 = vmatprep.subr.mxu0 0.0
    %2148 = vmatpush1.msra.mxu0 0.0
    %2149 = vmatprep.subr.mxu0 0.0
    %2150 = vmatpush1.msra.mxu0 0.0
    %2151 = vmatprep.subr.mxu0 0.0
    %2152 = vmatpush1.msra.mxu0 0.0
    %2153 = vmatprep.subr.mxu0 0.0
    %2154 = vmatpush1.msra.mxu0 0.0
    %2155 = vmatprep.subr.mxu0 0.0
    %2156 = vmatpush1.msra.mxu0 0.0
    %2157 = vmatprep.mubr.f32.mxu0 0.0
    %2158 = vmatmul.mubr.f32.gmra.mrb[0].mxu0 %v1840
    %v2159 = vpop.f32.mrb[0].mxu0
    %v2160 = vadd.f32 0.0, %v2159
    %v2161 = vpop.f32.mrb[0].mxu0
    %v2162 = vadd.f32 0.0, %v2161
    %2163 = vdwg.mxu0
    %v2164 = vadd.f32 %v2018, %v2089
    %v2165 = vadd.f32 %v2019, %v2091
    %v2166 = vadd.f32 %v2020, %v2160
    %v2167 = vadd.f32 %v2021, %v2162
    %v2168 = vxor.u32 %v2164, 2147483648
    %v2169 = vmul.f32 %v2168, 1.442695
    %v2170 = vpow.pop %v2169
    %v2171 = vadd.f32 %v2170, 1.0
    %v2172 = vrcp.pop %v2171
    %v2173 = vmul.f32 1.0, %v2172
    %v2174 = vxor.u32 %v2165, 2147483648
    %v2175 = vmul.f32 %v2174, 1.442695
    %v2176 = vpow.pop %v2175
    %v2177 = vadd.f32 %v2176, 1.0
    %v2178 = vrcp.pop %v2177
    %v2179 = vmul.f32 1.0, %v2178
    %v2180 = vtanh.pop %v2166
    %v2181 = vxor.u32 %v2167, 2147483648
    %v2182 = vmul.f32 %v2181, 1.442695
    %v2183 = vpow.pop %v2182
    %v2184 = vadd.f32 %v2183, 1.0
    %v2185 = vrcp.pop %v2184
    %v2186 = vmul.f32 1.0, %v2185
    %v2187 = vmul.f32 %v2179, %v1838
    %v2188 = vmul.f32 %v2173, %v2180
    %v2189 = vadd.f32 %v2187, %v2188
    %v2190 = vtanh.pop %v2189
    %v2191 = vmul.f32 %v2186, %v2190
    %2192 = vmatprep.subr.mxu0 %v310
    %2193 = vmatpush1.msra.mxu0 %v309
    %2194 = vmatprep.subr.mxu0 %v314
    %2195 = vmatpush1.msra.mxu0 %v313
    %2196 = vmatprep.subr.mxu0 %v318
    %2197 = vmatpush1.msra.mxu0 %v317
    %2198 = vmatprep.subr.mxu0 %v322
    %2199 = vmatpush1.msra.mxu0 %v321
    %2200 = vmatprep.subr.mxu0 %v326
    %2201 = vmatpush1.msra.mxu0 %v325
    %2202 = vmatprep.subr.mxu0 %v330
    %2203 = vmatpush1.msra.mxu0 %v329
    %2204 = vmatprep.subr.mxu0 %v334
    %2205 = vmatpush1.msra.mxu0 %v333
    %2206 = vmatprep.subr.mxu0 %v338
    %2207 = vmatpush1.msra.mxu0 %v337
    %2208 = vmatprep.subr.mxu0 %v342
    %2209 = vmatpush1.msra.mxu0 %v341
    %2210 = vmatprep.subr.mxu0 %v346
    %2211 = vmatpush1.msra.mxu0 %v345
    %2212 = vmatprep.subr.mxu0 %v350
    %2213 = vmatpush1.msra.mxu0 %v349
    %2214 = vmatprep.subr.mxu0 %v354
    %2215 = vmatpush1.msra.mxu0 %v353
    %2216 = vmatprep.subr.mxu0 %v358
    %2217 = vmatpush1.msra.mxu0 %v357
    %2218 = vmatprep.subr.mxu0 %v362
    %2219 = vmatpush1.msra.mxu0 %v361
    %2220 = vmatprep.subr.mxu0 %v366
    %2221 = vmatpush1.msra.mxu0 %v365
    %2222 = vmatprep.subr.mxu0 %v370
    %2223 = vmatpush1.msra.mxu0 %v369
    %2224 = vmatprep.subr.mxu0 %v374
    %2225 = vmatpush1.msra.mxu0 %v373
    %2226 = vmatprep.subr.mxu0 %v378
    %2227 = vmatpush1.msra.mxu0 %v377
    %2228 = vmatprep.subr.mxu0 %v382
    %2229 = vmatpush1.msra.mxu0 %v381
    %2230 = vmatprep.subr.mxu0 %v386
    %2231 = vmatpush1.msra.mxu0 %v385
    %2232 = vmatprep.subr.mxu0 %v390
    %2233 = vmatpush1.msra.mxu0 %v389
    %2234 = vmatprep.subr.mxu0 %v394
    %2235 = vmatpush1.msra.mxu0 %v393
    %2236 = vmatprep.subr.mxu0 %v398
    %2237 = vmatpush1.msra.mxu0 %v397
    %2238 = vmatprep.subr.mxu0 %v402
    %2239 = vmatpush1.msra.mxu0 %v401
    %2240 = vmatprep.subr.mxu0 %v406
    %2241 = vmatpush1.msra.mxu0 %v405
    %2242 = vmatprep.subr.mxu0 %v410
    %2243 = vmatpush1.msra.mxu0 %v409
    %2244 = vmatprep.subr.mxu0 %v414
    %2245 = vmatpush1.msra.mxu0 %v413
    %2246 = vmatprep.subr.mxu0 %v418
    %2247 = vmatpush1.msra.mxu0 %v417
    %2248 = vmatprep.subr.mxu0 %v422
    %2249 = vmatpush1.msra.mxu0 %v421
    %2250 = vmatprep.subr.mxu0 %v426
    %2251 = vmatpush1.msra.mxu0 %v425
    %2252 = vmatprep.subr.mxu0 %v430
    %2253 = vmatpush1.msra.mxu0 %v429
    %2254 = vmatprep.subr.mxu0 %v434
    %2255 = vmatpush1.msra.mxu0 %v433
    %2256 = vmatprep.mubr.f32.mxu0 %v2191
    %2257 = vmatmul.mubr.f32.gmra.mrb[0].mxu0 %v2006
    %v2258 = vpop.f32.mrb[0].mxu0
    %v2259 = vadd.f32 %v229, %v2258
    %v2260 = vpop.f32.mrb[0].mxu0
    %v2261 = vadd.f32 %v233, %v2260
    %2262 = vdwg.mxu0
    %2263 = vmatprep.subr.mxu0 %v312
    %2264 = vmatpush1.msra.mxu0 %v311
    %2265 = vmatprep.subr.mxu0 %v316
    %2266 = vmatpush1.msra.mxu0 %v315
    %2267 = vmatprep.subr.mxu0 %v320
    %2268 = vmatpush1.msra.mxu0 %v319
    %2269 = vmatprep.subr.mxu0 %v324
    %2270 = vmatpush1.msra.mxu0 %v323
    %2271 = vmatprep.subr.mxu0 %v328
    %2272 = vmatpush1.msra.mxu0 %v327
    %2273 = vmatprep.subr.mxu0 %v332
    %2274 = vmatpush1.msra.mxu0 %v331
    %2275 = vmatprep.subr.mxu0 %v336
    %2276 = vmatpush1.msra.mxu0 %v335
    %2277 = vmatprep.subr.mxu0 %v340
    %2278 = vmatpush1.msra.mxu0 %v339
    %2279 = vmatprep.subr.mxu0 %v344
    %2280 = vmatpush1.msra.mxu0 %v343
    %2281 = vmatprep.subr.mxu0 %v348
    %2282 = vmatpush1.msra.mxu0 %v347
    %2283 = vmatprep.subr.mxu0 %v352
    %2284 = vmatpush1.msra.mxu0 %v351
    %2285 = vmatprep.subr.mxu0 %v356
    %2286 = vmatpush1.msra.mxu0 %v355
    %2287 = vmatprep.subr.mxu0 %v360
    %2288 = vmatpush1.msra.mxu0 %v359
    %2289 = vmatprep.subr.mxu0 %v364
    %2290 = vmatpush1.msra.mxu0 %v363
    %2291 = vmatprep.subr.mxu0 %v368
    %2292 = vmatpush1.msra.mxu0 %v367
    %2293 = vmatprep.subr.mxu0 %v372
    %2294 = vmatpush1.msra.mxu0 %v371
    %2295 = vmatprep.subr.mxu0 %v376
    %2296 = vmatpush1.msra.mxu0 %v375
    %2297 = vmatprep.subr.mxu0 %v380
    %2298 = vmatpush1.msra.mxu0 %v379
    %2299 = vmatprep.subr.mxu0 %v384
    %2300 = vmatpush1.msra.mxu0 %v383
    %2301 = vmatprep.subr.mxu0 %v388
    %2302 = vmatpush1.msra.mxu0 %v387
    %2303 = vmatprep.subr.mxu0 %v392
    %2304 = vmatpush1.msra.mxu0 %v391
    %2305 = vmatprep.subr.mxu0 %v396
    %2306 = vmatpush1.msra.mxu0 %v395
    %2307 = vmatprep.subr.mxu0 %v400
    %2308 = vmatpush1.msra.mxu0 %v399
    %2309 = vmatprep.subr.mxu0 %v404
    %2310 = vmatpush1.msra.mxu0 %v403
    %2311 = vmatprep.subr.mxu0 %v408
    %2312 = vmatpush1.msra.mxu0 %v407
    %2313 = vmatprep.subr.mxu0 %v412
    %2314 = vmatpush1.msra.mxu0 %v411
    %2315 = vmatprep.subr.mxu0 %v416
    %2316 = vmatpush1.msra.mxu0 %v415
    %2317 = vmatprep.subr.mxu0 %v420
    %2318 = vmatpush1.msra.mxu0 %v419
    %2319 = vmatprep.subr.mxu0 %v424
    %2320 = vmatpush1.msra.mxu0 %v423
    %2321 = vmatprep.subr.mxu0 %v428
    %2322 = vmatpush1.msra.mxu0 %v427
    %2323 = vmatprep.subr.mxu0 %v432
    %2324 = vmatpush1.msra.mxu0 %v431
    %2325 = vmatprep.subr.mxu0 %v436
    %2326 = vmatpush1.msra.mxu0 %v435
    %2327 = vmatprep.mubr.f32.mxu0 %v2191
    %2328 = vmatmul.mubr.f32.gmra.mrb[0].mxu0 %v2006
    %v2329 = vpop.f32.mrb[0].mxu0
    %v2330 = vadd.f32 %v237, %v2329
    %v2331 = vpop.f32.mrb[0].mxu0
    %v2332 = vadd.f32 %v241, %v2331
    %2333 = vdwg.mxu0
    %v2334 = vxor.u32 %v2259, 2147483648
    %v2335 = vmul.f32 %v2334, 1.442695
    %v2336 = vpow.pop %v2335
    %v2337 = vadd.f32 %v2336, 1.0
    %v2338 = vrcp.pop %v2337
    %v2339 = vmul.f32 1.0, %v2338
    %v2340 = vxor.u32 %v2261, 2147483648
    %v2341 = vmul.f32 %v2340, 1.442695
    %v2342 = vpow.pop %v2341
    %v2343 = vadd.f32 %v2342, 1.0
    %v2344 = vrcp.pop %v2343
    %v2345 = vmul.f32 1.0, %v2344
    %v2346 = vtanh.pop %v2330
    %v2347 = vxor.u32 %v2332, 2147483648
    %v2348 = vmul.f32 %v2347, 1.442695
    %v2349 = vpow.pop %v2348
    %v2350 = vadd.f32 %v2349, 1.0
    %v2351 = vrcp.pop %v2350
    %v2352 = vmul.f32 1.0, %v2351
    %v2353 = vmul.f32 %v2345, %v2004
    %v2354 = vmul.f32 %v2339, %v2346
    %v2355 = vadd.f32 %v2353, %v2354
    %v2356 = vtanh.pop %v2355
    %v2357 = vmul.f32 %v2352, %v2356
    %s2358 = scalar_lea.vmem %s0, 48
    %v2359 = vld [vmem:[%s2358] sm:$0xff]
    %2361 = vset.pattern.permute.xlu0 0
    %2362 = vperm.xlu0 %2361, %v2359
    %v2363 = vpop.permute.xlu0 %2362
    %v2365 = vmul.f32 %v2363, %v256
    %v2366 = vmul.f32 %v2363, %v260
    %v2367 = vmul.f32 %v2363, %v264
    %v2368 = vmul.f32 %v2363, %v268
    %v2369 = vadd.f32 %v2365, %v207
    %v2370 = vadd.f32 %v2366, %v211
    %v2371 = vadd.f32 %v2367, %v215
    %v2372 = vadd.f32 %v2368, %v219
    %2373 = vmatprep.subr.mxu0 %v139
    %2374 = vmatpush1.msra.mxu0 %v138
    %2375 = vmatprep.subr.mxu0 %v143
    %2376 = vmatpush1.msra.mxu0 %v142
    %2377 = vmatprep.subr.mxu0 %v147
    %2378 = vmatpush1.msra.mxu0 %v146
    %2379 = vmatprep.subr.mxu0 %v151
    %2380 = vmatpush1.msra.mxu0 %v150
    %2381 = vmatprep.subr.mxu0 %v155
    %2382 = vmatpush1.msra.mxu0 %v154
    %2383 = vmatprep.subr.mxu0 %v159
    %2384 = vmatpush1.msra.mxu0 %v158
    %2385 = vmatprep.subr.mxu0 %v163
    %2386 = vmatpush1.msra.mxu0 %v162
    %2387 = vmatprep.subr.mxu0 %v167
    %2388 = vmatpush1.msra.mxu0 %v166
    %2389 = vmatprep.subr.mxu0 %v171
    %2390 = vmatpush1.msra.mxu0 %v170
    %2391 = vmatprep.subr.mxu0 %v175
    %2392 = vmatpush1.msra.mxu0 %v174
    %2393 = vmatprep.subr.mxu0 %v179
    %2394 = vmatpush1.msra.mxu0 %v178
    %2395 = vmatprep.subr.mxu0 %v183
    %2396 = vmatpush1.msra.mxu0 %v182
    %2397 = vmatprep.subr.mxu0 %v187
    %2398 = vmatpush1.msra.mxu0 %v186
    %2399 = vmatprep.subr.mxu0 %v191
    %2400 = vmatpush1.msra.mxu0 %v190
    %2401 = vmatprep.subr.mxu0 %v195
    %2402 = vmatpush1.msra.mxu0 %v194
    %2403 = vmatprep.subr.mxu0 %v199
    %2404 = vmatpush1.msra.mxu0 %v198
    %2405 = vmatprep.subr.mxu0 0.0
    %2406 = vmatpush1.msra.mxu0 0.0
    %2407 = vmatprep.subr.mxu0 0.0
    %2408 = vmatpush1.msra.mxu0 0.0
    %2409 = vmatprep.subr.mxu0 0.0
    %2410 = vmatpush1.msra.mxu0 0.0
    %2411 = vmatprep.subr.mxu0 0.0
    %2412 = vmatpush1.msra.mxu0 0.0
    %2413 = vmatprep.subr.mxu0 0.0
    %2414 = vmatpush1.msra.mxu0 0.0
    %2415 = vmatprep.subr.mxu0 0.0
    %2416 = vmatpush1.msra.mxu0 0.0
    %2417 = vmatprep.subr.mxu0 0.0
    %2418 = vmatpush1.msra.mxu0 0.0
    %2419 = vmatprep.subr.mxu0 0.0
    %2420 = vmatpush1.msra.mxu0 0.0
    %2421 = vmatprep.subr.mxu0 0.0
    %2422 = vmatpush1.msra.mxu0 0.0
    %2423 = vmatprep.subr.mxu0 0.0
    %2424 = vmatpush1.msra.mxu0 0.0
    %2425 = vmatprep.subr.mxu0 0.0
    %2426 = vmatpush1.msra.mxu0 0.0
    %2427 = vmatprep.subr.mxu0 0.0
    %2428 = vmatpush1.msra.mxu0 0.0
    %2429 = vmatprep.subr.mxu0 0.0
    %2430 = vmatpush1.msra.mxu0 0.0
    %2431 = vmatprep.subr.mxu0 0.0
    %2432 = vmatpush1.msra.mxu0 0.0
    %2433 = vmatprep.subr.mxu0 0.0
    %2434 = vmatpush1.msra.mxu0 0.0
    %2435 = vmatprep.subr.mxu0 0.0
    %2436 = vmatpush1.msra.mxu0 0.0
    %2437 = vmatprep.mubr.f32.mxu0 0.0
    %2438 = vmatmul.mubr.f32.gmra.mrb[0].mxu0 %v2191
    %v2439 = vpop.f32.mrb[0].mxu0
    %v2440 = vadd.f32 0.0, %v2439
    %v2441 = vpop.f32.mrb[0].mxu0
    %v2442 = vadd.f32 0.0, %v2441
    %2443 = vdwg.mxu0
    %2444 = vmatprep.subr.mxu0 %v141
    %2445 = vmatpush1.msra.mxu0 %v140
    %2446 = vmatprep.subr.mxu0 %v145
    %2447 = vmatpush1.msra.mxu0 %v144
    %2448 = vmatprep.subr.mxu0 %v149
    %2449 = vmatpush1.msra.mxu0 %v148
    %2450 = vmatprep.subr.mxu0 %v153
    %2451 = vmatpush1.msra.mxu0 %v152
    %2452 = vmatprep.subr.mxu0 %v157
    %2453 = vmatpush1.msra.mxu0 %v156
    %2454 = vmatprep.subr.mxu0 %v161
    %2455 = vmatpush1.msra.mxu0 %v160
    %2456 = vmatprep.subr.mxu0 %v165
    %2457 = vmatpush1.msra.mxu0 %v164
    %2458 = vmatprep.subr.mxu0 %v169
    %2459 = vmatpush1.msra.mxu0 %v168
    %2460 = vmatprep.subr.mxu0 %v173
    %2461 = vmatpush1.msra.mxu0 %v172
    %2462 = vmatprep.subr.mxu0 %v177
    %2463 = vmatpush1.msra.mxu0 %v176
    %2464 = vmatprep.subr.mxu0 %v181
    %2465 = vmatpush1.msra.mxu0 %v180
    %2466 = vmatprep.subr.mxu0 %v185
    %2467 = vmatpush1.msra.mxu0 %v184
    %2468 = vmatprep.subr.mxu0 %v189
    %2469 = vmatpush1.msra.mxu0 %v188
    %2470 = vmatprep.subr.mxu0 %v193
    %2471 = vmatpush1.msra.mxu0 %v192
    %2472 = vmatprep.subr.mxu0 %v197
    %2473 = vmatpush1.msra.mxu0 %v196
    %2474 = vmatprep.subr.mxu0 %v201
    %2475 = vmatpush1.msra.mxu0 %v200
    %2476 = vmatprep.subr.mxu0 0.0
    %2477 = vmatpush1.msra.mxu0 0.0
    %2478 = vmatprep.subr.mxu0 0.0
    %2479 = vmatpush1.msra.mxu0 0.0
    %2480 = vmatprep.subr.mxu0 0.0
    %2481 = vmatpush1.msra.mxu0 0.0
    %2482 = vmatprep.subr.mxu0 0.0
    %2483 = vmatpush1.msra.mxu0 0.0
    %2484 = vmatprep.subr.mxu0 0.0
    %2485 = vmatpush1.msra.mxu0 0.0
    %2486 = vmatprep.subr.mxu0 0.0
    %2487 = vmatpush1.msra.mxu0 0.0
    %2488 = vmatprep.subr.mxu0 0.0
    %2489 = vmatpush1.msra.mxu0 0.0
    %2490 = vmatprep.subr.mxu0 0.0
    %2491 = vmatpush1.msra.mxu0 0.0
    %2492 = vmatprep.subr.mxu0 0.0
    %2493 = vmatpush1.msra.mxu0 0.0
    %2494 = vmatprep.subr.mxu0 0.0
    %2495 = vmatpush1.msra.mxu0 0.0
    %2496 = vmatprep.subr.mxu0 0.0
    %2497 = vmatpush1.msra.mxu0 0.0
    %2498 = vmatprep.subr.mxu0 0.0
    %2499 = vmatpush1.msra.mxu0 0.0
    %2500 = vmatprep.subr.mxu0 0.0
    %2501 = vmatpush1.msra.mxu0 0.0
    %2502 = vmatprep.subr.mxu0 0.0
    %2503 = vmatpush1.msra.mxu0 0.0
    %2504 = vmatprep.subr.mxu0 0.0
    %2505 = vmatpush1.msra.mxu0 0.0
    %2506 = vmatprep.subr.mxu0 0.0
    %2507 = vmatpush1.msra.mxu0 0.0
    %2508 = vmatprep.mubr.f32.mxu0 0.0
    %2509 = vmatmul.mubr.f32.gmra.mrb[0].mxu0 %v2191
    %v2510 = vpop.f32.mrb[0].mxu0
    %v2511 = vadd.f32 0.0, %v2510
    %v2512 = vpop.f32.mrb[0].mxu0
    %v2513 = vadd.f32 0.0, %v2512
    %2514 = vdwg.mxu0
    %v2515 = vadd.f32 %v2369, %v2440
    %v2516 = vadd.f32 %v2370, %v2442
    %v2517 = vadd.f32 %v2371, %v2511
    %v2518 = vadd.f32 %v2372, %v2513
    %v2519 = vxor.u32 %v2515, 2147483648
    %v2520 = vmul.f32 %v2519, 1.442695
    %v2521 = vpow.pop %v2520
    %v2522 = vadd.f32 %v2521, 1.0
    %v2523 = vrcp.pop %v2522
    %v2524 = vmul.f32 1.0, %v2523
    %v2525 = vxor.u32 %v2516, 2147483648
    %v2526 = vmul.f32 %v2525, 1.442695
    %v2527 = vpow.pop %v2526
    %v2528 = vadd.f32 %v2527, 1.0
    %v2529 = vrcp.pop %v2528
    %v2530 = vmul.f32 1.0, %v2529
    %v2531 = vtanh.pop %v2517
    %v2532 = vxor.u32 %v2518, 2147483648
    %v2533 = vmul.f32 %v2532, 1.442695
    %v2534 = vpow.pop %v2533
    %v2535 = vadd.f32 %v2534, 1.0
    %v2536 = vrcp.pop %v2535
    %v2537 = vmul.f32 1.0, %v2536
    %v2538 = vmul.f32 %v2530, %v2189
    %v2539 = vmul.f32 %v2524, %v2531
    %v2540 = vadd.f32 %v2538, %v2539
    %v2541 = vtanh.pop %v2540
    %v2542 = vmul.f32 %v2537, %v2541
    %2543 = vmatprep.subr.mxu0 %v310
    %2544 = vmatpush1.msra.mxu0 %v309
    %2545 = vmatprep.subr.mxu0 %v314
    %2546 = vmatpush1.msra.mxu0 %v313
    %2547 = vmatprep.subr.mxu0 %v318
    %2548 = vmatpush1.msra.mxu0 %v317
    %2549 = vmatprep.subr.mxu0 %v322
    %2550 = vmatpush1.msra.mxu0 %v321
    %2551 = vmatprep.subr.mxu0 %v326
    %2552 = vmatpush1.msra.mxu0 %v325
    %2553 = vmatprep.subr.mxu0 %v330
    %2554 = vmatpush1.msra.mxu0 %v329
    %2555 = vmatprep.subr.mxu0 %v334
    %2556 = vmatpush1.msra.mxu0 %v333
    %2557 = vmatprep.subr.mxu0 %v338
    %2558 = vmatpush1.msra.mxu0 %v337
    %2559 = vmatprep.subr.mxu0 %v342
    %2560 = vmatpush1.msra.mxu0 %v341
    %2561 = vmatprep.subr.mxu0 %v346
    %2562 = vmatpush1.msra.mxu0 %v345
    %2563 = vmatprep.subr.mxu0 %v350
    %2564 = vmatpush1.msra.mxu0 %v349
    %2565 = vmatprep.subr.mxu0 %v354
    %2566 = vmatpush1.msra.mxu0 %v353
    %2567 = vmatprep.subr.mxu0 %v358
    %2568 = vmatpush1.msra.mxu0 %v357
    %2569 = vmatprep.subr.mxu0 %v362
    %2570 = vmatpush1.msra.mxu0 %v361
    %2571 = vmatprep.subr.mxu0 %v366
    %2572 = vmatpush1.msra.mxu0 %v365
    %2573 = vmatprep.subr.mxu0 %v370
    %2574 = vmatpush1.msra.mxu0 %v369
    %2575 = vmatprep.subr.mxu0 %v374
    %2576 = vmatpush1.msra.mxu0 %v373
    %2577 = vmatprep.subr.mxu0 %v378
    %2578 = vmatpush1.msra.mxu0 %v377
    %2579 = vmatprep.subr.mxu0 %v382
    %2580 = vmatpush1.msra.mxu0 %v381
    %2581 = vmatprep.subr.mxu0 %v386
    %2582 = vmatpush1.msra.mxu0 %v385
    %2583 = vmatprep.subr.mxu0 %v390
    %2584 = vmatpush1.msra.mxu0 %v389
    %2585 = vmatprep.subr.mxu0 %v394
    %2586 = vmatpush1.msra.mxu0 %v393
    %2587 = vmatprep.subr.mxu0 %v398
    %2588 = vmatpush1.msra.mxu0 %v397
    %2589 = vmatprep.subr.mxu0 %v402
    %2590 = vmatpush1.msra.mxu0 %v401
    %2591 = vmatprep.subr.mxu0 %v406
    %2592 = vmatpush1.msra.mxu0 %v405
    %2593 = vmatprep.subr.mxu0 %v410
    %2594 = vmatpush1.msra.mxu0 %v409
    %2595 = vmatprep.subr.mxu0 %v414
    %2596 = vmatpush1.msra.mxu0 %v413
    %2597 = vmatprep.subr.mxu0 %v418
    %2598 = vmatpush1.msra.mxu0 %v417
    %2599 = vmatprep.subr.mxu0 %v422
    %2600 = vmatpush1.msra.mxu0 %v421
    %2601 = vmatprep.subr.mxu0 %v426
    %2602 = vmatpush1.msra.mxu0 %v425
    %2603 = vmatprep.subr.mxu0 %v430
    %2604 = vmatpush1.msra.mxu0 %v429
    %2605 = vmatprep.subr.mxu0 %v434
    %2606 = vmatpush1.msra.mxu0 %v433
    %2607 = vmatprep.mubr.f32.mxu0 %v2542
    %2608 = vmatmul.mubr.f32.gmra.mrb[0].mxu0 %v2357
    %v2609 = vpop.f32.mrb[0].mxu0
    %v2610 = vadd.f32 %v229, %v2609
    %v2611 = vpop.f32.mrb[0].mxu0
    %v2612 = vadd.f32 %v233, %v2611
    %2613 = vdwg.mxu0
    %2614 = vmatprep.subr.mxu0 %v312
    %2615 = vmatpush1.msra.mxu0 %v311
    %2616 = vmatprep.subr.mxu0 %v316
    %2617 = vmatpush1.msra.mxu0 %v315
    %2618 = vmatprep.subr.mxu0 %v320
    %2619 = vmatpush1.msra.mxu0 %v319
    %2620 = vmatprep.subr.mxu0 %v324
    %2621 = vmatpush1.msra.mxu0 %v323
    %2622 = vmatprep.subr.mxu0 %v328
    %2623 = vmatpush1.msra.mxu0 %v327
    %2624 = vmatprep.subr.mxu0 %v332
    %2625 = vmatpush1.msra.mxu0 %v331
    %2626 = vmatprep.subr.mxu0 %v336
    %2627 = vmatpush1.msra.mxu0 %v335
    %2628 = vmatprep.subr.mxu0 %v340
    %2629 = vmatpush1.msra.mxu0 %v339
    %2630 = vmatprep.subr.mxu0 %v344
    %2631 = vmatpush1.msra.mxu0 %v343
    %2632 = vmatprep.subr.mxu0 %v348
    %2633 = vmatpush1.msra.mxu0 %v347
    %2634 = vmatprep.subr.mxu0 %v352
    %2635 = vmatpush1.msra.mxu0 %v351
    %2636 = vmatprep.subr.mxu0 %v356
    %2637 = vmatpush1.msra.mxu0 %v355
    %2638 = vmatprep.subr.mxu0 %v360
    %2639 = vmatpush1.msra.mxu0 %v359
    %2640 = vmatprep.subr.mxu0 %v364
    %2641 = vmatpush1.msra.mxu0 %v363
    %2642 = vmatprep.subr.mxu0 %v368
    %2643 = vmatpush1.msra.mxu0 %v367
    %2644 = vmatprep.subr.mxu0 %v372
    %2645 = vmatpush1.msra.mxu0 %v371
    %2646 = vmatprep.subr.mxu0 %v376
    %2647 = vmatpush1.msra.mxu0 %v375
    %2648 = vmatprep.subr.mxu0 %v380
    %2649 = vmatpush1.msra.mxu0 %v379
    %2650 = vmatprep.subr.mxu0 %v384
    %2651 = vmatpush1.msra.mxu0 %v383
    %2652 = vmatprep.subr.mxu0 %v388
    %2653 = vmatpush1.msra.mxu0 %v387
    %2654 = vmatprep.subr.mxu0 %v392
    %2655 = vmatpush1.msra.mxu0 %v391
    %2656 = vmatprep.subr.mxu0 %v396
    %2657 = vmatpush1.msra.mxu0 %v395
    %2658 = vmatprep.subr.mxu0 %v400
    %2659 = vmatpush1.msra.mxu0 %v399
    %2660 = vmatprep.subr.mxu0 %v404
    %2661 = vmatpush1.msra.mxu0 %v403
    %2662 = vmatprep.subr.mxu0 %v408
    %2663 = vmatpush1.msra.mxu0 %v407
    %2664 = vmatprep.subr.mxu0 %v412
    %2665 = vmatpush1.msra.mxu0 %v411
    %2666 = vmatprep.subr.mxu0 %v416
    %2667 = vmatpush1.msra.mxu0 %v415
    %2668 = vmatprep.subr.mxu0 %v420
    %2669 = vmatpush1.msra.mxu0 %v419
    %2670 = vmatprep.subr.mxu0 %v424
    %2671 = vmatpush1.msra.mxu0 %v423
    %2672 = vmatprep.subr.mxu0 %v428
    %2673 = vmatpush1.msra.mxu0 %v427
    %2674 = vmatprep.subr.mxu0 %v432
    %2675 = vmatpush1.msra.mxu0 %v431
    %2676 = vmatprep.subr.mxu0 %v436
    %2677 = vmatpush1.msra.mxu0 %v435
    %2678 = vmatprep.mubr.f32.mxu0 %v2542
    %2679 = vmatmul.mubr.f32.gmra.mrb[0].mxu0 %v2357
    %v2680 = vpop.f32.mrb[0].mxu0
    %v2681 = vadd.f32 %v237, %v2680
    %v2682 = vpop.f32.mrb[0].mxu0
    %v2683 = vadd.f32 %v241, %v2682
    %2684 = vdwg.mxu0
    %v2685 = vxor.u32 %v2610, 2147483648
    %v2686 = vmul.f32 %v2685, 1.442695
    %v2687 = vpow.pop %v2686
    %v2688 = vadd.f32 %v2687, 1.0
    %v2689 = vrcp.pop %v2688
    %v2690 = vmul.f32 1.0, %v2689
    %v2691 = vxor.u32 %v2612, 2147483648
    %v2692 = vmul.f32 %v2691, 1.442695
    %v2693 = vpow.pop %v2692
    %v2694 = vadd.f32 %v2693, 1.0
    %v2695 = vrcp.pop %v2694
    %v2696 = vmul.f32 1.0, %v2695
    %v2697 = vtanh.pop %v2681
    %v2698 = vxor.u32 %v2683, 2147483648
    %v2699 = vmul.f32 %v2698, 1.442695
    %v2700 = vpow.pop %v2699
    %v2701 = vadd.f32 %v2700, 1.0
    %v2702 = vrcp.pop %v2701
    %v2703 = vmul.f32 1.0, %v2702
    %v2704 = vmul.f32 %v2696, %v2355
    %v2705 = vmul.f32 %v2690, %v2697
    %v2706 = vadd.f32 %v2704, %v2705
    %v2707 = vtanh.pop %v2706
    %v2708 = vmul.f32 %v2703, %v2707
    %s2709 = scalar_lea.vmem %s0, 56
    %v2710 = vld [vmem:[%s2709] sm:$0xff]
    %2712 = vset.pattern.permute.xlu0 0
    %2713 = vperm.xlu0 %2712, %v2710
    %v2714 = vpop.permute.xlu0 %2713
    %v2716 = vmul.f32 %v2714, %v256
    %v2717 = vmul.f32 %v2714, %v260
    %v2718 = vmul.f32 %v2714, %v264
    %v2719 = vmul.f32 %v2714, %v268
    %v2720 = vadd.f32 %v2716, %v207
    %v2721 = vadd.f32 %v2717, %v211
    %v2722 = vadd.f32 %v2718, %v215
    %v2723 = vadd.f32 %v2719, %v219
    %2724 = vmatprep.subr.mxu0 %v139
    %2725 = vmatpush1.msra.mxu0 %v138
    %2726 = vmatprep.subr.mxu0 %v143
    %2727 = vmatpush1.msra.mxu0 %v142
    %2728 = vmatprep.subr.mxu0 %v147
    %2729 = vmatpush1.msra.mxu0 %v146
    %2730 = vmatprep.subr.mxu0 %v151
    %2731 = vmatpush1.msra.mxu0 %v150
    %2732 = vmatprep.subr.mxu0 %v155
    %2733 = vmatpush1.msra.mxu0 %v154
    %2734 = vmatprep.subr.mxu0 %v159
    %2735 = vmatpush1.msra.mxu0 %v158
    %2736 = vmatprep.subr.mxu0 %v163
    %2737 = vmatpush1.msra.mxu0 %v162
    %2738 = vmatprep.subr.mxu0 %v167
    %2739 = vmatpush1.msra.mxu0 %v166
    %2740 = vmatprep.subr.mxu0 %v171
    %2741 = vmatpush1.msra.mxu0 %v170
    %2742 = vmatprep.subr.mxu0 %v175
    %2743 = vmatpush1.msra.mxu0 %v174
    %2744 = vmatprep.subr.mxu0 %v179
    %2745 = vmatpush1.msra.mxu0 %v178
    %2746 = vmatprep.subr.mxu0 %v183
    %2747 = vmatpush1.msra.mxu0 %v182
    %2748 = vmatprep.subr.mxu0 %v187
    %2749 = vmatpush1.msra.mxu0 %v186
    %2750 = vmatprep.subr.mxu0 %v191
    %2751 = vmatpush1.msra.mxu0 %v190
    %2752 = vmatprep.subr.mxu0 %v195
    %2753 = vmatpush1.msra.mxu0 %v194
    %2754 = vmatprep.subr.mxu0 %v199
    %2755 = vmatpush1.msra.mxu0 %v198
    %2756 = vmatprep.subr.mxu0 0.0
    %2757 = vmatpush1.msra.mxu0 0.0
    %2758 = vmatprep.subr.mxu0 0.0
    %2759 = vmatpush1.msra.mxu0 0.0
    %2760 = vmatprep.subr.mxu0 0.0
    %2761 = vmatpush1.msra.mxu0 0.0
    %2762 = vmatprep.subr.mxu0 0.0
    %2763 = vmatpush1.msra.mxu0 0.0
    %2764 = vmatprep.subr.mxu0 0.0
    %2765 = vmatpush1.msra.mxu0 0.0
    %2766 = vmatprep.subr.mxu0 0.0
    %2767 = vmatpush1.msra.mxu0 0.0
    %2768 = vmatprep.subr.mxu0 0.0
    %2769 = vmatpush1.msra.mxu0 0.0
    %2770 = vmatprep.subr.mxu0 0.0
    %2771 = vmatpush1.msra.mxu0 0.0
    %2772 = vmatprep.subr.mxu0 0.0
    %2773 = vmatpush1.msra.mxu0 0.0
    %2774 = vmatprep.subr.mxu0 0.0
    %2775 = vmatpush1.msra.mxu0 0.0
    %2776 = vmatprep.subr.mxu0 0.0
    %2777 = vmatpush1.msra.mxu0 0.0
    %2778 = vmatprep.subr.mxu0 0.0
    %2779 = vmatpush1.msra.mxu0 0.0
    %2780 = vmatprep.subr.mxu0 0.0
    %2781 = vmatpush1.msra.mxu0 0.0
    %2782 = vmatprep.subr.mxu0 0.0
    %2783 = vmatpush1.msra.mxu0 0.0
    %2784 = vmatprep.subr.mxu0 0.0
    %2785 = vmatpush1.msra.mxu0 0.0
    %2786 = vmatprep.subr.mxu0 0.0
    %2787 = vmatpush1.msra.mxu0 0.0
    %2788 = vmatprep.mubr.f32.mxu0 0.0
    %2789 = vmatmul.mubr.f32.gmra.mrb[0].mxu0 %v2542
    %v2790 = vpop.f32.mrb[0].mxu0
    %v2791 = vadd.f32 0.0, %v2790
    %v2792 = vpop.f32.mrb[0].mxu0
    %v2793 = vadd.f32 0.0, %v2792
    %2794 = vdwg.mxu0
    %2795 = vmatprep.subr.mxu0 %v141
    %2796 = vmatpush1.msra.mxu0 %v140
    %2797 = vmatprep.subr.mxu0 %v145
    %2798 = vmatpush1.msra.mxu0 %v144
    %2799 = vmatprep.subr.mxu0 %v149
    %2800 = vmatpush1.msra.mxu0 %v148
    %2801 = vmatprep.subr.mxu0 %v153
    %2802 = vmatpush1.msra.mxu0 %v152
    %2803 = vmatprep.subr.mxu0 %v157
    %2804 = vmatpush1.msra.mxu0 %v156
    %2805 = vmatprep.subr.mxu0 %v161
    %2806 = vmatpush1.msra.mxu0 %v160
    %2807 = vmatprep.subr.mxu0 %v165
    %2808 = vmatpush1.msra.mxu0 %v164
    %2809 = vmatprep.subr.mxu0 %v169
    %2810 = vmatpush1.msra.mxu0 %v168
    %2811 = vmatprep.subr.mxu0 %v173
    %2812 = vmatpush1.msra.mxu0 %v172
    %2813 = vmatprep.subr.mxu0 %v177
    %2814 = vmatpush1.msra.mxu0 %v176
    %2815 = vmatprep.subr.mxu0 %v181
    %2816 = vmatpush1.msra.mxu0 %v180
    %2817 = vmatprep.subr.mxu0 %v185
    %2818 = vmatpush1.msra.mxu0 %v184
    %2819 = vmatprep.subr.mxu0 %v189
    %2820 = vmatpush1.msra.mxu0 %v188
    %2821 = vmatprep.subr.mxu0 %v193
    %2822 = vmatpush1.msra.mxu0 %v192
    %2823 = vmatprep.subr.mxu0 %v197
    %2824 = vmatpush1.msra.mxu0 %v196
    %2825 = vmatprep.subr.mxu0 %v201
    %2826 = vmatpush1.msra.mxu0 %v200
    %2827 = vmatprep.subr.mxu0 0.0
    %2828 = vmatpush1.msra.mxu0 0.0
    %2829 = vmatprep.subr.mxu0 0.0
    %2830 = vmatpush1.msra.mxu0 0.0
    %2831 = vmatprep.subr.mxu0 0.0
    %2832 = vmatpush1.msra.mxu0 0.0
    %2833 = vmatprep.subr.mxu0 0.0
    %2834 = vmatpush1.msra.mxu0 0.0
    %2835 = vmatprep.subr.mxu0 0.0
    %2836 = vmatpush1.msra.mxu0 0.0
    %2837 = vmatprep.subr.mxu0 0.0
    %2838 = vmatpush1.msra.mxu0 0.0
    %2839 = vmatprep.subr.mxu0 0.0
    %2840 = vmatpush1.msra.mxu0 0.0
    %2841 = vmatprep.subr.mxu0 0.0
    %2842 = vmatpush1.msra.mxu0 0.0
    %2843 = vmatprep.subr.mxu0 0.0
    %2844 = vmatpush1.msra.mxu0 0.0
    %2845 = vmatprep.subr.mxu0 0.0
    %2846 = vmatpush1.msra.mxu0 0.0
    %2847 = vmatprep.subr.mxu0 0.0
    %2848 = vmatpush1.msra.mxu0 0.0
    %2849 = vmatprep.subr.mxu0 0.0
    %2850 = vmatpush1.msra.mxu0 0.0
    %2851 = vmatprep.subr.mxu0 0.0
    %2852 = vmatpush1.msra.mxu0 0.0
    %2853 = vmatprep.subr.mxu0 0.0
    %2854 = vmatpush1.msra.mxu0 0.0
    %2855 = vmatprep.subr.mxu0 0.0
    %2856 = vmatpush1.msra.mxu0 0.0
    %2857 = vmatprep.subr.mxu0 0.0
    %2858 = vmatpush1.msra.mxu0 0.0
    %2859 = vmatprep.mubr.f32.mxu0 0.0
    %2860 = vmatmul.mubr.f32.gmra.mrb[0].mxu0 %v2542
    %v2861 = vpop.f32.mrb[0].mxu0
    %v2862 = vadd.f32 0.0, %v2861
    %v2863 = vpop.f32.mrb[0].mxu0
    %v2864 = vadd.f32 0.0, %v2863
    %2865 = vdwg.mxu0
    %v2866 = vadd.f32 %v2720, %v2791
    %v2867 = vadd.f32 %v2721, %v2793
    %v2868 = vadd.f32 %v2722, %v2862
    %v2869 = vadd.f32 %v2723, %v2864
    %v2870 = vxor.u32 %v2866, 2147483648
    %v2871 = vmul.f32 %v2870, 1.442695
    %v2872 = vpow.pop %v2871
    %v2873 = vadd.f32 %v2872, 1.0
    %v2874 = vrcp.pop %v2873
    %v2875 = vmul.f32 1.0, %v2874
    %v2876 = vxor.u32 %v2867, 2147483648
    %v2877 = vmul.f32 %v2876, 1.442695
    %v2878 = vpow.pop %v2877
    %v2879 = vadd.f32 %v2878, 1.0
    %v2880 = vrcp.pop %v2879
    %v2881 = vmul.f32 1.0, %v2880
    %v2882 = vtanh.pop %v2868
    %v2883 = vxor.u32 %v2869, 2147483648
    %v2884 = vmul.f32 %v2883, 1.442695
    %v2885 = vpow.pop %v2884
    %v2886 = vadd.f32 %v2885, 1.0
    %v2887 = vrcp.pop %v2886
    %v2888 = vmul.f32 1.0, %v2887
    %v2889 = vmul.f32 %v2881, %v2540
    %v2890 = vmul.f32 %v2875, %v2882
    %v2891 = vadd.f32 %v2889, %v2890
    %v2892 = vtanh.pop %v2891
    %v2893 = vmul.f32 %v2888, %v2892
    %2894 = vmatprep.subr.mxu0 %v310
    %2895 = vmatpush1.msra.mxu0 %v309
    %2896 = vmatprep.subr.mxu0 %v314
    %2897 = vmatpush1.msra.mxu0 %v313
    %2898 = vmatprep.subr.mxu0 %v318
    %2899 = vmatpush1.msra.mxu0 %v317
    %2900 = vmatprep.subr.mxu0 %v322
    %2901 = vmatpush1.msra.mxu0 %v321
    %2902 = vmatprep.subr.mxu0 %v326
    %2903 = vmatpush1.msra.mxu0 %v325
    %2904 = vmatprep.subr.mxu0 %v330
    %2905 = vmatpush1.msra.mxu0 %v329
    %2906 = vmatprep.subr.mxu0 %v334
    %2907 = vmatpush1.msra.mxu0 %v333
    %2908 = vmatprep.subr.mxu0 %v338
    %2909 = vmatpush1.msra.mxu0 %v337
    %2910 = vmatprep.subr.mxu0 %v342
    %2911 = vmatpush1.msra.mxu0 %v341
    %2912 = vmatprep.subr.mxu0 %v346
    %2913 = vmatpush1.msra.mxu0 %v345
    %2914 = vmatprep.subr.mxu0 %v350
    %2915 = vmatpush1.msra.mxu0 %v349
    %2916 = vmatprep.subr.mxu0 %v354
    %2917 = vmatpush1.msra.mxu0 %v353
    %2918 = vmatprep.subr.mxu0 %v358
    %2919 = vmatpush1.msra.mxu0 %v357
    %2920 = vmatprep.subr.mxu0 %v362
    %2921 = vmatpush1.msra.mxu0 %v361
    %2922 = vmatprep.subr.mxu0 %v366
    %2923 = vmatpush1.msra.mxu0 %v365
    %2924 = vmatprep.subr.mxu0 %v370
    %2925 = vmatpush1.msra.mxu0 %v369
    %2926 = vmatprep.subr.mxu0 %v374
    %2927 = vmatpush1.msra.mxu0 %v373
    %2928 = vmatprep.subr.mxu0 %v378
    %2929 = vmatpush1.msra.mxu0 %v377
    %2930 = vmatprep.subr.mxu0 %v382
    %2931 = vmatpush1.msra.mxu0 %v381
    %2932 = vmatprep.subr.mxu0 %v386
    %2933 = vmatpush1.msra.mxu0 %v385
    %2934 = vmatprep.subr.mxu0 %v390
    %2935 = vmatpush1.msra.mxu0 %v389
    %2936 = vmatprep.subr.mxu0 %v394
    %2937 = vmatpush1.msra.mxu0 %v393
    %2938 = vmatprep.subr.mxu0 %v398
    %2939 = vmatpush1.msra.mxu0 %v397
    %2940 = vmatprep.subr.mxu0 %v402
    %2941 = vmatpush1.msra.mxu0 %v401
    %2942 = vmatprep.subr.mxu0 %v406
    %2943 = vmatpush1.msra.mxu0 %v405
    %2944 = vmatprep.subr.mxu0 %v410
    %2945 = vmatpush1.msra.mxu0 %v409
    %2946 = vmatprep.subr.mxu0 %v414
    %2947 = vmatpush1.msra.mxu0 %v413
    %2948 = vmatprep.subr.mxu0 %v418
    %2949 = vmatpush1.msra.mxu0 %v417
    %2950 = vmatprep.subr.mxu0 %v422
    %2951 = vmatpush1.msra.mxu0 %v421
    %2952 = vmatprep.subr.mxu0 %v426
    %2953 = vmatpush1.msra.mxu0 %v425
    %2954 = vmatprep.subr.mxu0 %v430
    %2955 = vmatpush1.msra.mxu0 %v429
    %2956 = vmatprep.subr.mxu0 %v434
    %2957 = vmatpush1.msra.mxu0 %v433
    %2958 = vmatprep.mubr.f32.mxu0 %v2893
    %2959 = vmatmul.mubr.f32.gmra.mrb[0].mxu0 %v2708
    %v2960 = vpop.f32.mrb[0].mxu0
    %v2961 = vadd.f32 %v229, %v2960
    %v2962 = vpop.f32.mrb[0].mxu0
    %v2963 = vadd.f32 %v233, %v2962
    %2964 = vdwg.mxu0
    %2965 = vmatprep.subr.mxu0 %v312
    %2966 = vmatpush1.msra.mxu0 %v311
    %2967 = vmatprep.subr.mxu0 %v316
    %2968 = vmatpush1.msra.mxu0 %v315
    %2969 = vmatprep.subr.mxu0 %v320
    %2970 = vmatpush1.msra.mxu0 %v319
    %2971 = vmatprep.subr.mxu0 %v324
    %2972 = vmatpush1.msra.mxu0 %v323
    %2973 = vmatprep.subr.mxu0 %v328
    %2974 = vmatpush1.msra.mxu0 %v327
    %2975 = vmatprep.subr.mxu0 %v332
    %2976 = vmatpush1.msra.mxu0 %v331
    %2977 = vmatprep.subr.mxu0 %v336
    %2978 = vmatpush1.msra.mxu0 %v335
    %2979 = vmatprep.subr.mxu0 %v340
    %2980 = vmatpush1.msra.mxu0 %v339
    %2981 = vmatprep.subr.mxu0 %v344
    %2982 = vmatpush1.msra.mxu0 %v343
    %2983 = vmatprep.subr.mxu0 %v348
    %2984 = vmatpush1.msra.mxu0 %v347
    %2985 = vmatprep.subr.mxu0 %v352
    %2986 = vmatpush1.msra.mxu0 %v351
    %2987 = vmatprep.subr.mxu0 %v356
    %2988 = vmatpush1.msra.mxu0 %v355
    %2989 = vmatprep.subr.mxu0 %v360
    %2990 = vmatpush1.msra.mxu0 %v359
    %2991 = vmatprep.subr.mxu0 %v364
    %2992 = vmatpush1.msra.mxu0 %v363
    %2993 = vmatprep.subr.mxu0 %v368
    %2994 = vmatpush1.msra.mxu0 %v367
    %2995 = vmatprep.subr.mxu0 %v372
    %2996 = vmatpush1.msra.mxu0 %v371
    %2997 = vmatprep.subr.mxu0 %v376
    %2998 = vmatpush1.msra.mxu0 %v375
    %2999 = vmatprep.subr.mxu0 %v380
    %3000 = vmatpush1.msra.mxu0 %v379
    %3001 = vmatprep.subr.mxu0 %v384
    %3002 = vmatpush1.msra.mxu0 %v383
    %3003 = vmatprep.subr.mxu0 %v388
    %3004 = vmatpush1.msra.mxu0 %v387
    %3005 = vmatprep.subr.mxu0 %v392
    %3006 = vmatpush1.msra.mxu0 %v391
    %3007 = vmatprep.subr.mxu0 %v396
    %3008 = vmatpush1.msra.mxu0 %v395
    %3009 = vmatprep.subr.mxu0 %v400
    %3010 = vmatpush1.msra.mxu0 %v399
    %3011 = vmatprep.subr.mxu0 %v404
    %3012 = vmatpush1.msra.mxu0 %v403
    %3013 = vmatprep.subr.mxu0 %v408
    %3014 = vmatpush1.msra.mxu0 %v407
    %3015 = vmatprep.subr.mxu0 %v412
    %3016 = vmatpush1.msra.mxu0 %v411
    %3017 = vmatprep.subr.mxu0 %v416
    %3018 = vmatpush1.msra.mxu0 %v415
    %3019 = vmatprep.subr.mxu0 %v420
    %3020 = vmatpush1.msra.mxu0 %v419
    %3021 = vmatprep.subr.mxu0 %v424
    %3022 = vmatpush1.msra.mxu0 %v423
    %3023 = vmatprep.subr.mxu0 %v428
    %3024 = vmatpush1.msra.mxu0 %v427
    %3025 = vmatprep.subr.mxu0 %v432
    %3026 = vmatpush1.msra.mxu0 %v431
    %3027 = vmatprep.subr.mxu0 %v436
    %3028 = vmatpush1.msra.mxu0 %v435
    %3029 = vmatprep.mubr.f32.mxu0 %v2893
    %3030 = vmatmul.mubr.f32.gmra.mrb[0].mxu0 %v2708
    %v3031 = vpop.f32.mrb[0].mxu0
    %v3032 = vadd.f32 %v237, %v3031
    %v3033 = vpop.f32.mrb[0].mxu0
    %v3034 = vadd.f32 %v241, %v3033
    %3035 = vdwg.mxu0
    %v3036 = vxor.u32 %v2961, 2147483648
    %v3037 = vmul.f32 %v3036, 1.442695
    %v3038 = vpow.pop %v3037
    %v3039 = vadd.f32 %v3038, 1.0
    %v3040 = vrcp.pop %v3039
    %v3041 = vmul.f32 1.0, %v3040
    %v3042 = vxor.u32 %v2963, 2147483648
    %v3043 = vmul.f32 %v3042, 1.442695
    %v3044 = vpow.pop %v3043
    %v3045 = vadd.f32 %v3044, 1.0
    %v3046 = vrcp.pop %v3045
    %v3047 = vmul.f32 1.0, %v3046
    %v3048 = vtanh.pop %v3032
    %v3049 = vxor.u32 %v3034, 2147483648
    %v3050 = vmul.f32 %v3049, 1.442695
    %v3051 = vpow.pop %v3050
    %v3052 = vadd.f32 %v3051, 1.0
    %v3053 = vrcp.pop %v3052
    %v3054 = vmul.f32 1.0, %v3053
    %v3055 = vmul.f32 %v3047, %v2706
    %v3056 = vmul.f32 %v3041, %v3048
    %v3057 = vadd.f32 %v3055, %v3056
    %v3058 = vtanh.pop %v3057
    %v3059 = vmul.f32 %v3054, %v3058
    %s3060 = smul.u32 8, 1
    %s3061 = sshll.u32 %s3060, 4
    %3062 = dma.done %s49, %s3061
    %s3063 = smul.u32 1, 1
    %s3064 = sshll.u32 %s3063, 4
    %3065 = dma.done %s92, %s3064
    %v3066 = vld [vmem:[#allocation3] sm:$0x1]
    %v3067 = vlaneseq
    %v3068 = vshrl.u32 %v3067, 7
    %v3069 = vsub.s32 0, %v3068
    %v3070 = vrot.slane %v3066, %v3069
    %v3071 = vmul.f32 %v3059, %v3070
    %3072 = vadd.xlane.f32.xlu0 %v3071
    %v3073 = vpop.xlane.xlu0 %3072
    %v3074 = vld [vmem:[#allocation4] sm:$0x1]
    %v3076 = vlaneseq
    %v3077 = vshrl.u32 %v3076, 7
    %v3078 = vsub.s32 0, %v3077
    %v3079 = vrot.slane %v3074, %v3078
    %v3081 = vadd.f32 %v3073, %v3079
    %3083 = vset.pattern.permute.xlu0 0
    %3084 = vperm.xlu0 %3083, %v3081
    %v3085 = vpop.permute.xlu0 %3084
    %3087 = vst [vmem:[#allocation9] sm:$0xff] %v3085
    // Predicated region
    $region94: #{tpu_custom_call.1} parent=1 // pred_check
      _
    $region95: #{tpu_custom_call.1} parent=1 // pred_check_branch
      %3089 = sbr.rel (0) target = $region97
    $region96: #{tpu_custom_call.1} parent=1 // pred_region
      %s3091 = ssub.s32 128, 128
      %3092 = vsyncadd [#allocation8], %s3091
      %s3094 = sshll.u32 [#allocation9], 4
      %s3095 = int_to_ptr.vmem [resolvable:$true] %s3094
      %3097 = dma.vmem_to_hbm [thread:$0]  %s3095, 128, %s8, [#allocation8]
    $region97: #{tpu_custom_call.1} parent=1 // pred_fallthru
      _
    // Predicated region
    $region98: #{tpu_custom_call.1} parent=1 // pred_check
      _
    $region99: #{tpu_custom_call.1} parent=1 // pred_check_branch
      %3099 = sbr.rel (0) target = $region101
    $region100: #{tpu_custom_call.1} parent=1 // pred_region
      %3100 = dma.done [#allocation8], 128
    $region101: #{tpu_custom_call.1} parent=1 // pred_fallthru
      _
    %3101 = vsyncpa [#allocation7], 1
    %3102 = vsyncpa [#allocation8], 1
  %3103 = vsyncmov [#allocation5]
  %s3104 = vpop.sfrf %3103
  %p3105 = scmp.eq.s32.totalorder %s3104, 0
  %p3106 = pneg %p3105
  %3108 = shalt.err (%p3106)
  %s3109 = scalar_lea.sflag [#allocation5], 1
  %3110 = vsyncmov %s3109
  %s3111 = vpop.sfrf %3110
  %p3112 = scmp.eq.s32.totalorder %s3111, 0
  %p3113 = pneg %p3112
  %3115 = shalt.err (%p3113)
  %s3116 = scalar_lea.sflag [#allocation5], 2
  %3117 = vsyncmov %s3116
  %s3118 = vpop.sfrf %3117
  %p3119 = scmp.eq.s32.totalorder %s3118, 0
  %p3120 = pneg %p3119
  %3122 = shalt.err (%p3120)

</llo_original>
